<compile_context>
chip_gen: v7x
topology: tpu7x:2x2x1
jax: 0.10.0
libtpu: 0.0.40
codegen_flags: <defaults>
</compile_context>

<pallas_src>
import functools
import math

import jax
import jax.numpy as jnp
from jax.experimental import pallas as pl
from jax.experimental.pallas import tpu as pltpu

_MXU_DTYPE = jnp.bfloat16  # MXU operand dtype (bf16-native on v5e/v6e/v7x); f32 accumulate


# --------------------------------------------------------------------------
# In-kernel helpers (operate on VMEM-resident values, f32 math)
# --------------------------------------------------------------------------
def _mm(a, w, bias=None):
    y = jnp.dot(a.astype(_MXU_DTYPE), w.astype(_MXU_DTYPE),
                preferred_element_type=jnp.float32)
    if bias is not None:
        y = y + bias
    return y


def _mm_nt(a, b):
    """A @ B^T without an explicit in-kernel transpose (contract on last dims)."""
    return jax.lax.dot_general(
        a.astype(_MXU_DTYPE), b.astype(_MXU_DTYPE),
        dimension_numbers=(((1,), (1,)), ((), ())),
        preferred_element_type=jnp.float32)


def _layernorm(x, g, b, eps):
    mean = jnp.mean(x, axis=-1, keepdims=True)
    var = jnp.mean(jnp.square(x - mean), axis=-1, keepdims=True)
    return (x - mean) * jax.lax.rsqrt(var + eps) * g + b


# --------------------------------------------------------------------------
# Fused forward kernel: one grid step == one batch element, everything in VMEM
# --------------------------------------------------------------------------
def _fused_forward_kernel(
    x_ref,      # (1, S, D)   embedded tokens for this batch element
    pe_ref,     # (S, D)      positional encoding
    wqkv_ref,   # (L, D, 3D)  fused QKV weight (1/sqrt(Dh) folded into Q slice)
    bqkv_ref,   # (L, 1, 3D)
    wo_ref,     # (L, D, D)
    bo_ref,     # (L, 1, D)
    w1_ref,     # (L, D, F)
    b1_ref,     # (L, 1, F)
    w2_ref,     # (L, F, D)
    b2_ref,     # (L, 1, D)
    ln1g_ref,   # (L, 1, D)
    ln1b_ref,   # (L, 1, D)
    ln2g_ref,   # (L, 1, D)
    ln2b_ref,   # (L, 1, D)
    wout_ref,   # (D, C)
    bout_ref,   # (1, C)
    out_ref,    # (1, 1, C)
    *, num_layers, nhead, eps,
):
    S, D = pe_ref.shape
    Dh = D // nhead

    # Positional-encoding add happens in-kernel (free VPU add).
    x = x_ref[0].astype(jnp.float32) + pe_ref[...]            # (S, D)

    for l in range(num_layers):
        # ---- fused QKV projection: one MXU pass instead of three -------------
        qkv = _mm(x, wqkv_ref[l], bqkv_ref[l])                # (S, 3D)
        q = qkv[:, 0 * D:1 * D]
        k = qkv[:, 1 * D:2 * D]
        v = qkv[:, 2 * D:3 * D]

        # ---- multi-head attention, scores stay in VMEM ------------------------
        heads = []
        for h in range(nhead):
            qh = q[:, h * Dh:(h + 1) * Dh]                    # (S, Dh)
            kh = k[:, h * Dh:(h + 1) * Dh]
            vh = v[:, h * Dh:(h + 1) * Dh]
            s = _mm_nt(qh, kh)                                # (S, S); scale pre-folded
            s = s - jnp.max(s, axis=-1, keepdims=True)
            p = jnp.exp(s)
            p = p * pl.reciprocal(jnp.sum(p, axis=-1, keepdims=True), approx=True)
            heads.append(_mm(p, vh))                          # (S, Dh)
        attn = jnp.concatenate(heads, axis=-1)                # (S, D)

        attn = _mm(attn, wo_ref[l], bo_ref[l])
        x = _layernorm(x + attn, ln1g_ref[l], ln1b_ref[l], eps)

        # ---- feed-forward (ReLU) ---------------------------------------------
        ff = _mm(x, w1_ref[l], b1_ref[l])
        ff = jnp.maximum(ff, 0.0)
        ff = _mm(ff, w2_ref[l], b2_ref[l])
        x = _layernorm(x + ff, ln2g_ref[l], ln2b_ref[l], eps)

    # ---- classifier head on the last sequence position ------------------------
    last = x[S - 1:S, :]                                      # (1, D)
    out_ref[0] = _mm(last, wout_ref[...], bout_ref[...]).astype(out_ref.dtype)


# --------------------------------------------------------------------------
# Host-side glue
# --------------------------------------------------------------------------
def positional_encoding(seq_len, d_model):
    pos = jnp.arange(seq_len, dtype=jnp.float32)[:, None]
    i = jnp.arange(0, d_model, 2, dtype=jnp.float32)
    div = jnp.exp(-math.log(10000.0) * i / d_model)
    pe = jnp.zeros((seq_len, d_model), jnp.float32)
    pe = pe.at[:, 0::2].set(jnp.sin(pos * div))
    pe = pe.at[:, 1::2].set(jnp.cos(pos * div))
    return pe


def prepare_params(params, nhead, seq_len):
    """Fuse QKV, fold the 1/sqrt(Dh) scale, stack per-layer weights, precompute PE."""
    D = params["embedding"].shape[1]
    scale = 1.0 / math.sqrt(D // nhead)
    layers = params["layers"]

    def stack(key):
        return jnp.stack([lp[key] for lp in layers])

    wqkv = jnp.stack([jnp.concatenate([lp["wq"] * scale, lp["wk"], lp["wv"]], axis=1)
                      for lp in layers])                                        # (L, D, 3D)
    bqkv = jnp.stack([jnp.concatenate([lp["bq"] * scale, lp["bk"], lp["bv"]])[None, :]
                      for lp in layers])                                        # (L, 1, 3D)

    return {
        "embedding": params["embedding"],
        "pe": positional_encoding(seq_len, D),                                  # (S, D)
        "wqkv": wqkv, "bqkv": bqkv,
        "wo": stack("wo"), "bo": stack("bo")[:, None, :],
        "w1": stack("w1"), "b1": stack("b1")[:, None, :],
        "w2": stack("w2"), "b2": stack("b2")[:, None, :],
        "ln1_g": stack("ln1_g")[:, None, :], "ln1_b": stack("ln1_b")[:, None, :],
        "ln2_g": stack("ln2_g")[:, None, :], "ln2_b": stack("ln2_b")[:, None, :],
        "w_out": params["w_out"], "b_out": params["b_out"][None, :],
    }


def transformer_classifier_forward(tokens, prep, *, nhead):
    B, S = tokens.shape
    D = prep["embedding"].shape[1]
    C = prep["w_out"].shape[1]
    num_layers = prep["wqkv"].shape[0]

    # nn.Embedding lookup (gather) — plain JAX glue.  We keep (B, S, D) layout; the
    # PyTorch permute(1,0,2) is only the nn.Transformer convention, math is identical.
    x = jnp.take(prep["embedding"], tokens, axis=0)           # (B, S, D)

    def full(a):  # whole array resident in VMEM, same block for every grid step
        zeros = (0,) * a.ndim
        return pl.BlockSpec(a.shape, lambda b: zeros)

    out = pl.pallas_call(
        functools.partial(_fused_forward_kernel,
                          num_layers=num_layers, nhead=nhead, eps=1e-5),
        out_shape=jax.ShapeDtypeStruct((B, 1, C), jnp.float32),
        grid=(B,),
        in_specs=[
            pl.BlockSpec((1, S, D), lambda b: (b, 0, 0)),      # x: one batch element/step
            full(prep["pe"]),
            full(prep["wqkv"]), full(prep["bqkv"]),
            full(prep["wo"]), full(prep["bo"]),
            full(prep["w1"]), full(prep["b1"]),
            full(prep["w2"]), full(prep["b2"]),
            full(prep["ln1_g"]), full(prep["ln1_b"]),
            full(prep["ln2_g"]), full(prep["ln2_b"]),
            full(prep["w_out"]), full(prep["b_out"]),
        ],
        out_specs=pl.BlockSpec((1, 1, C), lambda b: (b, 0, 0)),
        compiler_params=pltpu.CompilerParams(
            dimension_semantics=("parallel",)),                # uses both TCs on v7x
    )(x, prep["pe"], prep["wqkv"], prep["bqkv"], prep["wo"], prep["bo"],
      prep["w1"], prep["b1"], prep["w2"], prep["b2"],
      prep["ln1_g"], prep["ln1_b"], prep["ln2_g"], prep["ln2_b"],
      prep["w_out"], prep["b_out"])

    return out.reshape(B, C)


# --------------------------------------------------------------------------
# Deterministic parameter init (mirrors the PyTorch module's parameter set)
# --------------------------------------------------------------------------
def init_params(key, vocab_size, model_dim, num_layers, num_classes, ff_dim):
    def dense(k, shape, scale=0.02):
        return (scale * jax.random.normal(k, shape)).astype(jnp.float32)

    keys = jax.random.split(key, 2 + num_layers)
    params = {"embedding": dense(keys[0], (vocab_size, model_dim), 1.0), "layers": []}
    for li in range(num_layers):
        ks = jax.random.split(keys[2 + li], 8)
        params["layers"].append({
            "wq": dense(ks[0], (model_dim, model_dim)),
            "bq": jnp.zeros((model_dim,), jnp.float32),
            "wk": dense(ks[1], (model_dim, model_dim)),
            "bk": jnp.zeros((model_dim,), jnp.float32),
            "wv": dense(ks[2], (model_dim, model_dim)),
            "bv": jnp.zeros((model_dim,), jnp.float32),
            "wo": dense(ks[3], (model_dim, model_dim)),
            "bo": jnp.zeros((model_dim,), jnp.float32),
            "w1": dense(ks[4], (model_dim, ff_dim)),
            "b1": jnp.zeros((ff_dim,), jnp.float32),
            "w2": dense(ks[5], (ff_dim, model_dim)),
            "b2": jnp.zeros((model_dim,), jnp.float32),
            "ln1_g": jnp.ones((model_dim,), jnp.float32),
            "ln1_b": jnp.zeros((model_dim,), jnp.float32),
            "ln2_g": jnp.ones((model_dim,), jnp.float32),
            "ln2_b": jnp.zeros((model_dim,), jnp.float32),
        })
    params["w_out"] = dense(keys[1], (model_dim, num_classes))
    params["b_out"] = jnp.zeros((num_classes,), jnp.float32)
    return params


# --------------------------------------------------------------------------
if __name__ == "__main__":
    vocab_size = 50
    model_dim = 32
    num_layers = 2
    num_classes = 4
    nhead = 8
    ff_dim = 4 * model_dim      # model_A transformer FFN width (custom; 4*d_model)
    B, S = 2, 8

    key = jax.random.PRNGKey(0)
    k_tok, k_par = jax.random.split(key)
    tokens = jax.random.randint(k_tok, (B, S), 0, vocab_size, dtype=jnp.int32)
    params = init_params(k_par, vocab_size, model_dim, num_layers, num_classes, ff_dim)
    prep = prepare_params(params, nhead=nhead, seq_len=S)   # one-time host-side prep

    fwd = jax.jit(functools.partial(transformer_classifier_forward, nhead=nhead))
    logits = fwd(tokens, prep)
    jax.block_until_ready(logits)

    assert logits.shape == (B, num_classes), logits.shape
    assert jnp.all(jnp.isfinite(logits))
    print("KERNEL_OK")
</pallas_src>

<mosaic_0001>
module attributes {stable_mosaic.version = 11 : i64} {
  func.func @_fused_forward_kernel(%arg0: i32, %arg1: memref<1x8x32xf32, #tpu.memory_space<vmem>>, %arg2: memref<8x32xf32, #tpu.memory_space<vmem>>, %arg3: memref<2x32x96xf32, #tpu.memory_space<vmem>>, %arg4: memref<2x1x96xf32, #tpu.memory_space<vmem>>, %arg5: memref<2x32x32xf32, #tpu.memory_space<vmem>>, %arg6: memref<2x1x32xf32, #tpu.memory_space<vmem>>, %arg7: memref<2x32x128xf32, #tpu.memory_space<vmem>>, %arg8: memref<2x1x128xf32, #tpu.memory_space<vmem>>, %arg9: memref<2x128x32xf32, #tpu.memory_space<vmem>>, %arg10: memref<2x1x32xf32, #tpu.memory_space<vmem>>, %arg11: memref<2x1x32xf32, #tpu.memory_space<vmem>>, %arg12: memref<2x1x32xf32, #tpu.memory_space<vmem>>, %arg13: memref<2x1x32xf32, #tpu.memory_space<vmem>>, %arg14: memref<2x1x32xf32, #tpu.memory_space<vmem>>, %arg15: memref<32x4xf32, #tpu.memory_space<vmem>>, %arg16: memref<1x4xf32, #tpu.memory_space<vmem>>, %arg17: memref<1x1x4xf32, #tpu.memory_space<vmem>>) attributes {dimension_semantics = [#tpu.dimension_semantics<parallel>], iteration_bounds = array<i64: 2>, scalar_prefetch = 0 : i64, scratch_operands = 0 : i64, tpu.core_type = #tpu.core_type<tc>, window_params = [{transform_indices = @transform_0, window_bounds = array<i64: 1, 8, 32>}, {pipeline_mode = #tpu.pipeline_mode<synchronous>, transform_indices = @transform_1, window_bounds = array<i64: 8, 32>}, {pipeline_mode = #tpu.pipeline_mode<synchronous>, transform_indices = @transform_2, window_bounds = array<i64: 2, 32, 96>}, {pipeline_mode = #tpu.pipeline_mode<synchronous>, transform_indices = @transform_3, window_bounds = array<i64: 2, 1, 96>}, {pipeline_mode = #tpu.pipeline_mode<synchronous>, transform_indices = @transform_4, window_bounds = array<i64: 2, 32, 32>}, {pipeline_mode = #tpu.pipeline_mode<synchronous>, transform_indices = @transform_5, window_bounds = array<i64: 2, 1, 32>}, {pipeline_mode = #tpu.pipeline_mode<synchronous>, transform_indices = @transform_6, window_bounds = array<i64: 2, 32, 128>}, {pipeline_mode = #tpu.pipeline_mode<synchronous>, transform_indices = @transform_7, window_bounds = array<i64: 2, 1, 128>}, {pipeline_mode = #tpu.pipeline_mode<synchronous>, transform_indices = @transform_8, window_bounds = array<i64: 2, 128, 32>}, {pipeline_mode = #tpu.pipeline_mode<synchronous>, transform_indices = @transform_9, window_bounds = array<i64: 2, 1, 32>}, {pipeline_mode = #tpu.pipeline_mode<synchronous>, transform_indices = @transform_10, window_bounds = array<i64: 2, 1, 32>}, {pipeline_mode = #tpu.pipeline_mode<synchronous>, transform_indices = @transform_11, window_bounds = array<i64: 2, 1, 32>}, {pipeline_mode = #tpu.pipeline_mode<synchronous>, transform_indices = @transform_12, window_bounds = array<i64: 2, 1, 32>}, {pipeline_mode = #tpu.pipeline_mode<synchronous>, transform_indices = @transform_13, window_bounds = array<i64: 2, 1, 32>}, {pipeline_mode = #tpu.pipeline_mode<synchronous>, transform_indices = @transform_14, window_bounds = array<i64: 32, 4>}, {pipeline_mode = #tpu.pipeline_mode<synchronous>, transform_indices = @transform_15, window_bounds = array<i64: 1, 4>}, {transform_indices = @transform_16, window_bounds = array<i64: 1, 1, 4>}]} {
    %c0 = arith.constant 0 : index
    %c0_0 = arith.constant 0 : index
    %c0_1 = arith.constant 0 : index
    %0 = vector.load %arg1[%c0, %c0_0, %c0_1] : memref<1x8x32xf32, #tpu.memory_space<vmem>>, vector<1x8x32xf32>
    %1 = vector.shape_cast %0 : vector<1x8x32xf32> to vector<8x32xf32>
    %c0_2 = arith.constant 0 : index
    %c0_3 = arith.constant 0 : index
    %2 = vector.load %arg2[%c0_2, %c0_3] : memref<8x32xf32, #tpu.memory_space<vmem>>, vector<8x32xf32>
    %3 = arith.addf %1, %2 : vector<8x32xf32>
    %c0_4 = arith.constant 0 : index
    %c0_5 = arith.constant 0 : index
    %c0_6 = arith.constant 0 : index
    %4 = vector.load %arg3[%c0_4, %c0_5, %c0_6] : memref<2x32x96xf32, #tpu.memory_space<vmem>>, vector<1x32x96xf32>
    %5 = vector.shape_cast %4 : vector<1x32x96xf32> to vector<32x96xf32>
    %c0_7 = arith.constant 0 : index
    %c0_8 = arith.constant 0 : index
    %c0_9 = arith.constant 0 : index
    %6 = vector.load %arg4[%c0_7, %c0_8, %c0_9] : memref<2x1x96xf32, #tpu.memory_space<vmem>>, vector<1x1x96xf32>
    %7 = vector.shape_cast %6 : vector<1x1x96xf32> to vector<1x96xf32>
    %8 = arith.truncf %3 : vector<8x32xf32> to vector<8x32xbf16>
    %9 = arith.truncf %5 : vector<32x96xf32> to vector<32x96xbf16>
    %cst = arith.constant dense<0.000000e+00> : vector<8x96xf32>
    %10 = tpu.matmul %8, %9, %cst {dimension_numbers = #tpu.dot_dimension_numbers<[1], [0], [0], [1], [0, 0, 1, 1], [], []>} : vector<8x32xbf16>, vector<32x96xbf16>, vector<8x96xf32> -> vector<8x96xf32>
    %11 = vector.broadcast %7 : vector<1x96xf32> to vector<8x96xf32>
    %12 = arith.addf %10, %11 : vector<8x96xf32>
    %13 = vector.extract_strided_slice %12 {offsets = [0, 0], sizes = [8, 32], strides = [1, 1]} : vector<8x96xf32> to vector<8x32xf32>
    %14 = vector.extract_strided_slice %12 {offsets = [0, 32], sizes = [8, 32], strides = [1, 1]} : vector<8x96xf32> to vector<8x32xf32>
    %15 = vector.extract_strided_slice %12 {offsets = [0, 64], sizes = [8, 32], strides = [1, 1]} : vector<8x96xf32> to vector<8x32xf32>
    %16 = vector.extract_strided_slice %13 {offsets = [0, 0], sizes = [8, 4], strides = [1, 1]} : vector<8x32xf32> to vector<8x4xf32>
    %17 = vector.extract_strided_slice %14 {offsets = [0, 0], sizes = [8, 4], strides = [1, 1]} : vector<8x32xf32> to vector<8x4xf32>
    %18 = vector.extract_strided_slice %15 {offsets = [0, 0], sizes = [8, 4], strides = [1, 1]} : vector<8x32xf32> to vector<8x4xf32>
    %19 = arith.truncf %16 : vector<8x4xf32> to vector<8x4xbf16>
    %20 = arith.truncf %17 : vector<8x4xf32> to vector<8x4xbf16>
    %cst_10 = arith.constant dense<0.000000e+00> : vector<8x8xf32>
    %21 = tpu.matmul %19, %20, %cst_10 {dimension_numbers = #tpu.dot_dimension_numbers<[1], [1], [0], [0], [0, 0, 1, 0], [], []>} : vector<8x4xbf16>, vector<8x4xbf16>, vector<8x8xf32> -> vector<8x8xf32>
    %cst_11 = arith.constant dense<0xFF800000> : vector<8xf32>
    %22 = vector.multi_reduction <maximumf>, %21, %cst_11 [1] : vector<8x8xf32> to vector<8xf32>
    %23 = vector.shape_cast %22 : vector<8xf32> to vector<8x1xf32>
    %24 = vector.broadcast %23 : vector<8x1xf32> to vector<8x8xf32>
    %25 = arith.subf %21, %24 : vector<8x8xf32>
    %26 = math.exp %25 : vector<8x8xf32>
    %cst_12 = arith.constant dense<0.000000e+00> : vector<8xf32>
    %27 = vector.multi_reduction <add>, %26, %cst_12 [1] : vector<8x8xf32> to vector<8xf32>
    %28 = vector.shape_cast %27 : vector<8xf32> to vector<8x1xf32>
    %29 = tpu.reciprocal %28 {approx = true} : vector<8x1xf32> -> vector<8x1xf32>
    %30 = vector.broadcast %29 : vector<8x1xf32> to vector<8x8xf32>
    %31 = arith.mulf %26, %30 : vector<8x8xf32>
    %32 = arith.truncf %31 : vector<8x8xf32> to vector<8x8xbf16>
    %33 = arith.truncf %18 : vector<8x4xf32> to vector<8x4xbf16>
    %cst_13 = arith.constant dense<0.000000e+00> : vector<8x4xf32>
    %34 = tpu.matmul %32, %33, %cst_13 {dimension_numbers = #tpu.dot_dimension_numbers<[1], [0], [0], [1], [0, 0, 1, 1], [], []>} : vector<8x8xbf16>, vector<8x4xbf16>, vector<8x4xf32> -> vector<8x4xf32>
    %35 = vector.extract_strided_slice %13 {offsets = [0, 4], sizes = [8, 4], strides = [1, 1]} : vector<8x32xf32> to vector<8x4xf32>
    %36 = vector.extract_strided_slice %14 {offsets = [0, 4], sizes = [8, 4], strides = [1, 1]} : vector<8x32xf32> to vector<8x4xf32>
    %37 = vector.extract_strided_slice %15 {offsets = [0, 4], sizes = [8, 4], strides = [1, 1]} : vector<8x32xf32> to vector<8x4xf32>
    %38 = arith.truncf %35 : vector<8x4xf32> to vector<8x4xbf16>
    %39 = arith.truncf %36 : vector<8x4xf32> to vector<8x4xbf16>
    %cst_14 = arith.constant dense<0.000000e+00> : vector<8x8xf32>
    %40 = tpu.matmul %38, %39, %cst_14 {dimension_numbers = #tpu.dot_dimension_numbers<[1], [1], [0], [0], [0, 0, 1, 0], [], []>} : vector<8x4xbf16>, vector<8x4xbf16>, vector<8x8xf32> -> vector<8x8xf32>
    %cst_15 = arith.constant dense<0xFF800000> : vector<8xf32>
    %41 = vector.multi_reduction <maximumf>, %40, %cst_15 [1] : vector<8x8xf32> to vector<8xf32>
    %42 = vector.shape_cast %41 : vector<8xf32> to vector<8x1xf32>
    %43 = vector.broadcast %42 : vector<8x1xf32> to vector<8x8xf32>
    %44 = arith.subf %40, %43 : vector<8x8xf32>
    %45 = math.exp %44 : vector<8x8xf32>
    %cst_16 = arith.constant dense<0.000000e+00> : vector<8xf32>
    %46 = vector.multi_reduction <add>, %45, %cst_16 [1] : vector<8x8xf32> to vector<8xf32>
    %47 = vector.shape_cast %46 : vector<8xf32> to vector<8x1xf32>
    %48 = tpu.reciprocal %47 {approx = true} : vector<8x1xf32> -> vector<8x1xf32>
    %49 = vector.broadcast %48 : vector<8x1xf32> to vector<8x8xf32>
    %50 = arith.mulf %45, %49 : vector<8x8xf32>
    %51 = arith.truncf %50 : vector<8x8xf32> to vector<8x8xbf16>
    %52 = arith.truncf %37 : vector<8x4xf32> to vector<8x4xbf16>
    %cst_17 = arith.constant dense<0.000000e+00> : vector<8x4xf32>
    %53 = tpu.matmul %51, %52, %cst_17 {dimension_numbers = #tpu.dot_dimension_numbers<[1], [0], [0], [1], [0, 0, 1, 1], [], []>} : vector<8x8xbf16>, vector<8x4xbf16>, vector<8x4xf32> -> vector<8x4xf32>
    %54 = vector.extract_strided_slice %13 {offsets = [0, 8], sizes = [8, 4], strides = [1, 1]} : vector<8x32xf32> to vector<8x4xf32>
    %55 = vector.extract_strided_slice %14 {offsets = [0, 8], sizes = [8, 4], strides = [1, 1]} : vector<8x32xf32> to vector<8x4xf32>
    %56 = vector.extract_strided_slice %15 {offsets = [0, 8], sizes = [8, 4], strides = [1, 1]} : vector<8x32xf32> to vector<8x4xf32>
    %57 = arith.truncf %54 : vector<8x4xf32> to vector<8x4xbf16>
    %58 = arith.truncf %55 : vector<8x4xf32> to vector<8x4xbf16>
    %cst_18 = arith.constant dense<0.000000e+00> : vector<8x8xf32>
    %59 = tpu.matmul %57, %58, %cst_18 {dimension_numbers = #tpu.dot_dimension_numbers<[1], [1], [0], [0], [0, 0, 1, 0], [], []>} : vector<8x4xbf16>, vector<8x4xbf16>, vector<8x8xf32> -> vector<8x8xf32>
    %cst_19 = arith.constant dense<0xFF800000> : vector<8xf32>
    %60 = vector.multi_reduction <maximumf>, %59, %cst_19 [1] : vector<8x8xf32> to vector<8xf32>
    %61 = vector.shape_cast %60 : vector<8xf32> to vector<8x1xf32>
    %62 = vector.broadcast %61 : vector<8x1xf32> to vector<8x8xf32>
    %63 = arith.subf %59, %62 : vector<8x8xf32>
    %64 = math.exp %63 : vector<8x8xf32>
    %cst_20 = arith.constant dense<0.000000e+00> : vector<8xf32>
    %65 = vector.multi_reduction <add>, %64, %cst_20 [1] : vector<8x8xf32> to vector<8xf32>
    %66 = vector.shape_cast %65 : vector<8xf32> to vector<8x1xf32>
    %67 = tpu.reciprocal %66 {approx = true} : vector<8x1xf32> -> vector<8x1xf32>
    %68 = vector.broadcast %67 : vector<8x1xf32> to vector<8x8xf32>
    %69 = arith.mulf %64, %68 : vector<8x8xf32>
    %70 = arith.truncf %69 : vector<8x8xf32> to vector<8x8xbf16>
    %71 = arith.truncf %56 : vector<8x4xf32> to vector<8x4xbf16>
    %cst_21 = arith.constant dense<0.000000e+00> : vector<8x4xf32>
    %72 = tpu.matmul %70, %71, %cst_21 {dimension_numbers = #tpu.dot_dimension_numbers<[1], [0], [0], [1], [0, 0, 1, 1], [], []>} : vector<8x8xbf16>, vector<8x4xbf16>, vector<8x4xf32> -> vector<8x4xf32>
    %73 = vector.extract_strided_slice %13 {offsets = [0, 12], sizes = [8, 4], strides = [1, 1]} : vector<8x32xf32> to vector<8x4xf32>
    %74 = vector.extract_strided_slice %14 {offsets = [0, 12], sizes = [8, 4], strides = [1, 1]} : vector<8x32xf32> to vector<8x4xf32>
    %75 = vector.extract_strided_slice %15 {offsets = [0, 12], sizes = [8, 4], strides = [1, 1]} : vector<8x32xf32> to vector<8x4xf32>
    %76 = arith.truncf %73 : vector<8x4xf32> to vector<8x4xbf16>
    %77 = arith.truncf %74 : vector<8x4xf32> to vector<8x4xbf16>
    %cst_22 = arith.constant dense<0.000000e+00> : vector<8x8xf32>
    %78 = tpu.matmul %76, %77, %cst_22 {dimension_numbers = #tpu.dot_dimension_numbers<[1], [1], [0], [0], [0, 0, 1, 0], [], []>} : vector<8x4xbf16>, vector<8x4xbf16>, vector<8x8xf32> -> vector<8x8xf32>
    %cst_23 = arith.constant dense<0xFF800000> : vector<8xf32>
    %79 = vector.multi_reduction <maximumf>, %78, %cst_23 [1] : vector<8x8xf32> to vector<8xf32>
    %80 = vector.shape_cast %79 : vector<8xf32> to vector<8x1xf32>
    %81 = vector.broadcast %80 : vector<8x1xf32> to vector<8x8xf32>
    %82 = arith.subf %78, %81 : vector<8x8xf32>
    %83 = math.exp %82 : vector<8x8xf32>
    %cst_24 = arith.constant dense<0.000000e+00> : vector<8xf32>
    %84 = vector.multi_reduction <add>, %83, %cst_24 [1] : vector<8x8xf32> to vector<8xf32>
    %85 = vector.shape_cast %84 : vector<8xf32> to vector<8x1xf32>
    %86 = tpu.reciprocal %85 {approx = true} : vector<8x1xf32> -> vector<8x1xf32>
    %87 = vector.broadcast %86 : vector<8x1xf32> to vector<8x8xf32>
    %88 = arith.mulf %83, %87 : vector<8x8xf32>
    %89 = arith.truncf %88 : vector<8x8xf32> to vector<8x8xbf16>
    %90 = arith.truncf %75 : vector<8x4xf32> to vector<8x4xbf16>
    %cst_25 = arith.constant dense<0.000000e+00> : vector<8x4xf32>
    %91 = tpu.matmul %89, %90, %cst_25 {dimension_numbers = #tpu.dot_dimension_numbers<[1], [0], [0], [1], [0, 0, 1, 1], [], []>} : vector<8x8xbf16>, vector<8x4xbf16>, vector<8x4xf32> -> vector<8x4xf32>
    %92 = vector.extract_strided_slice %13 {offsets = [0, 16], sizes = [8, 4], strides = [1, 1]} : vector<8x32xf32> to vector<8x4xf32>
    %93 = vector.extract_strided_slice %14 {offsets = [0, 16], sizes = [8, 4], strides = [1, 1]} : vector<8x32xf32> to vector<8x4xf32>
    %94 = vector.extract_strided_slice %15 {offsets = [0, 16], sizes = [8, 4], strides = [1, 1]} : vector<8x32xf32> to vector<8x4xf32>
    %95 = arith.truncf %92 : vector<8x4xf32> to vector<8x4xbf16>
    %96 = arith.truncf %93 : vector<8x4xf32> to vector<8x4xbf16>
    %cst_26 = arith.constant dense<0.000000e+00> : vector<8x8xf32>
    %97 = tpu.matmul %95, %96, %cst_26 {dimension_numbers = #tpu.dot_dimension_numbers<[1], [1], [0], [0], [0, 0, 1, 0], [], []>} : vector<8x4xbf16>, vector<8x4xbf16>, vector<8x8xf32> -> vector<8x8xf32>
    %cst_27 = arith.constant dense<0xFF800000> : vector<8xf32>
    %98 = vector.multi_reduction <maximumf>, %97, %cst_27 [1] : vector<8x8xf32> to vector<8xf32>
    %99 = vector.shape_cast %98 : vector<8xf32> to vector<8x1xf32>
    %100 = vector.broadcast %99 : vector<8x1xf32> to vector<8x8xf32>
    %101 = arith.subf %97, %100 : vector<8x8xf32>
    %102 = math.exp %101 : vector<8x8xf32>
    %cst_28 = arith.constant dense<0.000000e+00> : vector<8xf32>
    %103 = vector.multi_reduction <add>, %102, %cst_28 [1] : vector<8x8xf32> to vector<8xf32>
    %104 = vector.shape_cast %103 : vector<8xf32> to vector<8x1xf32>
    %105 = tpu.reciprocal %104 {approx = true} : vector<8x1xf32> -> vector<8x1xf32>
    %106 = vector.broadcast %105 : vector<8x1xf32> to vector<8x8xf32>
    %107 = arith.mulf %102, %106 : vector<8x8xf32>
    %108 = arith.truncf %107 : vector<8x8xf32> to vector<8x8xbf16>
    %109 = arith.truncf %94 : vector<8x4xf32> to vector<8x4xbf16>
    %cst_29 = arith.constant dense<0.000000e+00> : vector<8x4xf32>
    %110 = tpu.matmul %108, %109, %cst_29 {dimension_numbers = #tpu.dot_dimension_numbers<[1], [0], [0], [1], [0, 0, 1, 1], [], []>} : vector<8x8xbf16>, vector<8x4xbf16>, vector<8x4xf32> -> vector<8x4xf32>
    %111 = vector.extract_strided_slice %13 {offsets = [0, 20], sizes = [8, 4], strides = [1, 1]} : vector<8x32xf32> to vector<8x4xf32>
    %112 = vector.extract_strided_slice %14 {offsets = [0, 20], sizes = [8, 4], strides = [1, 1]} : vector<8x32xf32> to vector<8x4xf32>
    %113 = vector.extract_strided_slice %15 {offsets = [0, 20], sizes = [8, 4], strides = [1, 1]} : vector<8x32xf32> to vector<8x4xf32>
    %114 = arith.truncf %111 : vector<8x4xf32> to vector<8x4xbf16>
    %115 = arith.truncf %112 : vector<8x4xf32> to vector<8x4xbf16>
    %cst_30 = arith.constant dense<0.000000e+00> : vector<8x8xf32>
    %116 = tpu.matmul %114, %115, %cst_30 {dimension_numbers = #tpu.dot_dimension_numbers<[1], [1], [0], [0], [0, 0, 1, 0], [], []>} : vector<8x4xbf16>, vector<8x4xbf16>, vector<8x8xf32> -> vector<8x8xf32>
    %cst_31 = arith.constant dense<0xFF800000> : vector<8xf32>
    %117 = vector.multi_reduction <maximumf>, %116, %cst_31 [1] : vector<8x8xf32> to vector<8xf32>
    %118 = vector.shape_cast %117 : vector<8xf32> to vector<8x1xf32>
    %119 = vector.broadcast %118 : vector<8x1xf32> to vector<8x8xf32>
    %120 = arith.subf %116, %119 : vector<8x8xf32>
    %121 = math.exp %120 : vector<8x8xf32>
    %cst_32 = arith.constant dense<0.000000e+00> : vector<8xf32>
    %122 = vector.multi_reduction <add>, %121, %cst_32 [1] : vector<8x8xf32> to vector<8xf32>
    %123 = vector.shape_cast %122 : vector<8xf32> to vector<8x1xf32>
    %124 = tpu.reciprocal %123 {approx = true} : vector<8x1xf32> -> vector<8x1xf32>
    %125 = vector.broadcast %124 : vector<8x1xf32> to vector<8x8xf32>
    %126 = arith.mulf %121, %125 : vector<8x8xf32>
    %127 = arith.truncf %126 : vector<8x8xf32> to vector<8x8xbf16>
    %128 = arith.truncf %113 : vector<8x4xf32> to vector<8x4xbf16>
    %cst_33 = arith.constant dense<0.000000e+00> : vector<8x4xf32>
    %129 = tpu.matmul %127, %128, %cst_33 {dimension_numbers = #tpu.dot_dimension_numbers<[1], [0], [0], [1], [0, 0, 1, 1], [], []>} : vector<8x8xbf16>, vector<8x4xbf16>, vector<8x4xf32> -> vector<8x4xf32>
    %130 = vector.extract_strided_slice %13 {offsets = [0, 24], sizes = [8, 4], strides = [1, 1]} : vector<8x32xf32> to vector<8x4xf32>
    %131 = vector.extract_strided_slice %14 {offsets = [0, 24], sizes = [8, 4], strides = [1, 1]} : vector<8x32xf32> to vector<8x4xf32>
    %132 = vector.extract_strided_slice %15 {offsets = [0, 24], sizes = [8, 4], strides = [1, 1]} : vector<8x32xf32> to vector<8x4xf32>
    %133 = arith.truncf %130 : vector<8x4xf32> to vector<8x4xbf16>
    %134 = arith.truncf %131 : vector<8x4xf32> to vector<8x4xbf16>
    %cst_34 = arith.constant dense<0.000000e+00> : vector<8x8xf32>
    %135 = tpu.matmul %133, %134, %cst_34 {dimension_numbers = #tpu.dot_dimension_numbers<[1], [1], [0], [0], [0, 0, 1, 0], [], []>} : vector<8x4xbf16>, vector<8x4xbf16>, vector<8x8xf32> -> vector<8x8xf32>
    %cst_35 = arith.constant dense<0xFF800000> : vector<8xf32>
    %136 = vector.multi_reduction <maximumf>, %135, %cst_35 [1] : vector<8x8xf32> to vector<8xf32>
    %137 = vector.shape_cast %136 : vector<8xf32> to vector<8x1xf32>
    %138 = vector.broadcast %137 : vector<8x1xf32> to vector<8x8xf32>
    %139 = arith.subf %135, %138 : vector<8x8xf32>
    %140 = math.exp %139 : vector<8x8xf32>
    %cst_36 = arith.constant dense<0.000000e+00> : vector<8xf32>
    %141 = vector.multi_reduction <add>, %140, %cst_36 [1] : vector<8x8xf32> to vector<8xf32>
    %142 = vector.shape_cast %141 : vector<8xf32> to vector<8x1xf32>
    %143 = tpu.reciprocal %142 {approx = true} : vector<8x1xf32> -> vector<8x1xf32>
    %144 = vector.broadcast %143 : vector<8x1xf32> to vector<8x8xf32>
    %145 = arith.mulf %140, %144 : vector<8x8xf32>
    %146 = arith.truncf %145 : vector<8x8xf32> to vector<8x8xbf16>
    %147 = arith.truncf %132 : vector<8x4xf32> to vector<8x4xbf16>
    %cst_37 = arith.constant dense<0.000000e+00> : vector<8x4xf32>
    %148 = tpu.matmul %146, %147, %cst_37 {dimension_numbers = #tpu.dot_dimension_numbers<[1], [0], [0], [1], [0, 0, 1, 1], [], []>} : vector<8x8xbf16>, vector<8x4xbf16>, vector<8x4xf32> -> vector<8x4xf32>
    %149 = vector.extract_strided_slice %13 {offsets = [0, 28], sizes = [8, 4], strides = [1, 1]} : vector<8x32xf32> to vector<8x4xf32>
    %150 = vector.extract_strided_slice %14 {offsets = [0, 28], sizes = [8, 4], strides = [1, 1]} : vector<8x32xf32> to vector<8x4xf32>
    %151 = vector.extract_strided_slice %15 {offsets = [0, 28], sizes = [8, 4], strides = [1, 1]} : vector<8x32xf32> to vector<8x4xf32>
    %152 = arith.truncf %149 : vector<8x4xf32> to vector<8x4xbf16>
    %153 = arith.truncf %150 : vector<8x4xf32> to vector<8x4xbf16>
    %cst_38 = arith.constant dense<0.000000e+00> : vector<8x8xf32>
    %154 = tpu.matmul %152, %153, %cst_38 {dimension_numbers = #tpu.dot_dimension_numbers<[1], [1], [0], [0], [0, 0, 1, 0], [], []>} : vector<8x4xbf16>, vector<8x4xbf16>, vector<8x8xf32> -> vector<8x8xf32>
    %cst_39 = arith.constant dense<0xFF800000> : vector<8xf32>
    %155 = vector.multi_reduction <maximumf>, %154, %cst_39 [1] : vector<8x8xf32> to vector<8xf32>
    %156 = vector.shape_cast %155 : vector<8xf32> to vector<8x1xf32>
    %157 = vector.broadcast %156 : vector<8x1xf32> to vector<8x8xf32>
    %158 = arith.subf %154, %157 : vector<8x8xf32>
    %159 = math.exp %158 : vector<8x8xf32>
    %cst_40 = arith.constant dense<0.000000e+00> : vector<8xf32>
    %160 = vector.multi_reduction <add>, %159, %cst_40 [1] : vector<8x8xf32> to vector<8xf32>
    %161 = vector.shape_cast %160 : vector<8xf32> to vector<8x1xf32>
    %162 = tpu.reciprocal %161 {approx = true} : vector<8x1xf32> -> vector<8x1xf32>
    %163 = vector.broadcast %162 : vector<8x1xf32> to vector<8x8xf32>
    %164 = arith.mulf %159, %163 : vector<8x8xf32>
    %165 = arith.truncf %164 : vector<8x8xf32> to vector<8x8xbf16>
    %166 = arith.truncf %151 : vector<8x4xf32> to vector<8x4xbf16>
    %cst_41 = arith.constant dense<0.000000e+00> : vector<8x4xf32>
    %167 = tpu.matmul %165, %166, %cst_41 {dimension_numbers = #tpu.dot_dimension_numbers<[1], [0], [0], [1], [0, 0, 1, 1], [], []>} : vector<8x8xbf16>, vector<8x4xbf16>, vector<8x4xf32> -> vector<8x4xf32>
    %168 = tpu.concatenate %34, %53, %72, %91, %110, %129, %148, %167 in 1 : vector<8x4xf32>, vector<8x4xf32>, vector<8x4xf32>, vector<8x4xf32>, vector<8x4xf32>, vector<8x4xf32>, vector<8x4xf32>, vector<8x4xf32> -> vector<8x32xf32>
    %c0_42 = arith.constant 0 : index
    %c0_43 = arith.constant 0 : index
    %c0_44 = arith.constant 0 : index
    %169 = vector.load %arg5[%c0_42, %c0_43, %c0_44] : memref<2x32x32xf32, #tpu.memory_space<vmem>>, vector<1x32x32xf32>
    %170 = vector.shape_cast %169 : vector<1x32x32xf32> to vector<32x32xf32>
    %c0_45 = arith.constant 0 : index
    %c0_46 = arith.constant 0 : index
    %c0_47 = arith.constant 0 : index
    %171 = vector.load %arg6[%c0_45, %c0_46, %c0_47] : memref<2x1x32xf32, #tpu.memory_space<vmem>>, vector<1x1x32xf32>
    %172 = vector.shape_cast %171 : vector<1x1x32xf32> to vector<1x32xf32>
    %173 = arith.truncf %168 : vector<8x32xf32> to vector<8x32xbf16>
    %174 = arith.truncf %170 : vector<32x32xf32> to vector<32x32xbf16>
    %cst_48 = arith.constant dense<0.000000e+00> : vector<8x32xf32>
    %175 = tpu.matmul %173, %174, %cst_48 {dimension_numbers = #tpu.dot_dimension_numbers<[1], [0], [0], [1], [0, 0, 1, 1], [], []>} : vector<8x32xbf16>, vector<32x32xbf16>, vector<8x32xf32> -> vector<8x32xf32>
    %176 = vector.broadcast %172 : vector<1x32xf32> to vector<8x32xf32>
    %177 = arith.addf %175, %176 : vector<8x32xf32>
    %178 = arith.addf %3, %177 : vector<8x32xf32>
    %c0_49 = arith.constant 0 : index
    %c0_50 = arith.constant 0 : index
    %c0_51 = arith.constant 0 : index
    %179 = vector.load %arg11[%c0_49, %c0_50, %c0_51] : memref<2x1x32xf32, #tpu.memory_space<vmem>>, vector<1x1x32xf32>
    %180 = vector.shape_cast %179 : vector<1x1x32xf32> to vector<1x32xf32>
    %c0_52 = arith.constant 0 : index
    %c0_53 = arith.constant 0 : index
    %c0_54 = arith.constant 0 : index
    %181 = vector.load %arg12[%c0_52, %c0_53, %c0_54] : memref<2x1x32xf32, #tpu.memory_space<vmem>>, vector<1x1x32xf32>
    %182 = vector.shape_cast %181 : vector<1x1x32xf32> to vector<1x32xf32>
    %cst_55 = arith.constant dense<0.000000e+00> : vector<8xf32>
    %183 = vector.multi_reduction <add>, %178, %cst_55 [1] : vector<8x32xf32> to vector<8xf32>
    %184 = vector.shape_cast %183 : vector<8xf32> to vector<8x1xf32>
    %cst_56 = arith.constant 3.200000e+01 : f32
    %185 = vector.broadcast %cst_56 : f32 to vector<8x1xf32>
    %186 = arith.divf %184, %185 : vector<8x1xf32>
    %187 = vector.broadcast %186 : vector<8x1xf32> to vector<8x32xf32>
    %188 = arith.subf %178, %187 : vector<8x32xf32>
    %189 = arith.mulf %188, %188 : vector<8x32xf32>
    %cst_57 = arith.constant dense<0.000000e+00> : vector<8xf32>
    %190 = vector.multi_reduction <add>, %189, %cst_57 [1] : vector<8x32xf32> to vector<8xf32>
    %191 = vector.shape_cast %190 : vector<8xf32> to vector<8x1xf32>
    %cst_58 = arith.constant 3.200000e+01 : f32
    %192 = vector.broadcast %cst_58 : f32 to vector<8x1xf32>
    %193 = arith.divf %191, %192 : vector<8x1xf32>
    %194 = vector.broadcast %186 : vector<8x1xf32> to vector<8x32xf32>
    %195 = arith.subf %178, %194 : vector<8x32xf32>
    %cst_59 = arith.constant 9.99999974E-6 : f32
    %196 = vector.broadcast %cst_59 : f32 to vector<8x1xf32>
    %197 = arith.addf %193, %196 : vector<8x1xf32>
    %198 = math.rsqrt %197 : vector<8x1xf32>
    %199 = vector.broadcast %198 : vector<8x1xf32> to vector<8x32xf32>
    %200 = arith.mulf %195, %199 : vector<8x32xf32>
    %201 = vector.broadcast %180 : vector<1x32xf32> to vector<8x32xf32>
    %202 = arith.mulf %200, %201 : vector<8x32xf32>
    %203 = vector.broadcast %182 : vector<1x32xf32> to vector<8x32xf32>
    %204 = arith.addf %202, %203 : vector<8x32xf32>
    %c0_60 = arith.constant 0 : index
    %c0_61 = arith.constant 0 : index
    %c0_62 = arith.constant 0 : index
    %205 = vector.load %arg7[%c0_60, %c0_61, %c0_62] : memref<2x32x128xf32, #tpu.memory_space<vmem>>, vector<1x32x128xf32>
    %206 = vector.shape_cast %205 : vector<1x32x128xf32> to vector<32x128xf32>
    %c0_63 = arith.constant 0 : index
    %c0_64 = arith.constant 0 : index
    %c0_65 = arith.constant 0 : index
    %207 = vector.load %arg8[%c0_63, %c0_64, %c0_65] : memref<2x1x128xf32, #tpu.memory_space<vmem>>, vector<1x1x128xf32>
    %208 = vector.shape_cast %207 : vector<1x1x128xf32> to vector<1x128xf32>
    %209 = arith.truncf %204 : vector<8x32xf32> to vector<8x32xbf16>
    %210 = arith.truncf %206 : vector<32x128xf32> to vector<32x128xbf16>
    %cst_66 = arith.constant dense<0.000000e+00> : vector<8x128xf32>
    %211 = tpu.matmul %209, %210, %cst_66 {dimension_numbers = #tpu.dot_dimension_numbers<[1], [0], [0], [1], [0, 0, 1, 1], [], []>} : vector<8x32xbf16>, vector<32x128xbf16>, vector<8x128xf32> -> vector<8x128xf32>
    %212 = vector.broadcast %208 : vector<1x128xf32> to vector<8x128xf32>
    %213 = arith.addf %211, %212 : vector<8x128xf32>
    %cst_67 = arith.constant 0.000000e+00 : f32
    %214 = vector.broadcast %cst_67 : f32 to vector<8x128xf32>
    %215 = arith.maximumf %213, %214 : vector<8x128xf32>
    %c0_68 = arith.constant 0 : index
    %c0_69 = arith.constant 0 : index
    %c0_70 = arith.constant 0 : index
    %216 = vector.load %arg9[%c0_68, %c0_69, %c0_70] : memref<2x128x32xf32, #tpu.memory_space<vmem>>, vector<1x128x32xf32>
    %217 = vector.shape_cast %216 : vector<1x128x32xf32> to vector<128x32xf32>
    %c0_71 = arith.constant 0 : index
    %c0_72 = arith.constant 0 : index
    %c0_73 = arith.constant 0 : index
    %218 = vector.load %arg10[%c0_71, %c0_72, %c0_73] : memref<2x1x32xf32, #tpu.memory_space<vmem>>, vector<1x1x32xf32>
    %219 = vector.shape_cast %218 : vector<1x1x32xf32> to vector<1x32xf32>
    %220 = arith.truncf %215 : vector<8x128xf32> to vector<8x128xbf16>
    %221 = arith.truncf %217 : vector<128x32xf32> to vector<128x32xbf16>
    %cst_74 = arith.constant dense<0.000000e+00> : vector<8x32xf32>
    %222 = tpu.matmul %220, %221, %cst_74 {dimension_numbers = #tpu.dot_dimension_numbers<[1], [0], [0], [1], [0, 0, 1, 1], [], []>} : vector<8x128xbf16>, vector<128x32xbf16>, vector<8x32xf32> -> vector<8x32xf32>
    %223 = vector.broadcast %219 : vector<1x32xf32> to vector<8x32xf32>
    %224 = arith.addf %222, %223 : vector<8x32xf32>
    %225 = arith.addf %204, %224 : vector<8x32xf32>
    %c0_75 = arith.constant 0 : index
    %c0_76 = arith.constant 0 : index
    %c0_77 = arith.constant 0 : index
    %226 = vector.load %arg13[%c0_75, %c0_76, %c0_77] : memref<2x1x32xf32, #tpu.memory_space<vmem>>, vector<1x1x32xf32>
    %227 = vector.shape_cast %226 : vector<1x1x32xf32> to vector<1x32xf32>
    %c0_78 = arith.constant 0 : index
    %c0_79 = arith.constant 0 : index
    %c0_80 = arith.constant 0 : index
    %228 = vector.load %arg14[%c0_78, %c0_79, %c0_80] : memref<2x1x32xf32, #tpu.memory_space<vmem>>, vector<1x1x32xf32>
    %229 = vector.shape_cast %228 : vector<1x1x32xf32> to vector<1x32xf32>
    %cst_81 = arith.constant dense<0.000000e+00> : vector<8xf32>
    %230 = vector.multi_reduction <add>, %225, %cst_81 [1] : vector<8x32xf32> to vector<8xf32>
    %231 = vector.shape_cast %230 : vector<8xf32> to vector<8x1xf32>
    %cst_82 = arith.constant 3.200000e+01 : f32
    %232 = vector.broadcast %cst_82 : f32 to vector<8x1xf32>
    %233 = arith.divf %231, %232 : vector<8x1xf32>
    %234 = vector.broadcast %233 : vector<8x1xf32> to vector<8x32xf32>
    %235 = arith.subf %225, %234 : vector<8x32xf32>
    %236 = arith.mulf %235, %235 : vector<8x32xf32>
    %cst_83 = arith.constant dense<0.000000e+00> : vector<8xf32>
    %237 = vector.multi_reduction <add>, %236, %cst_83 [1] : vector<8x32xf32> to vector<8xf32>
    %238 = vector.shape_cast %237 : vector<8xf32> to vector<8x1xf32>
    %cst_84 = arith.constant 3.200000e+01 : f32
    %239 = vector.broadcast %cst_84 : f32 to vector<8x1xf32>
    %240 = arith.divf %238, %239 : vector<8x1xf32>
    %241 = vector.broadcast %233 : vector<8x1xf32> to vector<8x32xf32>
    %242 = arith.subf %225, %241 : vector<8x32xf32>
    %cst_85 = arith.constant 9.99999974E-6 : f32
    %243 = vector.broadcast %cst_85 : f32 to vector<8x1xf32>
    %244 = arith.addf %240, %243 : vector<8x1xf32>
    %245 = math.rsqrt %244 : vector<8x1xf32>
    %246 = vector.broadcast %245 : vector<8x1xf32> to vector<8x32xf32>
    %247 = arith.mulf %242, %246 : vector<8x32xf32>
    %248 = vector.broadcast %227 : vector<1x32xf32> to vector<8x32xf32>
    %249 = arith.mulf %247, %248 : vector<8x32xf32>
    %250 = vector.broadcast %229 : vector<1x32xf32> to vector<8x32xf32>
    %251 = arith.addf %249, %250 : vector<8x32xf32>
    %c1 = arith.constant 1 : index
    %c0_86 = arith.constant 0 : index
    %c0_87 = arith.constant 0 : index
    %252 = vector.load %arg3[%c1, %c0_86, %c0_87] : memref<2x32x96xf32, #tpu.memory_space<vmem>>, vector<1x32x96xf32>
    %253 = vector.shape_cast %252 : vector<1x32x96xf32> to vector<32x96xf32>
    %c1_88 = arith.constant 1 : index
    %c0_89 = arith.constant 0 : index
    %c0_90 = arith.constant 0 : index
    %254 = vector.load %arg4[%c1_88, %c0_89, %c0_90] : memref<2x1x96xf32, #tpu.memory_space<vmem>>, vector<1x1x96xf32>
    %255 = vector.shape_cast %254 : vector<1x1x96xf32> to vector<1x96xf32>
    %256 = arith.truncf %251 : vector<8x32xf32> to vector<8x32xbf16>
    %257 = arith.truncf %253 : vector<32x96xf32> to vector<32x96xbf16>
    %cst_91 = arith.constant dense<0.000000e+00> : vector<8x96xf32>
    %258 = tpu.matmul %256, %257, %cst_91 {dimension_numbers = #tpu.dot_dimension_numbers<[1], [0], [0], [1], [0, 0, 1, 1], [], []>} : vector<8x32xbf16>, vector<32x96xbf16>, vector<8x96xf32> -> vector<8x96xf32>
    %259 = vector.broadcast %255 : vector<1x96xf32> to vector<8x96xf32>
    %260 = arith.addf %258, %259 : vector<8x96xf32>
    %261 = vector.extract_strided_slice %260 {offsets = [0, 0], sizes = [8, 32], strides = [1, 1]} : vector<8x96xf32> to vector<8x32xf32>
    %262 = vector.extract_strided_slice %260 {offsets = [0, 32], sizes = [8, 32], strides = [1, 1]} : vector<8x96xf32> to vector<8x32xf32>
    %263 = vector.extract_strided_slice %260 {offsets = [0, 64], sizes = [8, 32], strides = [1, 1]} : vector<8x96xf32> to vector<8x32xf32>
    %264 = vector.extract_strided_slice %261 {offsets = [0, 0], sizes = [8, 4], strides = [1, 1]} : vector<8x32xf32> to vector<8x4xf32>
    %265 = vector.extract_strided_slice %262 {offsets = [0, 0], sizes = [8, 4], strides = [1, 1]} : vector<8x32xf32> to vector<8x4xf32>
    %266 = vector.extract_strided_slice %263 {offsets = [0, 0], sizes = [8, 4], strides = [1, 1]} : vector<8x32xf32> to vector<8x4xf32>
    %267 = arith.truncf %264 : vector<8x4xf32> to vector<8x4xbf16>
    %268 = arith.truncf %265 : vector<8x4xf32> to vector<8x4xbf16>
    %cst_92 = arith.constant dense<0.000000e+00> : vector<8x8xf32>
    %269 = tpu.matmul %267, %268, %cst_92 {dimension_numbers = #tpu.dot_dimension_numbers<[1], [1], [0], [0], [0, 0, 1, 0], [], []>} : vector<8x4xbf16>, vector<8x4xbf16>, vector<8x8xf32> -> vector<8x8xf32>
    %cst_93 = arith.constant dense<0xFF800000> : vector<8xf32>
    %270 = vector.multi_reduction <maximumf>, %269, %cst_93 [1] : vector<8x8xf32> to vector<8xf32>
    %271 = vector.shape_cast %270 : vector<8xf32> to vector<8x1xf32>
    %272 = vector.broadcast %271 : vector<8x1xf32> to vector<8x8xf32>
    %273 = arith.subf %269, %272 : vector<8x8xf32>
    %274 = math.exp %273 : vector<8x8xf32>
    %cst_94 = arith.constant dense<0.000000e+00> : vector<8xf32>
    %275 = vector.multi_reduction <add>, %274, %cst_94 [1] : vector<8x8xf32> to vector<8xf32>
    %276 = vector.shape_cast %275 : vector<8xf32> to vector<8x1xf32>
    %277 = tpu.reciprocal %276 {approx = true} : vector<8x1xf32> -> vector<8x1xf32>
    %278 = vector.broadcast %277 : vector<8x1xf32> to vector<8x8xf32>
    %279 = arith.mulf %274, %278 : vector<8x8xf32>
    %280 = arith.truncf %279 : vector<8x8xf32> to vector<8x8xbf16>
    %281 = arith.truncf %266 : vector<8x4xf32> to vector<8x4xbf16>
    %cst_95 = arith.constant dense<0.000000e+00> : vector<8x4xf32>
    %282 = tpu.matmul %280, %281, %cst_95 {dimension_numbers = #tpu.dot_dimension_numbers<[1], [0], [0], [1], [0, 0, 1, 1], [], []>} : vector<8x8xbf16>, vector<8x4xbf16>, vector<8x4xf32> -> vector<8x4xf32>
    %283 = vector.extract_strided_slice %261 {offsets = [0, 4], sizes = [8, 4], strides = [1, 1]} : vector<8x32xf32> to vector<8x4xf32>
    %284 = vector.extract_strided_slice %262 {offsets = [0, 4], sizes = [8, 4], strides = [1, 1]} : vector<8x32xf32> to vector<8x4xf32>
    %285 = vector.extract_strided_slice %263 {offsets = [0, 4], sizes = [8, 4], strides = [1, 1]} : vector<8x32xf32> to vector<8x4xf32>
    %286 = arith.truncf %283 : vector<8x4xf32> to vector<8x4xbf16>
    %287 = arith.truncf %284 : vector<8x4xf32> to vector<8x4xbf16>
    %cst_96 = arith.constant dense<0.000000e+00> : vector<8x8xf32>
    %288 = tpu.matmul %286, %287, %cst_96 {dimension_numbers = #tpu.dot_dimension_numbers<[1], [1], [0], [0], [0, 0, 1, 0], [], []>} : vector<8x4xbf16>, vector<8x4xbf16>, vector<8x8xf32> -> vector<8x8xf32>
    %cst_97 = arith.constant dense<0xFF800000> : vector<8xf32>
    %289 = vector.multi_reduction <maximumf>, %288, %cst_97 [1] : vector<8x8xf32> to vector<8xf32>
    %290 = vector.shape_cast %289 : vector<8xf32> to vector<8x1xf32>
    %291 = vector.broadcast %290 : vector<8x1xf32> to vector<8x8xf32>
    %292 = arith.subf %288, %291 : vector<8x8xf32>
    %293 = math.exp %292 : vector<8x8xf32>
    %cst_98 = arith.constant dense<0.000000e+00> : vector<8xf32>
    %294 = vector.multi_reduction <add>, %293, %cst_98 [1] : vector<8x8xf32> to vector<8xf32>
    %295 = vector.shape_cast %294 : vector<8xf32> to vector<8x1xf32>
    %296 = tpu.reciprocal %295 {approx = true} : vector<8x1xf32> -> vector<8x1xf32>
    %297 = vector.broadcast %296 : vector<8x1xf32> to vector<8x8xf32>
    %298 = arith.mulf %293, %297 : vector<8x8xf32>
    %299 = arith.truncf %298 : vector<8x8xf32> to vector<8x8xbf16>
    %300 = arith.truncf %285 : vector<8x4xf32> to vector<8x4xbf16>
    %cst_99 = arith.constant dense<0.000000e+00> : vector<8x4xf32>
    %301 = tpu.matmul %299, %300, %cst_99 {dimension_numbers = #tpu.dot_dimension_numbers<[1], [0], [0], [1], [0, 0, 1, 1], [], []>} : vector<8x8xbf16>, vector<8x4xbf16>, vector<8x4xf32> -> vector<8x4xf32>
    %302 = vector.extract_strided_slice %261 {offsets = [0, 8], sizes = [8, 4], strides = [1, 1]} : vector<8x32xf32> to vector<8x4xf32>
    %303 = vector.extract_strided_slice %262 {offsets = [0, 8], sizes = [8, 4], strides = [1, 1]} : vector<8x32xf32> to vector<8x4xf32>
    %304 = vector.extract_strided_slice %263 {offsets = [0, 8], sizes = [8, 4], strides = [1, 1]} : vector<8x32xf32> to vector<8x4xf32>
    %305 = arith.truncf %302 : vector<8x4xf32> to vector<8x4xbf16>
    %306 = arith.truncf %303 : vector<8x4xf32> to vector<8x4xbf16>
    %cst_100 = arith.constant dense<0.000000e+00> : vector<8x8xf32>
    %307 = tpu.matmul %305, %306, %cst_100 {dimension_numbers = #tpu.dot_dimension_numbers<[1], [1], [0], [0], [0, 0, 1, 0], [], []>} : vector<8x4xbf16>, vector<8x4xbf16>, vector<8x8xf32> -> vector<8x8xf32>
    %cst_101 = arith.constant dense<0xFF800000> : vector<8xf32>
    %308 = vector.multi_reduction <maximumf>, %307, %cst_101 [1] : vector<8x8xf32> to vector<8xf32>
    %309 = vector.shape_cast %308 : vector<8xf32> to vector<8x1xf32>
    %310 = vector.broadcast %309 : vector<8x1xf32> to vector<8x8xf32>
    %311 = arith.subf %307, %310 : vector<8x8xf32>
    %312 = math.exp %311 : vector<8x8xf32>
    %cst_102 = arith.constant dense<0.000000e+00> : vector<8xf32>
    %313 = vector.multi_reduction <add>, %312, %cst_102 [1] : vector<8x8xf32> to vector<8xf32>
    %314 = vector.shape_cast %313 : vector<8xf32> to vector<8x1xf32>
    %315 = tpu.reciprocal %314 {approx = true} : vector<8x1xf32> -> vector<8x1xf32>
    %316 = vector.broadcast %315 : vector<8x1xf32> to vector<8x8xf32>
    %317 = arith.mulf %312, %316 : vector<8x8xf32>
    %318 = arith.truncf %317 : vector<8x8xf32> to vector<8x8xbf16>
    %319 = arith.truncf %304 : vector<8x4xf32> to vector<8x4xbf16>
    %cst_103 = arith.constant dense<0.000000e+00> : vector<8x4xf32>
    %320 = tpu.matmul %318, %319, %cst_103 {dimension_numbers = #tpu.dot_dimension_numbers<[1], [0], [0], [1], [0, 0, 1, 1], [], []>} : vector<8x8xbf16>, vector<8x4xbf16>, vector<8x4xf32> -> vector<8x4xf32>
    %321 = vector.extract_strided_slice %261 {offsets = [0, 12], sizes = [8, 4], strides = [1, 1]} : vector<8x32xf32> to vector<8x4xf32>
    %322 = vector.extract_strided_slice %262 {offsets = [0, 12], sizes = [8, 4], strides = [1, 1]} : vector<8x32xf32> to vector<8x4xf32>
    %323 = vector.extract_strided_slice %263 {offsets = [0, 12], sizes = [8, 4], strides = [1, 1]} : vector<8x32xf32> to vector<8x4xf32>
    %324 = arith.truncf %321 : vector<8x4xf32> to vector<8x4xbf16>
    %325 = arith.truncf %322 : vector<8x4xf32> to vector<8x4xbf16>
    %cst_104 = arith.constant dense<0.000000e+00> : vector<8x8xf32>
    %326 = tpu.matmul %324, %325, %cst_104 {dimension_numbers = #tpu.dot_dimension_numbers<[1], [1], [0], [0], [0, 0, 1, 0], [], []>} : vector<8x4xbf16>, vector<8x4xbf16>, vector<8x8xf32> -> vector<8x8xf32>
    %cst_105 = arith.constant dense<0xFF800000> : vector<8xf32>
    %327 = vector.multi_reduction <maximumf>, %326, %cst_105 [1] : vector<8x8xf32> to vector<8xf32>
    %328 = vector.shape_cast %327 : vector<8xf32> to vector<8x1xf32>
    %329 = vector.broadcast %328 : vector<8x1xf32> to vector<8x8xf32>
    %330 = arith.subf %326, %329 : vector<8x8xf32>
    %331 = math.exp %330 : vector<8x8xf32>
    %cst_106 = arith.constant dense<0.000000e+00> : vector<8xf32>
    %332 = vector.multi_reduction <add>, %331, %cst_106 [1] : vector<8x8xf32> to vector<8xf32>
    %333 = vector.shape_cast %332 : vector<8xf32> to vector<8x1xf32>
    %334 = tpu.reciprocal %333 {approx = true} : vector<8x1xf32> -> vector<8x1xf32>
    %335 = vector.broadcast %334 : vector<8x1xf32> to vector<8x8xf32>
    %336 = arith.mulf %331, %335 : vector<8x8xf32>
    %337 = arith.truncf %336 : vector<8x8xf32> to vector<8x8xbf16>
    %338 = arith.truncf %323 : vector<8x4xf32> to vector<8x4xbf16>
    %cst_107 = arith.constant dense<0.000000e+00> : vector<8x4xf32>
    %339 = tpu.matmul %337, %338, %cst_107 {dimension_numbers = #tpu.dot_dimension_numbers<[1], [0], [0], [1], [0, 0, 1, 1], [], []>} : vector<8x8xbf16>, vector<8x4xbf16>, vector<8x4xf32> -> vector<8x4xf32>
    %340 = vector.extract_strided_slice %261 {offsets = [0, 16], sizes = [8, 4], strides = [1, 1]} : vector<8x32xf32> to vector<8x4xf32>
    %341 = vector.extract_strided_slice %262 {offsets = [0, 16], sizes = [8, 4], strides = [1, 1]} : vector<8x32xf32> to vector<8x4xf32>
    %342 = vector.extract_strided_slice %263 {offsets = [0, 16], sizes = [8, 4], strides = [1, 1]} : vector<8x32xf32> to vector<8x4xf32>
    %343 = arith.truncf %340 : vector<8x4xf32> to vector<8x4xbf16>
    %344 = arith.truncf %341 : vector<8x4xf32> to vector<8x4xbf16>
    %cst_108 = arith.constant dense<0.000000e+00> : vector<8x8xf32>
    %345 = tpu.matmul %343, %344, %cst_108 {dimension_numbers = #tpu.dot_dimension_numbers<[1], [1], [0], [0], [0, 0, 1, 0], [], []>} : vector<8x4xbf16>, vector<8x4xbf16>, vector<8x8xf32> -> vector<8x8xf32>
    %cst_109 = arith.constant dense<0xFF800000> : vector<8xf32>
    %346 = vector.multi_reduction <maximumf>, %345, %cst_109 [1] : vector<8x8xf32> to vector<8xf32>
    %347 = vector.shape_cast %346 : vector<8xf32> to vector<8x1xf32>
    %348 = vector.broadcast %347 : vector<8x1xf32> to vector<8x8xf32>
    %349 = arith.subf %345, %348 : vector<8x8xf32>
    %350 = math.exp %349 : vector<8x8xf32>
    %cst_110 = arith.constant dense<0.000000e+00> : vector<8xf32>
    %351 = vector.multi_reduction <add>, %350, %cst_110 [1] : vector<8x8xf32> to vector<8xf32>
    %352 = vector.shape_cast %351 : vector<8xf32> to vector<8x1xf32>
    %353 = tpu.reciprocal %352 {approx = true} : vector<8x1xf32> -> vector<8x1xf32>
    %354 = vector.broadcast %353 : vector<8x1xf32> to vector<8x8xf32>
    %355 = arith.mulf %350, %354 : vector<8x8xf32>
    %356 = arith.truncf %355 : vector<8x8xf32> to vector<8x8xbf16>
    %357 = arith.truncf %342 : vector<8x4xf32> to vector<8x4xbf16>
    %cst_111 = arith.constant dense<0.000000e+00> : vector<8x4xf32>
    %358 = tpu.matmul %356, %357, %cst_111 {dimension_numbers = #tpu.dot_dimension_numbers<[1], [0], [0], [1], [0, 0, 1, 1], [], []>} : vector<8x8xbf16>, vector<8x4xbf16>, vector<8x4xf32> -> vector<8x4xf32>
    %359 = vector.extract_strided_slice %261 {offsets = [0, 20], sizes = [8, 4], strides = [1, 1]} : vector<8x32xf32> to vector<8x4xf32>
    %360 = vector.extract_strided_slice %262 {offsets = [0, 20], sizes = [8, 4], strides = [1, 1]} : vector<8x32xf32> to vector<8x4xf32>
    %361 = vector.extract_strided_slice %263 {offsets = [0, 20], sizes = [8, 4], strides = [1, 1]} : vector<8x32xf32> to vector<8x4xf32>
    %362 = arith.truncf %359 : vector<8x4xf32> to vector<8x4xbf16>
    %363 = arith.truncf %360 : vector<8x4xf32> to vector<8x4xbf16>
    %cst_112 = arith.constant dense<0.000000e+00> : vector<8x8xf32>
    %364 = tpu.matmul %362, %363, %cst_112 {dimension_numbers = #tpu.dot_dimension_numbers<[1], [1], [0], [0], [0, 0, 1, 0], [], []>} : vector<8x4xbf16>, vector<8x4xbf16>, vector<8x8xf32> -> vector<8x8xf32>
    %cst_113 = arith.constant dense<0xFF800000> : vector<8xf32>
    %365 = vector.multi_reduction <maximumf>, %364, %cst_113 [1] : vector<8x8xf32> to vector<8xf32>
    %366 = vector.shape_cast %365 : vector<8xf32> to vector<8x1xf32>
    %367 = vector.broadcast %366 : vector<8x1xf32> to vector<8x8xf32>
    %368 = arith.subf %364, %367 : vector<8x8xf32>
    %369 = math.exp %368 : vector<8x8xf32>
    %cst_114 = arith.constant dense<0.000000e+00> : vector<8xf32>
    %370 = vector.multi_reduction <add>, %369, %cst_114 [1] : vector<8x8xf32> to vector<8xf32>
    %371 = vector.shape_cast %370 : vector<8xf32> to vector<8x1xf32>
    %372 = tpu.reciprocal %371 {approx = true} : vector<8x1xf32> -> vector<8x1xf32>
    %373 = vector.broadcast %372 : vector<8x1xf32> to vector<8x8xf32>
    %374 = arith.mulf %369, %373 : vector<8x8xf32>
    %375 = arith.truncf %374 : vector<8x8xf32> to vector<8x8xbf16>
    %376 = arith.truncf %361 : vector<8x4xf32> to vector<8x4xbf16>
    %cst_115 = arith.constant dense<0.000000e+00> : vector<8x4xf32>
    %377 = tpu.matmul %375, %376, %cst_115 {dimension_numbers = #tpu.dot_dimension_numbers<[1], [0], [0], [1], [0, 0, 1, 1], [], []>} : vector<8x8xbf16>, vector<8x4xbf16>, vector<8x4xf32> -> vector<8x4xf32>
    %378 = vector.extract_strided_slice %261 {offsets = [0, 24], sizes = [8, 4], strides = [1, 1]} : vector<8x32xf32> to vector<8x4xf32>
    %379 = vector.extract_strided_slice %262 {offsets = [0, 24], sizes = [8, 4], strides = [1, 1]} : vector<8x32xf32> to vector<8x4xf32>
    %380 = vector.extract_strided_slice %263 {offsets = [0, 24], sizes = [8, 4], strides = [1, 1]} : vector<8x32xf32> to vector<8x4xf32>
    %381 = arith.truncf %378 : vector<8x4xf32> to vector<8x4xbf16>
    %382 = arith.truncf %379 : vector<8x4xf32> to vector<8x4xbf16>
    %cst_116 = arith.constant dense<0.000000e+00> : vector<8x8xf32>
    %383 = tpu.matmul %381, %382, %cst_116 {dimension_numbers = #tpu.dot_dimension_numbers<[1], [1], [0], [0], [0, 0, 1, 0], [], []>} : vector<8x4xbf16>, vector<8x4xbf16>, vector<8x8xf32> -> vector<8x8xf32>
    %cst_117 = arith.constant dense<0xFF800000> : vector<8xf32>
    %384 = vector.multi_reduction <maximumf>, %383, %cst_117 [1] : vector<8x8xf32> to vector<8xf32>
    %385 = vector.shape_cast %384 : vector<8xf32> to vector<8x1xf32>
    %386 = vector.broadcast %385 : vector<8x1xf32> to vector<8x8xf32>
    %387 = arith.subf %383, %386 : vector<8x8xf32>
    %388 = math.exp %387 : vector<8x8xf32>
    %cst_118 = arith.constant dense<0.000000e+00> : vector<8xf32>
    %389 = vector.multi_reduction <add>, %388, %cst_118 [1] : vector<8x8xf32> to vector<8xf32>
    %390 = vector.shape_cast %389 : vector<8xf32> to vector<8x1xf32>
    %391 = tpu.reciprocal %390 {approx = true} : vector<8x1xf32> -> vector<8x1xf32>
    %392 = vector.broadcast %391 : vector<8x1xf32> to vector<8x8xf32>
    %393 = arith.mulf %388, %392 : vector<8x8xf32>
    %394 = arith.truncf %393 : vector<8x8xf32> to vector<8x8xbf16>
    %395 = arith.truncf %380 : vector<8x4xf32> to vector<8x4xbf16>
    %cst_119 = arith.constant dense<0.000000e+00> : vector<8x4xf32>
    %396 = tpu.matmul %394, %395, %cst_119 {dimension_numbers = #tpu.dot_dimension_numbers<[1], [0], [0], [1], [0, 0, 1, 1], [], []>} : vector<8x8xbf16>, vector<8x4xbf16>, vector<8x4xf32> -> vector<8x4xf32>
    %397 = vector.extract_strided_slice %261 {offsets = [0, 28], sizes = [8, 4], strides = [1, 1]} : vector<8x32xf32> to vector<8x4xf32>
    %398 = vector.extract_strided_slice %262 {offsets = [0, 28], sizes = [8, 4], strides = [1, 1]} : vector<8x32xf32> to vector<8x4xf32>
    %399 = vector.extract_strided_slice %263 {offsets = [0, 28], sizes = [8, 4], strides = [1, 1]} : vector<8x32xf32> to vector<8x4xf32>
    %400 = arith.truncf %397 : vector<8x4xf32> to vector<8x4xbf16>
    %401 = arith.truncf %398 : vector<8x4xf32> to vector<8x4xbf16>
    %cst_120 = arith.constant dense<0.000000e+00> : vector<8x8xf32>
    %402 = tpu.matmul %400, %401, %cst_120 {dimension_numbers = #tpu.dot_dimension_numbers<[1], [1], [0], [0], [0, 0, 1, 0], [], []>} : vector<8x4xbf16>, vector<8x4xbf16>, vector<8x8xf32> -> vector<8x8xf32>
    %cst_121 = arith.constant dense<0xFF800000> : vector<8xf32>
    %403 = vector.multi_reduction <maximumf>, %402, %cst_121 [1] : vector<8x8xf32> to vector<8xf32>
    %404 = vector.shape_cast %403 : vector<8xf32> to vector<8x1xf32>
    %405 = vector.broadcast %404 : vector<8x1xf32> to vector<8x8xf32>
    %406 = arith.subf %402, %405 : vector<8x8xf32>
    %407 = math.exp %406 : vector<8x8xf32>
    %cst_122 = arith.constant dense<0.000000e+00> : vector<8xf32>
    %408 = vector.multi_reduction <add>, %407, %cst_122 [1] : vector<8x8xf32> to vector<8xf32>
    %409 = vector.shape_cast %408 : vector<8xf32> to vector<8x1xf32>
    %410 = tpu.reciprocal %409 {approx = true} : vector<8x1xf32> -> vector<8x1xf32>
    %411 = vector.broadcast %410 : vector<8x1xf32> to vector<8x8xf32>
    %412 = arith.mulf %407, %411 : vector<8x8xf32>
    %413 = arith.truncf %412 : vector<8x8xf32> to vector<8x8xbf16>
    %414 = arith.truncf %399 : vector<8x4xf32> to vector<8x4xbf16>
    %cst_123 = arith.constant dense<0.000000e+00> : vector<8x4xf32>
    %415 = tpu.matmul %413, %414, %cst_123 {dimension_numbers = #tpu.dot_dimension_numbers<[1], [0], [0], [1], [0, 0, 1, 1], [], []>} : vector<8x8xbf16>, vector<8x4xbf16>, vector<8x4xf32> -> vector<8x4xf32>
    %416 = tpu.concatenate %282, %301, %320, %339, %358, %377, %396, %415 in 1 : vector<8x4xf32>, vector<8x4xf32>, vector<8x4xf32>, vector<8x4xf32>, vector<8x4xf32>, vector<8x4xf32>, vector<8x4xf32>, vector<8x4xf32> -> vector<8x32xf32>
    %c1_124 = arith.constant 1 : index
    %c0_125 = arith.constant 0 : index
    %c0_126 = arith.constant 0 : index
    %417 = vector.load %arg5[%c1_124, %c0_125, %c0_126] : memref<2x32x32xf32, #tpu.memory_space<vmem>>, vector<1x32x32xf32>
    %418 = vector.shape_cast %417 : vector<1x32x32xf32> to vector<32x32xf32>
    %c1_127 = arith.constant 1 : index
    %c0_128 = arith.constant 0 : index
    %c0_129 = arith.constant 0 : index
    %419 = vector.load %arg6[%c1_127, %c0_128, %c0_129] : memref<2x1x32xf32, #tpu.memory_space<vmem>>, vector<1x1x32xf32>
    %420 = vector.shape_cast %419 : vector<1x1x32xf32> to vector<1x32xf32>
    %421 = arith.truncf %416 : vector<8x32xf32> to vector<8x32xbf16>
    %422 = arith.truncf %418 : vector<32x32xf32> to vector<32x32xbf16>
    %cst_130 = arith.constant dense<0.000000e+00> : vector<8x32xf32>
    %423 = tpu.matmul %421, %422, %cst_130 {dimension_numbers = #tpu.dot_dimension_numbers<[1], [0], [0], [1], [0, 0, 1, 1], [], []>} : vector<8x32xbf16>, vector<32x32xbf16>, vector<8x32xf32> -> vector<8x32xf32>
    %424 = vector.broadcast %420 : vector<1x32xf32> to vector<8x32xf32>
    %425 = arith.addf %423, %424 : vector<8x32xf32>
    %426 = arith.addf %251, %425 : vector<8x32xf32>
    %c1_131 = arith.constant 1 : index
    %c0_132 = arith.constant 0 : index
    %c0_133 = arith.constant 0 : index
    %427 = vector.load %arg11[%c1_131, %c0_132, %c0_133] : memref<2x1x32xf32, #tpu.memory_space<vmem>>, vector<1x1x32xf32>
    %428 = vector.shape_cast %427 : vector<1x1x32xf32> to vector<1x32xf32>
    %c1_134 = arith.constant 1 : index
    %c0_135 = arith.constant 0 : index
    %c0_136 = arith.constant 0 : index
    %429 = vector.load %arg12[%c1_134, %c0_135, %c0_136] : memref<2x1x32xf32, #tpu.memory_space<vmem>>, vector<1x1x32xf32>
    %430 = vector.shape_cast %429 : vector<1x1x32xf32> to vector<1x32xf32>
    %cst_137 = arith.constant dense<0.000000e+00> : vector<8xf32>
    %431 = vector.multi_reduction <add>, %426, %cst_137 [1] : vector<8x32xf32> to vector<8xf32>
    %432 = vector.shape_cast %431 : vector<8xf32> to vector<8x1xf32>
    %cst_138 = arith.constant 3.200000e+01 : f32
    %433 = vector.broadcast %cst_138 : f32 to vector<8x1xf32>
    %434 = arith.divf %432, %433 : vector<8x1xf32>
    %435 = vector.broadcast %434 : vector<8x1xf32> to vector<8x32xf32>
    %436 = arith.subf %426, %435 : vector<8x32xf32>
    %437 = arith.mulf %436, %436 : vector<8x32xf32>
    %cst_139 = arith.constant dense<0.000000e+00> : vector<8xf32>
    %438 = vector.multi_reduction <add>, %437, %cst_139 [1] : vector<8x32xf32> to vector<8xf32>
    %439 = vector.shape_cast %438 : vector<8xf32> to vector<8x1xf32>
    %cst_140 = arith.constant 3.200000e+01 : f32
    %440 = vector.broadcast %cst_140 : f32 to vector<8x1xf32>
    %441 = arith.divf %439, %440 : vector<8x1xf32>
    %442 = vector.broadcast %434 : vector<8x1xf32> to vector<8x32xf32>
    %443 = arith.subf %426, %442 : vector<8x32xf32>
    %cst_141 = arith.constant 9.99999974E-6 : f32
    %444 = vector.broadcast %cst_141 : f32 to vector<8x1xf32>
    %445 = arith.addf %441, %444 : vector<8x1xf32>
    %446 = math.rsqrt %445 : vector<8x1xf32>
    %447 = vector.broadcast %446 : vector<8x1xf32> to vector<8x32xf32>
    %448 = arith.mulf %443, %447 : vector<8x32xf32>
    %449 = vector.broadcast %428 : vector<1x32xf32> to vector<8x32xf32>
    %450 = arith.mulf %448, %449 : vector<8x32xf32>
    %451 = vector.broadcast %430 : vector<1x32xf32> to vector<8x32xf32>
    %452 = arith.addf %450, %451 : vector<8x32xf32>
    %c1_142 = arith.constant 1 : index
    %c0_143 = arith.constant 0 : index
    %c0_144 = arith.constant 0 : index
    %453 = vector.load %arg7[%c1_142, %c0_143, %c0_144] : memref<2x32x128xf32, #tpu.memory_space<vmem>>, vector<1x32x128xf32>
    %454 = vector.shape_cast %453 : vector<1x32x128xf32> to vector<32x128xf32>
    %c1_145 = arith.constant 1 : index
    %c0_146 = arith.constant 0 : index
    %c0_147 = arith.constant 0 : index
    %455 = vector.load %arg8[%c1_145, %c0_146, %c0_147] : memref<2x1x128xf32, #tpu.memory_space<vmem>>, vector<1x1x128xf32>
    %456 = vector.shape_cast %455 : vector<1x1x128xf32> to vector<1x128xf32>
    %457 = arith.truncf %452 : vector<8x32xf32> to vector<8x32xbf16>
    %458 = arith.truncf %454 : vector<32x128xf32> to vector<32x128xbf16>
    %cst_148 = arith.constant dense<0.000000e+00> : vector<8x128xf32>
    %459 = tpu.matmul %457, %458, %cst_148 {dimension_numbers = #tpu.dot_dimension_numbers<[1], [0], [0], [1], [0, 0, 1, 1], [], []>} : vector<8x32xbf16>, vector<32x128xbf16>, vector<8x128xf32> -> vector<8x128xf32>
    %460 = vector.broadcast %456 : vector<1x128xf32> to vector<8x128xf32>
    %461 = arith.addf %459, %460 : vector<8x128xf32>
    %cst_149 = arith.constant 0.000000e+00 : f32
    %462 = vector.broadcast %cst_149 : f32 to vector<8x128xf32>
    %463 = arith.maximumf %461, %462 : vector<8x128xf32>
    %c1_150 = arith.constant 1 : index
    %c0_151 = arith.constant 0 : index
    %c0_152 = arith.constant 0 : index
    %464 = vector.load %arg9[%c1_150, %c0_151, %c0_152] : memref<2x128x32xf32, #tpu.memory_space<vmem>>, vector<1x128x32xf32>
    %465 = vector.shape_cast %464 : vector<1x128x32xf32> to vector<128x32xf32>
    %c1_153 = arith.constant 1 : index
    %c0_154 = arith.constant 0 : index
    %c0_155 = arith.constant 0 : index
    %466 = vector.load %arg10[%c1_153, %c0_154, %c0_155] : memref<2x1x32xf32, #tpu.memory_space<vmem>>, vector<1x1x32xf32>
    %467 = vector.shape_cast %466 : vector<1x1x32xf32> to vector<1x32xf32>
    %468 = arith.truncf %463 : vector<8x128xf32> to vector<8x128xbf16>
    %469 = arith.truncf %465 : vector<128x32xf32> to vector<128x32xbf16>
    %cst_156 = arith.constant dense<0.000000e+00> : vector<8x32xf32>
    %470 = tpu.matmul %468, %469, %cst_156 {dimension_numbers = #tpu.dot_dimension_numbers<[1], [0], [0], [1], [0, 0, 1, 1], [], []>} : vector<8x128xbf16>, vector<128x32xbf16>, vector<8x32xf32> -> vector<8x32xf32>
    %471 = vector.broadcast %467 : vector<1x32xf32> to vector<8x32xf32>
    %472 = arith.addf %470, %471 : vector<8x32xf32>
    %473 = arith.addf %452, %472 : vector<8x32xf32>
    %c1_157 = arith.constant 1 : index
    %c0_158 = arith.constant 0 : index
    %c0_159 = arith.constant 0 : index
    %474 = vector.load %arg13[%c1_157, %c0_158, %c0_159] : memref<2x1x32xf32, #tpu.memory_space<vmem>>, vector<1x1x32xf32>
    %475 = vector.shape_cast %474 : vector<1x1x32xf32> to vector<1x32xf32>
    %c1_160 = arith.constant 1 : index
    %c0_161 = arith.constant 0 : index
    %c0_162 = arith.constant 0 : index
    %476 = vector.load %arg14[%c1_160, %c0_161, %c0_162] : memref<2x1x32xf32, #tpu.memory_space<vmem>>, vector<1x1x32xf32>
    %477 = vector.shape_cast %476 : vector<1x1x32xf32> to vector<1x32xf32>
    %cst_163 = arith.constant dense<0.000000e+00> : vector<8xf32>
    %478 = vector.multi_reduction <add>, %473, %cst_163 [1] : vector<8x32xf32> to vector<8xf32>
    %479 = vector.shape_cast %478 : vector<8xf32> to vector<8x1xf32>
    %cst_164 = arith.constant 3.200000e+01 : f32
    %480 = vector.broadcast %cst_164 : f32 to vector<8x1xf32>
    %481 = arith.divf %479, %480 : vector<8x1xf32>
    %482 = vector.broadcast %481 : vector<8x1xf32> to vector<8x32xf32>
    %483 = arith.subf %473, %482 : vector<8x32xf32>
    %484 = arith.mulf %483, %483 : vector<8x32xf32>
    %cst_165 = arith.constant dense<0.000000e+00> : vector<8xf32>
    %485 = vector.multi_reduction <add>, %484, %cst_165 [1] : vector<8x32xf32> to vector<8xf32>
    %486 = vector.shape_cast %485 : vector<8xf32> to vector<8x1xf32>
    %cst_166 = arith.constant 3.200000e+01 : f32
    %487 = vector.broadcast %cst_166 : f32 to vector<8x1xf32>
    %488 = arith.divf %486, %487 : vector<8x1xf32>
    %489 = vector.broadcast %481 : vector<8x1xf32> to vector<8x32xf32>
    %490 = arith.subf %473, %489 : vector<8x32xf32>
    %cst_167 = arith.constant 9.99999974E-6 : f32
    %491 = vector.broadcast %cst_167 : f32 to vector<8x1xf32>
    %492 = arith.addf %488, %491 : vector<8x1xf32>
    %493 = math.rsqrt %492 : vector<8x1xf32>
    %494 = vector.broadcast %493 : vector<8x1xf32> to vector<8x32xf32>
    %495 = arith.mulf %490, %494 : vector<8x32xf32>
    %496 = vector.broadcast %475 : vector<1x32xf32> to vector<8x32xf32>
    %497 = arith.mulf %495, %496 : vector<8x32xf32>
    %498 = vector.broadcast %477 : vector<1x32xf32> to vector<8x32xf32>
    %499 = arith.addf %497, %498 : vector<8x32xf32>
    %500 = vector.extract_strided_slice %499 {offsets = [7, 0], sizes = [1, 32], strides = [1, 1]} : vector<8x32xf32> to vector<1x32xf32>
    %c0_168 = arith.constant 0 : index
    %c0_169 = arith.constant 0 : index
    %501 = vector.load %arg15[%c0_168, %c0_169] : memref<32x4xf32, #tpu.memory_space<vmem>>, vector<32x4xf32>
    %c0_170 = arith.constant 0 : index
    %c0_171 = arith.constant 0 : index
    %502 = vector.load %arg16[%c0_170, %c0_171] : memref<1x4xf32, #tpu.memory_space<vmem>>, vector<1x4xf32>
    %503 = arith.truncf %500 : vector<1x32xf32> to vector<1x32xbf16>
    %504 = arith.truncf %501 : vector<32x4xf32> to vector<32x4xbf16>
    %cst_172 = arith.constant dense<0.000000e+00> : vector<1x4xf32>
    %505 = tpu.matmul %503, %504, %cst_172 {dimension_numbers = #tpu.dot_dimension_numbers<[1], [0], [0], [1], [0, 0, 1, 1], [], []>} : vector<1x32xbf16>, vector<32x4xbf16>, vector<1x4xf32> -> vector<1x4xf32>
    %506 = arith.addf %505, %502 : vector<1x4xf32>
    %c0_173 = arith.constant 0 : index
    %c0_174 = arith.constant 0 : index
    %c0_175 = arith.constant 0 : index
    %507 = vector.load %arg17[%c0_173, %c0_174, %c0_175] : memref<1x1x4xf32, #tpu.memory_space<vmem>>, vector<1x1x4xf32>
    %508 = vector.shape_cast %507 : vector<1x1x4xf32> to vector<1x4xf32>
    %509 = vector.shape_cast %506 : vector<1x4xf32> to vector<1x1x4xf32>
    tpu.vector_store %arg17[%c0_173, %c0_174, %c0_175], %509 {strides = array<i32>} : memref<1x1x4xf32, #tpu.memory_space<vmem>>, vector<1x1x4xf32>,
    return
  }
  func.func @transform_0(%arg0: i32) -> (i32, i32, i32) {
    %c0_i32 = arith.constant 0 : i32
    %c0_i32_0 = arith.constant 0 : i32
    %c0_i32_1 = arith.constant 0 : i32
    return %arg0, %c0_i32, %c0_i32_0 : i32, i32, i32
  }
  func.func @transform_1(%arg0: i32) -> (i32, i32) {
    %c0_i32 = arith.constant 0 : i32
    %c0_i32_0 = arith.constant 0 : i32
    %c0_i32_1 = arith.constant 0 : i32
    return %c0_i32, %c0_i32_0 : i32, i32
  }
  func.func @transform_2(%arg0: i32) -> (i32, i32, i32) {
    %c0_i32 = arith.constant 0 : i32
    %c0_i32_0 = arith.constant 0 : i32
    %c0_i32_1 = arith.constant 0 : i32
    %c0_i32_2 = arith.constant 0 : i32
    return %c0_i32, %c0_i32_0, %c0_i32_1 : i32, i32, i32
  }
  func.func @transform_3(%arg0: i32) -> (i32, i32, i32) {
    %c0_i32 = arith.constant 0 : i32
    %c0_i32_0 = arith.constant 0 : i32
    %c0_i32_1 = arith.constant 0 : i32
    %c0_i32_2 = arith.constant 0 : i32
    return %c0_i32, %c0_i32_0, %c0_i32_1 : i32, i32, i32
  }
  func.func @transform_4(%arg0: i32) -> (i32, i32, i32) {
    %c0_i32 = arith.constant 0 : i32
    %c0_i32_0 = arith.constant 0 : i32
    %c0_i32_1 = arith.constant 0 : i32
    %c0_i32_2 = arith.constant 0 : i32
    return %c0_i32, %c0_i32_0, %c0_i32_1 : i32, i32, i32
  }
  func.func @transform_5(%arg0: i32) -> (i32, i32, i32) {
    %c0_i32 = arith.constant 0 : i32
    %c0_i32_0 = arith.constant 0 : i32
    %c0_i32_1 = arith.constant 0 : i32
    %c0_i32_2 = arith.constant 0 : i32
    return %c0_i32, %c0_i32_0, %c0_i32_1 : i32, i32, i32
  }
  func.func @transform_6(%arg0: i32) -> (i32, i32, i32) {
    %c0_i32 = arith.constant 0 : i32
    %c0_i32_0 = arith.constant 0 : i32
    %c0_i32_1 = arith.constant 0 : i32
    %c0_i32_2 = arith.constant 0 : i32
    return %c0_i32, %c0_i32_0, %c0_i32_1 : i32, i32, i32
  }
  func.func @transform_7(%arg0: i32) -> (i32, i32, i32) {
    %c0_i32 = arith.constant 0 : i32
    %c0_i32_0 = arith.constant 0 : i32
    %c0_i32_1 = arith.constant 0 : i32
    %c0_i32_2 = arith.constant 0 : i32
    return %c0_i32, %c0_i32_0, %c0_i32_1 : i32, i32, i32
  }
  func.func @transform_8(%arg0: i32) -> (i32, i32, i32) {
    %c0_i32 = arith.constant 0 : i32
    %c0_i32_0 = arith.constant 0 : i32
    %c0_i32_1 = arith.constant 0 : i32
    %c0_i32_2 = arith.constant 0 : i32
    return %c0_i32, %c0_i32_0, %c0_i32_1 : i32, i32, i32
  }
  func.func @transform_9(%arg0: i32) -> (i32, i32, i32) {
    %c0_i32 = arith.constant 0 : i32
    %c0_i32_0 = arith.constant 0 : i32
    %c0_i32_1 = arith.constant 0 : i32
    %c0_i32_2 = arith.constant 0 : i32
    return %c0_i32, %c0_i32_0, %c0_i32_1 : i32, i32, i32
  }
  func.func @transform_10(%arg0: i32) -> (i32, i32, i32) {
    %c0_i32 = arith.constant 0 : i32
    %c0_i32_0 = arith.constant 0 : i32
    %c0_i32_1 = arith.constant 0 : i32
    %c0_i32_2 = arith.constant 0 : i32
    return %c0_i32, %c0_i32_0, %c0_i32_1 : i32, i32, i32
  }
  func.func @transform_11(%arg0: i32) -> (i32, i32, i32) {
    %c0_i32 = arith.constant 0 : i32
    %c0_i32_0 = arith.constant 0 : i32
    %c0_i32_1 = arith.constant 0 : i32
    %c0_i32_2 = arith.constant 0 : i32
    return %c0_i32, %c0_i32_0, %c0_i32_1 : i32, i32, i32
  }
  func.func @transform_12(%arg0: i32) -> (i32, i32, i32) {
    %c0_i32 = arith.constant 0 : i32
    %c0_i32_0 = arith.constant 0 : i32
    %c0_i32_1 = arith.constant 0 : i32
    %c0_i32_2 = arith.constant 0 : i32
    return %c0_i32, %c0_i32_0, %c0_i32_1 : i32, i32, i32
  }
  func.func @transform_13(%arg0: i32) -> (i32, i32, i32) {
    %c0_i32 = arith.constant 0 : i32
    %c0_i32_0 = arith.constant 0 : i32
    %c0_i32_1 = arith.constant 0 : i32
    %c0_i32_2 = arith.constant 0 : i32
    return %c0_i32, %c0_i32_0, %c0_i32_1 : i32, i32, i32
  }
  func.func @transform_14(%arg0: i32) -> (i32, i32) {
    %c0_i32 = arith.constant 0 : i32
    %c0_i32_0 = arith.constant 0 : i32
    %c0_i32_1 = arith.constant 0 : i32
    return %c0_i32, %c0_i32_0 : i32, i32
  }
  func.func @transform_15(%arg0: i32) -> (i32, i32) {
    %c0_i32 = arith.constant 0 : i32
    %c0_i32_0 = arith.constant 0 : i32
    %c0_i32_1 = arith.constant 0 : i32
    return %c0_i32, %c0_i32_0 : i32, i32
  }
  func.func @transform_16(%arg0: i32) -> (i32, i32, i32) {
    %c0_i32 = arith.constant 0 : i32
    %c0_i32_0 = arith.constant 0 : i32
    %c0_i32_1 = arith.constant 0 : i32
    return %arg0, %c0_i32, %c0_i32_0 : i32, i32, i32
  }
}

</mosaic_0001>

<llo_original>
// kernel: transformer_classifier_forward.1
$region0: #{transformer_classifier_forward.1}
  #allocation0 [shape = 'u32[]', space=smem, size = 0x4, offset = 0x4, fixed_abs, tag = 'smem constant byte address 0x4 - core index']
  #allocation1 [shape = 'u32[144,128]{1,0:T(1,128)}', space=vmem, size = 0x12000, scoped, tag = 'internal scratch']
  %s0 = inlined_call_operand.vmem [shape: f32[2,8,32], index: 0, kind: input, shape index: {}]
  %s1 = inlined_call_operand.vmem [shape: f32[8,32], index: 1, kind: input, shape index: {}]
  %s2 = inlined_call_operand.vmem [shape: f32[2,32,96], index: 2, kind: input, shape index: {}]
  %s3 = inlined_call_operand.vmem [shape: f32[2,1,96], index: 3, kind: input, shape index: {}]
  %s4 = inlined_call_operand.vmem [shape: f32[2,32,32], index: 4, kind: input, shape index: {}]
  %s5 = inlined_call_operand.vmem [shape: f32[2,1,32], index: 5, kind: input, shape index: {}]
  %s6 = inlined_call_operand.vmem [shape: f32[2,32,128], index: 6, kind: input, shape index: {}]
  %s7 = inlined_call_operand.vmem [shape: f32[2,1,128], index: 7, kind: input, shape index: {}]
  %s8 = inlined_call_operand.vmem [shape: f32[2,128,32], index: 8, kind: input, shape index: {}]
  %s9 = inlined_call_operand.vmem [shape: f32[2,1,32], index: 9, kind: input, shape index: {}]
  %s10 = inlined_call_operand.vmem [shape: f32[2,1,32], index: 10, kind: input, shape index: {}]
  %s11 = inlined_call_operand.vmem [shape: f32[2,1,32], index: 11, kind: input, shape index: {}]
  %s12 = inlined_call_operand.vmem [shape: f32[2,1,32], index: 12, kind: input, shape index: {}]
  %s13 = inlined_call_operand.vmem [shape: f32[2,1,32], index: 13, kind: input, shape index: {}]
  %s14 = inlined_call_operand.vmem [shape: f32[32,4], index: 14, kind: input, shape index: {}]
  %s15 = inlined_call_operand.vmem [shape: f32[1,4], index: 15, kind: input, shape index: {}]
  %s16 = inlined_call_operand.hbm [shape: f32[2,1,4], index: 16, kind: output, shape index: {}]
  %s17 = sld [smem:[#allocation0]]
  $region97: #{transformer_classifier_forward.1} parent=0
    _
  %s19 = ssub.s32 1, %s17
  %s20 = scalar_select 0, %s19, %s17
  $region1: #{transformer_classifier_forward.1} parent=0
    #allocation2 [shape = 'u8[1024]{0}', space=vmem, size = 0x400, scoped, tag = 'output window, operand 0']
    #allocation3 [shape = 's32[2]{0}', space=sflag, size = 0x8, scoped, tag = 'scoped memory for transformer_classifier_forward.1']
    %21 = vsyncpa [#allocation3], 0
    %s22 = scalar_lea.sflag [#allocation3], 1
    %23 = vsyncpa %s22, 0
    loop: start=0, step=1, limit=4
    $region2: #{transformer_classifier_forward.1} parent=1 // loop_pre_header
      _
    $region3: #{transformer_classifier_forward.1} parent=1 // loop_header
      %s25 = sphi 0, %s29
      %p26 = scmp.ge.s32.totalorder %s25, 4
      %s35 = sphi 0, %s37
      %s38 = sphi 0, %s35
      %s39 = sphi 0, %s38
      %s55 = sphi 0, %s39
      %s59 = sphi 0, %s59
      %s61 = sphi 0, %s59
      %s62 = sphi 0, %s61
      %s76 = sphi 0, %s62
      %s80 = sphi 0, %s80
      %s82 = sphi 0, %s80
      %s83 = sphi 0, %s82
      %s97 = sphi 0, %s83
      %s101 = sphi 0, %s101
      %s103 = sphi 0, %s101
      %s104 = sphi 0, %s103
      %s118 = sphi 0, %s104
      %s122 = sphi 0, %s122
      %s124 = sphi 0, %s122
      %s125 = sphi 0, %s124
      %s139 = sphi 0, %s125
      %s143 = sphi 0, %s143
      %s145 = sphi 0, %s143
      %s146 = sphi 0, %s145
      %s160 = sphi 0, %s146
      %s164 = sphi 0, %s164
      %s166 = sphi 0, %s164
      %s167 = sphi 0, %s166
      %s181 = sphi 0, %s167
      %s185 = sphi 0, %s185
      %s187 = sphi 0, %s185
      %s188 = sphi 0, %s187
      %s202 = sphi 0, %s188
      %s206 = sphi 0, %s206
      %s208 = sphi 0, %s206
      %s209 = sphi 0, %s208
      %s223 = sphi 0, %s209
      %s227 = sphi 0, %s227
      %s229 = sphi 0, %s227
      %s230 = sphi 0, %s229
      %s244 = sphi 0, %s230
      %s248 = sphi 0, %s248
      %s250 = sphi 0, %s248
      %s251 = sphi 0, %s250
      %s265 = sphi 0, %s251
      %s269 = sphi 0, %s269
      %s271 = sphi 0, %s269
      %s272 = sphi 0, %s271
      %s286 = sphi 0, %s272
      %s290 = sphi 0, %s290
      %s292 = sphi 0, %s290
      %s293 = sphi 0, %s292
      %s307 = sphi 0, %s293
      %s311 = sphi 0, %s311
      %s313 = sphi 0, %s311
      %s314 = sphi 0, %s313
      %s328 = sphi 0, %s314
      %s332 = sphi 0, %s332
      %s334 = sphi 0, %s332
      %s335 = sphi 0, %s334
      %s349 = sphi 0, %s335
      %s353 = sphi 0, %s353
      %s355 = sphi 0, %s353
      %s356 = sphi 0, %s355
      %s370 = sphi 0, %s356
      %s376 = sphi 0, %s378
      %s379 = sphi 0, %s376
      %s380 = sphi 0, %s379
      %s396 = sphi 0, %s380
    $region4: #{transformer_classifier_forward.1} parent=1 // loop_header_branch
      %28 = sbr.rel (%p26) target = $region8
    $region5: #{transformer_classifier_forward.1} parent=1 // loop_body
      %s30 = ssub.s32 %s25, 1
      %s31 = ssub.s32 %s25, 2
      %s32 = sadd.s32 %s25, 1
      %s33 = ssub.s32 %s25, %s32
      %p34 = scmp.eq.s32.totalorder %s33, 0
      %s36 = sadd.s32 %s35, 1
      %s37 = scalar_select %p34, %s35, %s36
      %p40 = pneg %p34
      %p41 = scmp.eq.s32.totalorder %s25, 1
      %p42 = por %p40, %p41
      %p43 = scmp.ne.s32.totalorder %s35, %s38
      %p44 = scmp.eq.s32.totalorder %s25, 0
      %p45 = por %p43, %p44
      %p46 = scmp.ne.s32.totalorder %s35, %s38
      %p47 = scmp.eq.s32.totalorder %s30, 1
      %p48 = por %p46, %p47
      %p49 = scmp.ne.s32.totalorder %s38, %s39
      %p50 = scmp.eq.s32.totalorder %s30, 0
      %p51 = por %p49, %p50
      %p52 = scmp.ne.s32.totalorder %s38, %s39
      %p53 = scmp.eq.s32.totalorder %s31, 1
      %p54 = por %p52, %p53
      %p56 = scmp.ne.s32.totalorder %s39, %s55
      %p57 = scmp.eq.s32.totalorder %s31, 0
      %p58 = por %p56, %p57
      %s60 = sadd.s32 %s59, 1
      %p63 = scmp.eq.s32.totalorder %s25, 1
      %p64 = scmp.ne.s32.totalorder %s59, %s61
      %p65 = scmp.eq.s32.totalorder %s25, 0
      %p66 = por %p64, %p65
      %p67 = scmp.ne.s32.totalorder %s59, %s61
      %p68 = scmp.eq.s32.totalorder %s30, 1
      %p69 = por %p67, %p68
      %p70 = scmp.ne.s32.totalorder %s61, %s62
      %p71 = scmp.eq.s32.totalorder %s30, 0
      %p72 = por %p70, %p71
      %p73 = scmp.ne.s32.totalorder %s61, %s62
      %p74 = scmp.eq.s32.totalorder %s31, 1
      %p75 = por %p73, %p74
      %p77 = scmp.ne.s32.totalorder %s62, %s76
      %p78 = scmp.eq.s32.totalorder %s31, 0
      %p79 = por %p77, %p78
      %s81 = sadd.s32 %s80, 1
      %p84 = scmp.eq.s32.totalorder %s25, 1
      %p85 = scmp.ne.s32.totalorder %s80, %s82
      %p86 = scmp.eq.s32.totalorder %s25, 0
      %p87 = por %p85, %p86
      %p88 = scmp.ne.s32.totalorder %s80, %s82
      %p89 = scmp.eq.s32.totalorder %s30, 1
      %p90 = por %p88, %p89
      %p91 = scmp.ne.s32.totalorder %s82, %s83
      %p92 = scmp.eq.s32.totalorder %s30, 0
      %p93 = por %p91, %p92
      %p94 = scmp.ne.s32.totalorder %s82, %s83
      %p95 = scmp.eq.s32.totalorder %s31, 1
      %p96 = por %p94, %p95
      %p98 = scmp.ne.s32.totalorder %s83, %s97
      %p99 = scmp.eq.s32.totalorder %s31, 0
      %p100 = por %p98, %p99
      %s102 = sadd.s32 %s101, 1
      %p105 = scmp.eq.s32.totalorder %s25, 1
      %p106 = scmp.ne.s32.totalorder %s101, %s103
      %p107 = scmp.eq.s32.totalorder %s25, 0
      %p108 = por %p106, %p107
      %p109 = scmp.ne.s32.totalorder %s101, %s103
      %p110 = scmp.eq.s32.totalorder %s30, 1
      %p111 = por %p109, %p110
      %p112 = scmp.ne.s32.totalorder %s103, %s104
      %p113 = scmp.eq.s32.totalorder %s30, 0
      %p114 = por %p112, %p113
      %p115 = scmp.ne.s32.totalorder %s103, %s104
      %p116 = scmp.eq.s32.totalorder %s31, 1
      %p117 = por %p115, %p116
      %p119 = scmp.ne.s32.totalorder %s104, %s118
      %p120 = scmp.eq.s32.totalorder %s31, 0
      %p121 = por %p119, %p120
      %s123 = sadd.s32 %s122, 1
      %p126 = scmp.eq.s32.totalorder %s25, 1
      %p127 = scmp.ne.s32.totalorder %s122, %s124
      %p128 = scmp.eq.s32.totalorder %s25, 0
      %p129 = por %p127, %p128
      %p130 = scmp.ne.s32.totalorder %s122, %s124
      %p131 = scmp.eq.s32.totalorder %s30, 1
      %p132 = por %p130, %p131
      %p133 = scmp.ne.s32.totalorder %s124, %s125
      %p134 = scmp.eq.s32.totalorder %s30, 0
      %p135 = por %p133, %p134
      %p136 = scmp.ne.s32.totalorder %s124, %s125
      %p137 = scmp.eq.s32.totalorder %s31, 1
      %p138 = por %p136, %p137
      %p140 = scmp.ne.s32.totalorder %s125, %s139
      %p141 = scmp.eq.s32.totalorder %s31, 0
      %p142 = por %p140, %p141
      %s144 = sadd.s32 %s143, 1
      %p147 = scmp.eq.s32.totalorder %s25, 1
      %p148 = scmp.ne.s32.totalorder %s143, %s145
      %p149 = scmp.eq.s32.totalorder %s25, 0
      %p150 = por %p148, %p149
      %p151 = scmp.ne.s32.totalorder %s143, %s145
      %p152 = scmp.eq.s32.totalorder %s30, 1
      %p153 = por %p151, %p152
      %p154 = scmp.ne.s32.totalorder %s145, %s146
      %p155 = scmp.eq.s32.totalorder %s30, 0
      %p156 = por %p154, %p155
      %p157 = scmp.ne.s32.totalorder %s145, %s146
      %p158 = scmp.eq.s32.totalorder %s31, 1
      %p159 = por %p157, %p158
      %p161 = scmp.ne.s32.totalorder %s146, %s160
      %p162 = scmp.eq.s32.totalorder %s31, 0
      %p163 = por %p161, %p162
      %s165 = sadd.s32 %s164, 1
      %p168 = scmp.eq.s32.totalorder %s25, 1
      %p169 = scmp.ne.s32.totalorder %s164, %s166
      %p170 = scmp.eq.s32.totalorder %s25, 0
      %p171 = por %p169, %p170
      %p172 = scmp.ne.s32.totalorder %s164, %s166
      %p173 = scmp.eq.s32.totalorder %s30, 1
      %p174 = por %p172, %p173
      %p175 = scmp.ne.s32.totalorder %s166, %s167
      %p176 = scmp.eq.s32.totalorder %s30, 0
      %p177 = por %p175, %p176
      %p178 = scmp.ne.s32.totalorder %s166, %s167
      %p179 = scmp.eq.s32.totalorder %s31, 1
      %p180 = por %p178, %p179
      %p182 = scmp.ne.s32.totalorder %s167, %s181
      %p183 = scmp.eq.s32.totalorder %s31, 0
      %p184 = por %p182, %p183
      %s186 = sadd.s32 %s185, 1
      %p189 = scmp.eq.s32.totalorder %s25, 1
      %p190 = scmp.ne.s32.totalorder %s185, %s187
      %p191 = scmp.eq.s32.totalorder %s25, 0
      %p192 = por %p190, %p191
      %p193 = scmp.ne.s32.totalorder %s185, %s187
      %p194 = scmp.eq.s32.totalorder %s30, 1
      %p195 = por %p193, %p194
      %p196 = scmp.ne.s32.totalorder %s187, %s188
      %p197 = scmp.eq.s32.totalorder %s30, 0
      %p198 = por %p196, %p197
      %p199 = scmp.ne.s32.totalorder %s187, %s188
      %p200 = scmp.eq.s32.totalorder %s31, 1
      %p201 = por %p199, %p200
      %p203 = scmp.ne.s32.totalorder %s188, %s202
      %p204 = scmp.eq.s32.totalorder %s31, 0
      %p205 = por %p203, %p204
      %s207 = sadd.s32 %s206, 1
      %p210 = scmp.eq.s32.totalorder %s25, 1
      %p211 = scmp.ne.s32.totalorder %s206, %s208
      %p212 = scmp.eq.s32.totalorder %s25, 0
      %p213 = por %p211, %p212
      %p214 = scmp.ne.s32.totalorder %s206, %s208
      %p215 = scmp.eq.s32.totalorder %s30, 1
      %p216 = por %p214, %p215
      %p217 = scmp.ne.s32.totalorder %s208, %s209
      %p218 = scmp.eq.s32.totalorder %s30, 0
      %p219 = por %p217, %p218
      %p220 = scmp.ne.s32.totalorder %s208, %s209
      %p221 = scmp.eq.s32.totalorder %s31, 1
      %p222 = por %p220, %p221
      %p224 = scmp.ne.s32.totalorder %s209, %s223
      %p225 = scmp.eq.s32.totalorder %s31, 0
      %p226 = por %p224, %p225
      %s228 = sadd.s32 %s227, 1
      %p231 = scmp.eq.s32.totalorder %s25, 1
      %p232 = scmp.ne.s32.totalorder %s227, %s229
      %p233 = scmp.eq.s32.totalorder %s25, 0
      %p234 = por %p232, %p233
      %p235 = scmp.ne.s32.totalorder %s227, %s229
      %p236 = scmp.eq.s32.totalorder %s30, 1
      %p237 = por %p235, %p236
      %p238 = scmp.ne.s32.totalorder %s229, %s230
      %p239 = scmp.eq.s32.totalorder %s30, 0
      %p240 = por %p238, %p239
      %p241 = scmp.ne.s32.totalorder %s229, %s230
      %p242 = scmp.eq.s32.totalorder %s31, 1
      %p243 = por %p241, %p242
      %p245 = scmp.ne.s32.totalorder %s230, %s244
      %p246 = scmp.eq.s32.totalorder %s31, 0
      %p247 = por %p245, %p246
      %s249 = sadd.s32 %s248, 1
      %p252 = scmp.eq.s32.totalorder %s25, 1
      %p253 = scmp.ne.s32.totalorder %s248, %s250
      %p254 = scmp.eq.s32.totalorder %s25, 0
      %p255 = por %p253, %p254
      %p256 = scmp.ne.s32.totalorder %s248, %s250
      %p257 = scmp.eq.s32.totalorder %s30, 1
      %p258 = por %p256, %p257
      %p259 = scmp.ne.s32.totalorder %s250, %s251
      %p260 = scmp.eq.s32.totalorder %s30, 0
      %p261 = por %p259, %p260
      %p262 = scmp.ne.s32.totalorder %s250, %s251
      %p263 = scmp.eq.s32.totalorder %s31, 1
      %p264 = por %p262, %p263
      %p266 = scmp.ne.s32.totalorder %s251, %s265
      %p267 = scmp.eq.s32.totalorder %s31, 0
      %p268 = por %p266, %p267
      %s270 = sadd.s32 %s269, 1
      %p273 = scmp.eq.s32.totalorder %s25, 1
      %p274 = scmp.ne.s32.totalorder %s269, %s271
      %p275 = scmp.eq.s32.totalorder %s25, 0
      %p276 = por %p274, %p275
      %p277 = scmp.ne.s32.totalorder %s269, %s271
      %p278 = scmp.eq.s32.totalorder %s30, 1
      %p279 = por %p277, %p278
      %p280 = scmp.ne.s32.totalorder %s271, %s272
      %p281 = scmp.eq.s32.totalorder %s30, 0
      %p282 = por %p280, %p281
      %p283 = scmp.ne.s32.totalorder %s271, %s272
      %p284 = scmp.eq.s32.totalorder %s31, 1
      %p285 = por %p283, %p284
      %p287 = scmp.ne.s32.totalorder %s272, %s286
      %p288 = scmp.eq.s32.totalorder %s31, 0
      %p289 = por %p287, %p288
      %s291 = sadd.s32 %s290, 1
      %p294 = scmp.eq.s32.totalorder %s25, 1
      %p295 = scmp.ne.s32.totalorder %s290, %s292
      %p296 = scmp.eq.s32.totalorder %s25, 0
      %p297 = por %p295, %p296
      %p298 = scmp.ne.s32.totalorder %s290, %s292
      %p299 = scmp.eq.s32.totalorder %s30, 1
      %p300 = por %p298, %p299
      %p301 = scmp.ne.s32.totalorder %s292, %s293
      %p302 = scmp.eq.s32.totalorder %s30, 0
      %p303 = por %p301, %p302
      %p304 = scmp.ne.s32.totalorder %s292, %s293
      %p305 = scmp.eq.s32.totalorder %s31, 1
      %p306 = por %p304, %p305
      %p308 = scmp.ne.s32.totalorder %s293, %s307
      %p309 = scmp.eq.s32.totalorder %s31, 0
      %p310 = por %p308, %p309
      %s312 = sadd.s32 %s311, 1
      %p315 = scmp.eq.s32.totalorder %s25, 1
      %p316 = scmp.ne.s32.totalorder %s311, %s313
      %p317 = scmp.eq.s32.totalorder %s25, 0
      %p318 = por %p316, %p317
      %p319 = scmp.ne.s32.totalorder %s311, %s313
      %p320 = scmp.eq.s32.totalorder %s30, 1
      %p321 = por %p319, %p320
      %p322 = scmp.ne.s32.totalorder %s313, %s314
      %p323 = scmp.eq.s32.totalorder %s30, 0
      %p324 = por %p322, %p323
      %p325 = scmp.ne.s32.totalorder %s313, %s314
      %p326 = scmp.eq.s32.totalorder %s31, 1
      %p327 = por %p325, %p326
      %p329 = scmp.ne.s32.totalorder %s314, %s328
      %p330 = scmp.eq.s32.totalorder %s31, 0
      %p331 = por %p329, %p330
      %s333 = sadd.s32 %s332, 1
      %p336 = scmp.eq.s32.totalorder %s25, 1
      %p337 = scmp.ne.s32.totalorder %s332, %s334
      %p338 = scmp.eq.s32.totalorder %s25, 0
      %p339 = por %p337, %p338
      %p340 = scmp.ne.s32.totalorder %s332, %s334
      %p341 = scmp.eq.s32.totalorder %s30, 1
      %p342 = por %p340, %p341
      %p343 = scmp.ne.s32.totalorder %s334, %s335
      %p344 = scmp.eq.s32.totalorder %s30, 0
      %p345 = por %p343, %p344
      %p346 = scmp.ne.s32.totalorder %s334, %s335
      %p347 = scmp.eq.s32.totalorder %s31, 1
      %p348 = por %p346, %p347
      %p350 = scmp.ne.s32.totalorder %s335, %s349
      %p351 = scmp.eq.s32.totalorder %s31, 0
      %p352 = por %p350, %p351
      %s354 = sadd.s32 %s353, 1
      %p357 = scmp.eq.s32.totalorder %s25, 1
      %p358 = scmp.ne.s32.totalorder %s353, %s355
      %p359 = scmp.eq.s32.totalorder %s25, 0
      %p360 = por %p358, %p359
      %p361 = scmp.ne.s32.totalorder %s353, %s355
      %p362 = scmp.eq.s32.totalorder %s30, 1
      %p363 = por %p361, %p362
      %p364 = scmp.ne.s32.totalorder %s355, %s356
      %p365 = scmp.eq.s32.totalorder %s30, 0
      %p366 = por %p364, %p365
      %p367 = scmp.ne.s32.totalorder %s355, %s356
      %p368 = scmp.eq.s32.totalorder %s31, 1
      %p369 = por %p367, %p368
      %p371 = scmp.ne.s32.totalorder %s356, %s370
      %p372 = scmp.eq.s32.totalorder %s31, 0
      %p373 = por %p371, %p372
      %s374 = ssub.s32 %s25, %s32
      %p375 = scmp.eq.s32.totalorder %s374, 0
      %s377 = sadd.s32 %s376, 1
      %s378 = scalar_select %p375, %s376, %s377
      %p381 = pneg %p375
      %p382 = scmp.eq.s32.totalorder %s25, 1
      %p383 = por %p381, %p382
      %p384 = scmp.ne.s32.totalorder %s376, %s379
      %p385 = scmp.eq.s32.totalorder %s25, 0
      %p386 = por %p384, %p385
      %p387 = scmp.ne.s32.totalorder %s376, %s379
      %p388 = scmp.eq.s32.totalorder %s30, 1
      %p389 = por %p387, %p388
      %p390 = scmp.ne.s32.totalorder %s379, %s380
      %p391 = scmp.eq.s32.totalorder %s30, 0
      %p392 = por %p390, %p391
      %p393 = scmp.ne.s32.totalorder %s379, %s380
      %p394 = scmp.eq.s32.totalorder %s31, 1
      %p395 = por %p393, %p394
      %p397 = scmp.ne.s32.totalorder %s380, %s396
      %p398 = scmp.eq.s32.totalorder %s31, 0
      %p399 = por %p397, %p398
      %p400 = scmp.le.s32.totalorder 1, %s25
      %p401 = scmp.lt.s32.totalorder %s25, 3
      %p402 = pnand %p400, %p401
      %p403 = pneg %p402
      // Predicated region
      $region9: #{transformer_classifier_forward.1} parent=5 // pred_check
        _
      $region10: #{transformer_classifier_forward.1} parent=5 // pred_check_branch
        %405 = sbr.rel (%p402) target = $region12
      $region11: #{transformer_classifier_forward.1} parent=5 // pred_region
        %s406 = ssub.s32 %s25, 1
        // Predicated region
        $region13: #{transformer_classifier_forward.1} parent=11 // pred_check
          %p407 = pneg %p72
        $region14: #{transformer_classifier_forward.1} parent=11 // pred_check_branch
          %409 = sbr.rel (%p407) target = $region16
        $region15: #{transformer_classifier_forward.1} parent=11 // pred_region
          _
        $region16: #{transformer_classifier_forward.1} parent=11 // pred_fallthru
          _
        // Predicated region
        $region17: #{transformer_classifier_forward.1} parent=11 // pred_check
          %p410 = pneg %p93
        $region18: #{transformer_classifier_forward.1} parent=11 // pred_check_branch
          %412 = sbr.rel (%p410) target = $region20
        $region19: #{transformer_classifier_forward.1} parent=11 // pred_region
          _
        $region20: #{transformer_classifier_forward.1} parent=11 // pred_fallthru
          _
        // Predicated region
        $region21: #{transformer_classifier_forward.1} parent=11 // pred_check
          %p413 = pneg %p114
        $region22: #{transformer_classifier_forward.1} parent=11 // pred_check_branch
          %415 = sbr.rel (%p413) target = $region24
        $region23: #{transformer_classifier_forward.1} parent=11 // pred_region
          _
        $region24: #{transformer_classifier_forward.1} parent=11 // pred_fallthru
          _
        // Predicated region
        $region25: #{transformer_classifier_forward.1} parent=11 // pred_check
          %p416 = pneg %p135
        $region26: #{transformer_classifier_forward.1} parent=11 // pred_check_branch
          %418 = sbr.rel (%p416) target = $region28
        $region27: #{transformer_classifier_forward.1} parent=11 // pred_region
          _
        $region28: #{transformer_classifier_forward.1} parent=11 // pred_fallthru
          _
        // Predicated region
        $region29: #{transformer_classifier_forward.1} parent=11 // pred_check
          %p419 = pneg %p156
        $region30: #{transformer_classifier_forward.1} parent=11 // pred_check_branch
          %421 = sbr.rel (%p419) target = $region32
        $region31: #{transformer_classifier_forward.1} parent=11 // pred_region
          _
        $region32: #{transformer_classifier_forward.1} parent=11 // pred_fallthru
          _
        // Predicated region
        $region33: #{transformer_classifier_forward.1} parent=11 // pred_check
          %p422 = pneg %p177
        $region34: #{transformer_classifier_forward.1} parent=11 // pred_check_branch
          %424 = sbr.rel (%p422) target = $region36
        $region35: #{transformer_classifier_forward.1} parent=11 // pred_region
          _
        $region36: #{transformer_classifier_forward.1} parent=11 // pred_fallthru
          _
        // Predicated region
        $region37: #{transformer_classifier_forward.1} parent=11 // pred_check
          %p425 = pneg %p198
        $region38: #{transformer_classifier_forward.1} parent=11 // pred_check_branch
          %427 = sbr.rel (%p425) target = $region40
        $region39: #{transformer_classifier_forward.1} parent=11 // pred_region
          _
        $region40: #{transformer_classifier_forward.1} parent=11 // pred_fallthru
          _
        // Predicated region
        $region41: #{transformer_classifier_forward.1} parent=11 // pred_check
          %p428 = pneg %p219
        $region42: #{transformer_classifier_forward.1} parent=11 // pred_check_branch
          %430 = sbr.rel (%p428) target = $region44
        $region43: #{transformer_classifier_forward.1} parent=11 // pred_region
          _
        $region44: #{transformer_classifier_forward.1} parent=11 // pred_fallthru
          _
        // Predicated region
        $region45: #{transformer_classifier_forward.1} parent=11 // pred_check
          %p431 = pneg %p240
        $region46: #{transformer_classifier_forward.1} parent=11 // pred_check_branch
          %433 = sbr.rel (%p431) target = $region48
        $region47: #{transformer_classifier_forward.1} parent=11 // pred_region
          _
        $region48: #{transformer_classifier_forward.1} parent=11 // pred_fallthru
          _
        // Predicated region
        $region49: #{transformer_classifier_forward.1} parent=11 // pred_check
          %p434 = pneg %p261
        $region50: #{transformer_classifier_forward.1} parent=11 // pred_check_branch
          %436 = sbr.rel (%p434) target = $region52
        $region51: #{transformer_classifier_forward.1} parent=11 // pred_region
          _
        $region52: #{transformer_classifier_forward.1} parent=11 // pred_fallthru
          _
        // Predicated region
        $region53: #{transformer_classifier_forward.1} parent=11 // pred_check
          %p437 = pneg %p282
        $region54: #{transformer_classifier_forward.1} parent=11 // pred_check_branch
          %439 = sbr.rel (%p437) target = $region56
        $region55: #{transformer_classifier_forward.1} parent=11 // pred_region
          _
        $region56: #{transformer_classifier_forward.1} parent=11 // pred_fallthru
          _
        // Predicated region
        $region57: #{transformer_classifier_forward.1} parent=11 // pred_check
          %p440 = pneg %p303
        $region58: #{transformer_classifier_forward.1} parent=11 // pred_check_branch
          %442 = sbr.rel (%p440) target = $region60
        $region59: #{transformer_classifier_forward.1} parent=11 // pred_region
          _
        $region60: #{transformer_classifier_forward.1} parent=11 // pred_fallthru
          _
        // Predicated region
        $region61: #{transformer_classifier_forward.1} parent=11 // pred_check
          %p443 = pneg %p324
        $region62: #{transformer_classifier_forward.1} parent=11 // pred_check_branch
          %445 = sbr.rel (%p443) target = $region64
        $region63: #{transformer_classifier_forward.1} parent=11 // pred_region
          _
        $region64: #{transformer_classifier_forward.1} parent=11 // pred_fallthru
          _
        // Predicated region
        $region65: #{transformer_classifier_forward.1} parent=11 // pred_check
          %p446 = pneg %p345
        $region66: #{transformer_classifier_forward.1} parent=11 // pred_check_branch
          %448 = sbr.rel (%p446) target = $region68
        $region67: #{transformer_classifier_forward.1} parent=11 // pred_region
          _
        $region68: #{transformer_classifier_forward.1} parent=11 // pred_fallthru
          _
        // Predicated region
        $region69: #{transformer_classifier_forward.1} parent=11 // pred_check
          %p449 = pneg %p366
        $region70: #{transformer_classifier_forward.1} parent=11 // pred_check_branch
          %451 = sbr.rel (%p449) target = $region72
        $region71: #{transformer_classifier_forward.1} parent=11 // pred_region
          _
        $region72: #{transformer_classifier_forward.1} parent=11 // pred_fallthru
          _
      $region12: #{transformer_classifier_forward.1} parent=5 // pred_fallthru
        _
      %p452 = scmp.lt.s32.totalorder %s25, 2
      // Predicated region
      $region73: #{transformer_classifier_forward.1} parent=5 // pred_check
        %p453 = pneg %p452
      $region74: #{transformer_classifier_forward.1} parent=5 // pred_check_branch
        %455 = sbr.rel (%p453) target = $region76
      $region75: #{transformer_classifier_forward.1} parent=5 // pred_region
        // Predicated region
        $region77: #{transformer_classifier_forward.1} parent=75 // pred_check
          %p456 = pneg %p45
        $region78: #{transformer_classifier_forward.1} parent=75 // pred_check_branch
          %458 = sbr.rel (%p456) target = $region80
        $region79: #{transformer_classifier_forward.1} parent=75 // pred_region
          %p459 = scmp.lt.s32.totalorder %s25, 1
          %s460 = scalar_select %p459, %s25, 1
          %s461 = smul.addr %s460, 8
          %s462 = scalar_lea.vmem %s0, %s461
        $region80: #{transformer_classifier_forward.1} parent=75 // pred_fallthru
          _
      $region76: #{transformer_classifier_forward.1} parent=5 // pred_fallthru
        _
      %p463 = scmp.le.s32.totalorder 1, %s25
      %p464 = scmp.lt.s32.totalorder %s25, 3
      %p465 = pnand %p463, %p464
      %p466 = pneg %p465
      // Predicated region
      $region81: #{transformer_classifier_forward.1} parent=5 // pred_check
        _
      $region82: #{transformer_classifier_forward.1} parent=5 // pred_check_branch
        %468 = sbr.rel (%p465) target = $region84
      $region83: #{transformer_classifier_forward.1} parent=5 // pred_region
        %s469 = ssub.s32 %s25, 1
        %p470 = scmp.lt.s32.totalorder %s30, 1
        %s471 = scalar_select %p470, %s30, 1
        %s472 = smul.addr %s471, 8
        %s473 = scalar_lea.vmem %s0, %s472
        %p474 = pneg %p51
        %p475 = pneg %p48
        %p476 = pneg %p72
        %p477 = pneg %p69
        %p478 = pneg %p93
        %p479 = pneg %p90
        %p480 = pneg %p114
        %p481 = pneg %p111
        %p482 = pneg %p135
        %p483 = pneg %p132
        %p484 = pneg %p156
        %p485 = pneg %p153
        %p486 = pneg %p177
        %p487 = pneg %p174
        %p488 = pneg %p198
        %p489 = pneg %p195
        %p490 = pneg %p219
        %p491 = pneg %p216
        %p492 = pneg %p240
        %p493 = pneg %p237
        %p494 = pneg %p261
        %p495 = pneg %p258
        %p496 = pneg %p282
        %p497 = pneg %p279
        %p498 = pneg %p303
        %p499 = pneg %p300
        %p500 = pneg %p324
        %p501 = pneg %p321
        %p502 = pneg %p345
        %p503 = pneg %p342
        %p504 = pneg %p366
        %p505 = pneg %p363
        %p506 = pneg %p392
        %p507 = pneg %p389
        %s508 = sand.u32 %s379, 1
        %s509 = scalar_lea.sflag [#allocation3], %s508
        %s510 = sand.u32 %s379, 1
        %s511 = scalar_lea.vmem [#allocation2], %s510
        %p512 = scmp.lt.s32.totalorder %s30, 1
        %s513 = scalar_select %p512, %s30, 1
        %s514 = smul.addr %s513, 8
        %s515 = scalar_lea.vmem %s0, %s514
        %v517 = vld [vmem:[%s515] sm:$0xff]
        %v518 = vld [vmem:[%s1] sm:$0xff]
        %v519 = vadd.f32 %v517, %v518
        %v520 = vld [vmem:[%s2] sm:$0xff]
        %v521 = vld [vmem:[%s2 + $0x8] sm:$0xff]
        %v522 = vld [vmem:[%s2 + $0x10] sm:$0xff]
        %v523 = vld [vmem:[%s2 + $0x18] sm:$0xff]
        %v524 = vld [vmem:[%s3] sm:$0x1]
        %v525 = vpack.c.bf16 %v519, %v519
        %v526 = vpack.c.bf16 %v521, %v520
        %v527 = vpack.c.bf16 %v523, %v522
        %v529 = vlaneseq
        %v530 = vshrl.u32 %v529, 7
        %v531 = vsub.s32 0, %v530
        %v532 = vrot.slane %v524, %v531
        %vm534 = vcmask 261120
        %v536 = vsel %vm534, %v525, 0
        %538 = vmatprep.subr.bf16.mxu0 0
        %539 = vmatpush1.bf16.msra.mxu0 %v526
        %540 = vmatprep.subr.bf16.mxu0 0
        %541 = vmatpush1.bf16.msra.mxu0 %v527
        %542 = vmatprep.subr.bf16.mxu0 0
        %543 = vmatpush1.bf16.msra.mxu0 0
        %544 = vmatprep.subr.bf16.mxu0 0
        %545 = vmatpush1.bf16.msra.mxu0 0
        %546 = vmatprep.subr.bf16.mxu0 0
        %547 = vmatpush1.bf16.msra.mxu0 0
        %548 = vmatprep.subr.bf16.mxu0 0
        %549 = vmatpush1.bf16.msra.mxu0 0
        %550 = vmatprep.subr.bf16.mxu0 0
        %551 = vmatpush1.bf16.msra.mxu0 0
        %552 = vmatprep.subr.bf16.mxu0 0
        %553 = vmatpush1.bf16.msra.mxu0 0
        %554 = vmatprep.subr.bf16.mxu0 0
        %555 = vmatpush1.bf16.msra.mxu0 0
        %556 = vmatprep.subr.bf16.mxu0 0
        %557 = vmatpush1.bf16.msra.mxu0 0
        %558 = vmatprep.subr.bf16.mxu0 0
        %559 = vmatpush1.bf16.msra.mxu0 0
        %560 = vmatprep.subr.bf16.mxu0 0
        %561 = vmatpush1.bf16.msra.mxu0 0
        %562 = vmatprep.subr.bf16.mxu0 0
        %563 = vmatpush1.bf16.msra.mxu0 0
        %564 = vmatprep.subr.bf16.mxu0 0
        %565 = vmatpush1.bf16.msra.mxu0 0
        %566 = vmatprep.subr.bf16.mxu0 0
        %567 = vmatpush1.bf16.msra.mxu0 0
        %568 = vmatprep.subr.bf16.mxu0 0
        %569 = vmatpush1.bf16.msra.mxu0 0
        %570 = vmatprep.mubr.bf16.mxu0 0
        %571 = vmatmul.mubr.bf16.gmra.mrb[0].mxu0 %v536
        %v572 = vpop.f32.mrb[0].mxu0
        %v573 = vadd.f32 %v532, %v572
        %v574 = vpop.f32.mrb[0].mxu0
        %v575 = vpop.f32.mrb[0].mxu0
        %v576 = vpop.f32.mrb[0].mxu0
        %577 = vdwg.mxu0
        %v578 = vpack.c.bf16 %v573, %v573
        %580 = vrot.lane.b32.xlu0 %v578, 96
        %v581 = vpop.permute.xlu0 %580
        %vm582 = vcmask 31744
        %v584 = vsel %vm582, %v578, 0
        %v587 = vsel %vm582, %v581, 0
        %589 = vmatprep.subr.bf16.mxu0 0
        %590 = vmatpush1.bf16.xpose.msra.mxu0 %v587
        %591 = vmatprep.subr.bf16.mxu0 0
        %592 = vmatpush1.bf16.xpose.msra.mxu0 0
        %593 = vmatprep.subr.bf16.mxu0 0
        %594 = vmatpush1.bf16.xpose.msra.mxu0 0
        %595 = vmatprep.subr.bf16.mxu0 0
        %596 = vmatpush1.bf16.xpose.msra.mxu0 0
        %597 = vmatprep.subr.bf16.mxu0 0
        %598 = vmatpush1.bf16.xpose.msra.mxu0 0
        %599 = vmatprep.subr.bf16.mxu0 0
        %600 = vmatpush1.bf16.xpose.msra.mxu0 0
        %601 = vmatprep.subr.bf16.mxu0 0
        %602 = vmatpush1.bf16.xpose.msra.mxu0 0
        %603 = vmatprep.subr.bf16.mxu0 0
        %604 = vmatpush1.bf16.xpose.msra.mxu0 0
        %605 = vmatprep.subr.bf16.mxu0 0
        %606 = vmatpush1.bf16.xpose.msra.mxu0 0
        %607 = vmatprep.subr.bf16.mxu0 0
        %608 = vmatpush1.bf16.xpose.msra.mxu0 0
        %609 = vmatprep.subr.bf16.mxu0 0
        %610 = vmatpush1.bf16.xpose.msra.mxu0 0
        %611 = vmatprep.subr.bf16.mxu0 0
        %612 = vmatpush1.bf16.xpose.msra.mxu0 0
        %613 = vmatprep.subr.bf16.mxu0 0
        %614 = vmatpush1.bf16.xpose.msra.mxu0 0
        %615 = vmatprep.subr.bf16.mxu0 0
        %616 = vmatpush1.bf16.xpose.msra.mxu0 0
        %617 = vmatprep.subr.bf16.mxu0 0
        %618 = vmatpush1.bf16.xpose.msra.mxu0 0
        %619 = vmatprep.subr.bf16.mxu0 0
        %620 = vmatpush1.bf16.xpose.msra.mxu0 0
        %621 = vmatprep.mubr.bf16.mxu0 0
        %622 = vmatmul.mubr.bf16.gmra.mrb[0].mxu0 %v584
        %v623 = vpop.f32.mrb[0].mxu0
        %v624 = vadd.f32 0.0, %v623
        %v625 = vpop.f32.mrb[0].mxu0
        %v626 = vpop.f32.mrb[0].mxu0
        %v627 = vpop.f32.mrb[0].mxu0
        %628 = vdwg.mxu0
        %vm629 = vcmask 64512
        %v630 = vsel %vm629, %v624, -inf
        %631 = vmax.xlane.f32.xlu0 %v630
        %v632 = vpop.xlane.xlu0 %631
        %v633 = vsub.f32 %v624, %v632
        %v634 = vmul.f32 %v633, 1.442695
        %v635 = vpow.pop %v634
        %v636 = vsel %vm629, %v635, 0.0
        %637 = vadd.xlane.f32.xlu0 %v636
        %v638 = vpop.xlane.xlu0 %637
        %v639 = vrcp.pop %v638
        %v640 = vmul.f32 %v635, %v639
        %v641 = vpack.c.bf16 %v640, %v640
        %642 = vrot.lane.b32.xlu0 %v578, 64
        %v643 = vpop.permute.xlu0 %642
        %v645 = vsel %vm629, %v641, 0
        %vm647 = vcmask 1043456
        %v649 = vsel %vm647, %v643, 0
        %651 = vmatprep.subr.bf16.mxu0 0
        %652 = vmatpush1.bf16.msra.mxu0 %v649
        %653 = vmatprep.subr.bf16.mxu0 0
        %654 = vmatpush1.bf16.msra.mxu0 0
        %655 = vmatprep.subr.bf16.mxu0 0
        %656 = vmatpush1.bf16.msra.mxu0 0
        %657 = vmatprep.subr.bf16.mxu0 0
        %658 = vmatpush1.bf16.msra.mxu0 0
        %659 = vmatprep.subr.bf16.mxu0 0
        %660 = vmatpush1.bf16.msra.mxu0 0
        %661 = vmatprep.subr.bf16.mxu0 0
        %662 = vmatpush1.bf16.msra.mxu0 0
        %663 = vmatprep.subr.bf16.mxu0 0
        %664 = vmatpush1.bf16.msra.mxu0 0
        %665 = vmatprep.subr.bf16.mxu0 0
        %666 = vmatpush1.bf16.msra.mxu0 0
        %667 = vmatprep.subr.bf16.mxu0 0
        %668 = vmatpush1.bf16.msra.mxu0 0
        %669 = vmatprep.subr.bf16.mxu0 0
        %670 = vmatpush1.bf16.msra.mxu0 0
        %671 = vmatprep.subr.bf16.mxu0 0
        %672 = vmatpush1.bf16.msra.mxu0 0
        %673 = vmatprep.subr.bf16.mxu0 0
        %674 = vmatpush1.bf16.msra.mxu0 0
        %675 = vmatprep.subr.bf16.mxu0 0
        %676 = vmatpush1.bf16.msra.mxu0 0
        %677 = vmatprep.subr.bf16.mxu0 0
        %678 = vmatpush1.bf16.msra.mxu0 0
        %679 = vmatprep.subr.bf16.mxu0 0
        %680 = vmatpush1.bf16.msra.mxu0 0
        %681 = vmatprep.subr.bf16.mxu0 0
        %682 = vmatpush1.bf16.msra.mxu0 0
        %683 = vmatprep.mubr.bf16.mxu0 0
        %684 = vmatmul.mubr.bf16.gmra.mrb[0].mxu0 %v645
        %v685 = vpop.f32.mrb[0].mxu0
        %v686 = vadd.f32 0.0, %v685
        %v687 = vpop.f32.mrb[0].mxu0
        %v688 = vpop.f32.mrb[0].mxu0
        %v689 = vpop.f32.mrb[0].mxu0
        %690 = vdwg.mxu0
        %691 = vrot.lane.b32.xlu0 %v578, 124
        %v692 = vpop.permute.xlu0 %691
        %693 = vrot.lane.b32.xlu0 %v578, 92
        %v694 = vpop.permute.xlu0 %693
        %v696 = vsel %vm582, %v692, 0
        %v699 = vsel %vm582, %v694, 0
        %701 = vmatprep.subr.bf16.mxu0 0
        %702 = vmatpush1.bf16.xpose.msra.mxu0 %v699
        %703 = vmatprep.subr.bf16.mxu0 0
        %704 = vmatpush1.bf16.xpose.msra.mxu0 0
        %705 = vmatprep.subr.bf16.mxu0 0
        %706 = vmatpush1.bf16.xpose.msra.mxu0 0
        %707 = vmatprep.subr.bf16.mxu0 0
        %708 = vmatpush1.bf16.xpose.msra.mxu0 0
        %709 = vmatprep.subr.bf16.mxu0 0
        %710 = vmatpush1.bf16.xpose.msra.mxu0 0
        %711 = vmatprep.subr.bf16.mxu0 0
        %712 = vmatpush1.bf16.xpose.msra.mxu0 0
        %713 = vmatprep.subr.bf16.mxu0 0
        %714 = vmatpush1.bf16.xpose.msra.mxu0 0
        %715 = vmatprep.subr.bf16.mxu0 0
        %716 = vmatpush1.bf16.xpose.msra.mxu0 0
        %717 = vmatprep.subr.bf16.mxu0 0
        %718 = vmatpush1.bf16.xpose.msra.mxu0 0
        %719 = vmatprep.subr.bf16.mxu0 0
        %720 = vmatpush1.bf16.xpose.msra.mxu0 0
        %721 = vmatprep.subr.bf16.mxu0 0
        %722 = vmatpush1.bf16.xpose.msra.mxu0 0
        %723 = vmatprep.subr.bf16.mxu0 0
        %724 = vmatpush1.bf16.xpose.msra.mxu0 0
        %725 = vmatprep.subr.bf16.mxu0 0
        %726 = vmatpush1.bf16.xpose.msra.mxu0 0
        %727 = vmatprep.subr.bf16.mxu0 0
        %728 = vmatpush1.bf16.xpose.msra.mxu0 0
        %729 = vmatprep.subr.bf16.mxu0 0
        %730 = vmatpush1.bf16.xpose.msra.mxu0 0
        %731 = vmatprep.subr.bf16.mxu0 0
        %732 = vmatpush1.bf16.xpose.msra.mxu0 0
        %733 = vmatprep.mubr.bf16.mxu0 0
        %734 = vmatmul.mubr.bf16.gmra.mrb[0].mxu0 %v696
        %v735 = vpop.f32.mrb[0].mxu0
        %v736 = vadd.f32 0.0, %v735
        %v737 = vpop.f32.mrb[0].mxu0
        %v738 = vpop.f32.mrb[0].mxu0
        %v739 = vpop.f32.mrb[0].mxu0
        %740 = vdwg.mxu0
        %v741 = vsel %vm629, %v736, -inf
        %742 = vmax.xlane.f32.xlu0 %v741
        %v743 = vpop.xlane.xlu0 %742
        %v744 = vsub.f32 %v736, %v743
        %v745 = vmul.f32 %v744, 1.442695
        %v746 = vpow.pop %v745
        %v747 = vsel %vm629, %v746, 0.0
        %748 = vadd.xlane.f32.xlu0 %v747
        %v749 = vpop.xlane.xlu0 %748
        %v750 = vrcp.pop %v749
        %v751 = vmul.f32 %v746, %v750
        %v752 = vpack.c.bf16 %v751, %v751
        %753 = vrot.lane.b32.xlu0 %v578, 60
        %v754 = vpop.permute.xlu0 %753
        %v756 = vsel %vm629, %v752, 0
        %v759 = vsel %vm647, %v754, 0
        %761 = vmatprep.subr.bf16.mxu0 0
        %762 = vmatpush1.bf16.msra.mxu0 %v759
        %763 = vmatprep.subr.bf16.mxu0 0
        %764 = vmatpush1.bf16.msra.mxu0 0
        %765 = vmatprep.subr.bf16.mxu0 0
        %766 = vmatpush1.bf16.msra.mxu0 0
        %767 = vmatprep.subr.bf16.mxu0 0
        %768 = vmatpush1.bf16.msra.mxu0 0
        %769 = vmatprep.subr.bf16.mxu0 0
        %770 = vmatpush1.bf16.msra.mxu0 0
        %771 = vmatprep.subr.bf16.mxu0 0
        %772 = vmatpush1.bf16.msra.mxu0 0
        %773 = vmatprep.subr.bf16.mxu0 0
        %774 = vmatpush1.bf16.msra.mxu0 0
        %775 = vmatprep.subr.bf16.mxu0 0
        %776 = vmatpush1.bf16.msra.mxu0 0
        %777 = vmatprep.subr.bf16.mxu0 0
        %778 = vmatpush1.bf16.msra.mxu0 0
        %779 = vmatprep.subr.bf16.mxu0 0
        %780 = vmatpush1.bf16.msra.mxu0 0
        %781 = vmatprep.subr.bf16.mxu0 0
        %782 = vmatpush1.bf16.msra.mxu0 0
        %783 = vmatprep.subr.bf16.mxu0 0
        %784 = vmatpush1.bf16.msra.mxu0 0
        %785 = vmatprep.subr.bf16.mxu0 0
        %786 = vmatpush1.bf16.msra.mxu0 0
        %787 = vmatprep.subr.bf16.mxu0 0
        %788 = vmatpush1.bf16.msra.mxu0 0
        %789 = vmatprep.subr.bf16.mxu0 0
        %790 = vmatpush1.bf16.msra.mxu0 0
        %791 = vmatprep.subr.bf16.mxu0 0
        %792 = vmatpush1.bf16.msra.mxu0 0
        %793 = vmatprep.mubr.bf16.mxu0 0
        %794 = vmatmul.mubr.bf16.gmra.mrb[0].mxu0 %v756
        %v795 = vpop.f32.mrb[0].mxu0
        %v796 = vadd.f32 0.0, %v795
        %v797 = vpop.f32.mrb[0].mxu0
        %v798 = vpop.f32.mrb[0].mxu0
        %v799 = vpop.f32.mrb[0].mxu0
        %800 = vdwg.mxu0
        %801 = vrot.lane.b32.xlu0 %v578, 120
        %v802 = vpop.permute.xlu0 %801
        %803 = vrot.lane.b32.xlu0 %v578, 88
        %v804 = vpop.permute.xlu0 %803
        %v806 = vsel %vm582, %v802, 0
        %v809 = vsel %vm582, %v804, 0
        %811 = vmatprep.subr.bf16.mxu0 0
        %812 = vmatpush1.bf16.xpose.msra.mxu0 %v809
        %813 = vmatprep.subr.bf16.mxu0 0
        %814 = vmatpush1.bf16.xpose.msra.mxu0 0
        %815 = vmatprep.subr.bf16.mxu0 0
        %816 = vmatpush1.bf16.xpose.msra.mxu0 0
        %817 = vmatprep.subr.bf16.mxu0 0
        %818 = vmatpush1.bf16.xpose.msra.mxu0 0
        %819 = vmatprep.subr.bf16.mxu0 0
        %820 = vmatpush1.bf16.xpose.msra.mxu0 0
        %821 = vmatprep.subr.bf16.mxu0 0
        %822 = vmatpush1.bf16.xpose.msra.mxu0 0
        %823 = vmatprep.subr.bf16.mxu0 0
        %824 = vmatpush1.bf16.xpose.msra.mxu0 0
        %825 = vmatprep.subr.bf16.mxu0 0
        %826 = vmatpush1.bf16.xpose.msra.mxu0 0
        %827 = vmatprep.subr.bf16.mxu0 0
        %828 = vmatpush1.bf16.xpose.msra.mxu0 0
        %829 = vmatprep.subr.bf16.mxu0 0
        %830 = vmatpush1.bf16.xpose.msra.mxu0 0
        %831 = vmatprep.subr.bf16.mxu0 0
        %832 = vmatpush1.bf16.xpose.msra.mxu0 0
        %833 = vmatprep.subr.bf16.mxu0 0
        %834 = vmatpush1.bf16.xpose.msra.mxu0 0
        %835 = vmatprep.subr.bf16.mxu0 0
        %836 = vmatpush1.bf16.xpose.msra.mxu0 0
        %837 = vmatprep.subr.bf16.mxu0 0
        %838 = vmatpush1.bf16.xpose.msra.mxu0 0
        %839 = vmatprep.subr.bf16.mxu0 0
        %840 = vmatpush1.bf16.xpose.msra.mxu0 0
        %841 = vmatprep.subr.bf16.mxu0 0
        %842 = vmatpush1.bf16.xpose.msra.mxu0 0
        %843 = vmatprep.mubr.bf16.mxu0 0
        %844 = vmatmul.mubr.bf16.gmra.mrb[0].mxu0 %v806
        %v845 = vpop.f32.mrb[0].mxu0
        %v846 = vadd.f32 0.0, %v845
        %v847 = vpop.f32.mrb[0].mxu0
        %v848 = vpop.f32.mrb[0].mxu0
        %v849 = vpop.f32.mrb[0].mxu0
        %850 = vdwg.mxu0
        %v851 = vsel %vm629, %v846, -inf
        %852 = vmax.xlane.f32.xlu0 %v851
        %v853 = vpop.xlane.xlu0 %852
        %v854 = vsub.f32 %v846, %v853
        %v855 = vmul.f32 %v854, 1.442695
        %v856 = vpow.pop %v855
        %v857 = vsel %vm629, %v856, 0.0
        %858 = vadd.xlane.f32.xlu0 %v857
        %v859 = vpop.xlane.xlu0 %858
        %v860 = vrcp.pop %v859
        %v861 = vmul.f32 %v856, %v860
        %v862 = vpack.c.bf16 %v861, %v861
        %863 = vrot.lane.b32.xlu0 %v578, 56
        %v864 = vpop.permute.xlu0 %863
        %v866 = vsel %vm629, %v862, 0
        %v869 = vsel %vm647, %v864, 0
        %871 = vmatprep.subr.bf16.mxu0 0
        %872 = vmatpush1.bf16.msra.mxu0 %v869
        %873 = vmatprep.subr.bf16.mxu0 0
        %874 = vmatpush1.bf16.msra.mxu0 0
        %875 = vmatprep.subr.bf16.mxu0 0
        %876 = vmatpush1.bf16.msra.mxu0 0
        %877 = vmatprep.subr.bf16.mxu0 0
        %878 = vmatpush1.bf16.msra.mxu0 0
        %879 = vmatprep.subr.bf16.mxu0 0
        %880 = vmatpush1.bf16.msra.mxu0 0
        %881 = vmatprep.subr.bf16.mxu0 0
        %882 = vmatpush1.bf16.msra.mxu0 0
        %883 = vmatprep.subr.bf16.mxu0 0
        %884 = vmatpush1.bf16.msra.mxu0 0
        %885 = vmatprep.subr.bf16.mxu0 0
        %886 = vmatpush1.bf16.msra.mxu0 0
        %887 = vmatprep.subr.bf16.mxu0 0
        %888 = vmatpush1.bf16.msra.mxu0 0
        %889 = vmatprep.subr.bf16.mxu0 0
        %890 = vmatpush1.bf16.msra.mxu0 0
        %891 = vmatprep.subr.bf16.mxu0 0
        %892 = vmatpush1.bf16.msra.mxu0 0
        %893 = vmatprep.subr.bf16.mxu0 0
        %894 = vmatpush1.bf16.msra.mxu0 0
        %895 = vmatprep.subr.bf16.mxu0 0
        %896 = vmatpush1.bf16.msra.mxu0 0
        %897 = vmatprep.subr.bf16.mxu0 0
        %898 = vmatpush1.bf16.msra.mxu0 0
        %899 = vmatprep.subr.bf16.mxu0 0
        %900 = vmatpush1.bf16.msra.mxu0 0
        %901 = vmatprep.subr.bf16.mxu0 0
        %902 = vmatpush1.bf16.msra.mxu0 0
        %903 = vmatprep.mubr.bf16.mxu0 0
        %904 = vmatmul.mubr.bf16.gmra.mrb[0].mxu0 %v866
        %v905 = vpop.f32.mrb[0].mxu0
        %v906 = vadd.f32 0.0, %v905
        %v907 = vpop.f32.mrb[0].mxu0
        %v908 = vpop.f32.mrb[0].mxu0
        %v909 = vpop.f32.mrb[0].mxu0
        %910 = vdwg.mxu0
        %911 = vrot.lane.b32.xlu0 %v578, 116
        %v912 = vpop.permute.xlu0 %911
        %913 = vrot.lane.b32.xlu0 %v578, 84
        %v914 = vpop.permute.xlu0 %913
        %v916 = vsel %vm582, %v912, 0
        %v919 = vsel %vm582, %v914, 0
        %921 = vmatprep.subr.bf16.mxu0 0
        %922 = vmatpush1.bf16.xpose.msra.mxu0 %v919
        %923 = vmatprep.subr.bf16.mxu0 0
        %924 = vmatpush1.bf16.xpose.msra.mxu0 0
        %925 = vmatprep.subr.bf16.mxu0 0
        %926 = vmatpush1.bf16.xpose.msra.mxu0 0
        %927 = vmatprep.subr.bf16.mxu0 0
        %928 = vmatpush1.bf16.xpose.msra.mxu0 0
        %929 = vmatprep.subr.bf16.mxu0 0
        %930 = vmatpush1.bf16.xpose.msra.mxu0 0
        %931 = vmatprep.subr.bf16.mxu0 0
        %932 = vmatpush1.bf16.xpose.msra.mxu0 0
        %933 = vmatprep.subr.bf16.mxu0 0
        %934 = vmatpush1.bf16.xpose.msra.mxu0 0
        %935 = vmatprep.subr.bf16.mxu0 0
        %936 = vmatpush1.bf16.xpose.msra.mxu0 0
        %937 = vmatprep.subr.bf16.mxu0 0
        %938 = vmatpush1.bf16.xpose.msra.mxu0 0
        %939 = vmatprep.subr.bf16.mxu0 0
        %940 = vmatpush1.bf16.xpose.msra.mxu0 0
        %941 = vmatprep.subr.bf16.mxu0 0
        %942 = vmatpush1.bf16.xpose.msra.mxu0 0
        %943 = vmatprep.subr.bf16.mxu0 0
        %944 = vmatpush1.bf16.xpose.msra.mxu0 0
        %945 = vmatprep.subr.bf16.mxu0 0
        %946 = vmatpush1.bf16.xpose.msra.mxu0 0
        %947 = vmatprep.subr.bf16.mxu0 0
        %948 = vmatpush1.bf16.xpose.msra.mxu0 0
        %949 = vmatprep.subr.bf16.mxu0 0
        %950 = vmatpush1.bf16.xpose.msra.mxu0 0
        %951 = vmatprep.subr.bf16.mxu0 0
        %952 = vmatpush1.bf16.xpose.msra.mxu0 0
        %953 = vmatprep.mubr.bf16.mxu0 0
        %954 = vmatmul.mubr.bf16.gmra.mrb[0].mxu0 %v916
        %v955 = vpop.f32.mrb[0].mxu0
        %v956 = vadd.f32 0.0, %v955
        %v957 = vpop.f32.mrb[0].mxu0
        %v958 = vpop.f32.mrb[0].mxu0
        %v959 = vpop.f32.mrb[0].mxu0
        %960 = vdwg.mxu0
        %v961 = vsel %vm629, %v956, -inf
        %962 = vmax.xlane.f32.xlu0 %v961
        %v963 = vpop.xlane.xlu0 %962
        %v964 = vsub.f32 %v956, %v963
        %v965 = vmul.f32 %v964, 1.442695
        %v966 = vpow.pop %v965
        %v967 = vsel %vm629, %v966, 0.0
        %968 = vadd.xlane.f32.xlu0 %v967
        %v969 = vpop.xlane.xlu0 %968
        %v970 = vrcp.pop %v969
        %v971 = vmul.f32 %v966, %v970
        %v972 = vpack.c.bf16 %v971, %v971
        %973 = vrot.lane.b32.xlu0 %v578, 52
        %v974 = vpop.permute.xlu0 %973
        %v976 = vsel %vm629, %v972, 0
        %v979 = vsel %vm647, %v974, 0
        %981 = vmatprep.subr.bf16.mxu0 0
        %982 = vmatpush1.bf16.msra.mxu0 %v979
        %983 = vmatprep.subr.bf16.mxu0 0
        %984 = vmatpush1.bf16.msra.mxu0 0
        %985 = vmatprep.subr.bf16.mxu0 0
        %986 = vmatpush1.bf16.msra.mxu0 0
        %987 = vmatprep.subr.bf16.mxu0 0
        %988 = vmatpush1.bf16.msra.mxu0 0
        %989 = vmatprep.subr.bf16.mxu0 0
        %990 = vmatpush1.bf16.msra.mxu0 0
        %991 = vmatprep.subr.bf16.mxu0 0
        %992 = vmatpush1.bf16.msra.mxu0 0
        %993 = vmatprep.subr.bf16.mxu0 0
        %994 = vmatpush1.bf16.msra.mxu0 0
        %995 = vmatprep.subr.bf16.mxu0 0
        %996 = vmatpush1.bf16.msra.mxu0 0
        %997 = vmatprep.subr.bf16.mxu0 0
        %998 = vmatpush1.bf16.msra.mxu0 0
        %999 = vmatprep.subr.bf16.mxu0 0
        %1000 = vmatpush1.bf16.msra.mxu0 0
        %1001 = vmatprep.subr.bf16.mxu0 0
        %1002 = vmatpush1.bf16.msra.mxu0 0
        %1003 = vmatprep.subr.bf16.mxu0 0
        %1004 = vmatpush1.bf16.msra.mxu0 0
        %1005 = vmatprep.subr.bf16.mxu0 0
        %1006 = vmatpush1.bf16.msra.mxu0 0
        %1007 = vmatprep.subr.bf16.mxu0 0
        %1008 = vmatpush1.bf16.msra.mxu0 0
        %1009 = vmatprep.subr.bf16.mxu0 0
        %1010 = vmatpush1.bf16.msra.mxu0 0
        %1011 = vmatprep.subr.bf16.mxu0 0
        %1012 = vmatpush1.bf16.msra.mxu0 0
        %1013 = vmatprep.mubr.bf16.mxu0 0
        %1014 = vmatmul.mubr.bf16.gmra.mrb[0].mxu0 %v976
        %v1015 = vpop.f32.mrb[0].mxu0
        %v1016 = vadd.f32 0.0, %v1015
        %v1017 = vpop.f32.mrb[0].mxu0
        %v1018 = vpop.f32.mrb[0].mxu0
        %v1019 = vpop.f32.mrb[0].mxu0
        %1020 = vdwg.mxu0
        %1021 = vrot.lane.b32.xlu0 %v578, 112
        %v1022 = vpop.permute.xlu0 %1021
        %1023 = vrot.lane.b32.xlu0 %v578, 80
        %v1024 = vpop.permute.xlu0 %1023
        %v1026 = vsel %vm582, %v1022, 0
        %v1029 = vsel %vm582, %v1024, 0
        %1031 = vmatprep.subr.bf16.mxu0 0
        %1032 = vmatpush1.bf16.xpose.msra.mxu0 %v1029
        %1033 = vmatprep.subr.bf16.mxu0 0
        %1034 = vmatpush1.bf16.xpose.msra.mxu0 0
        %1035 = vmatprep.subr.bf16.mxu0 0
        %1036 = vmatpush1.bf16.xpose.msra.mxu0 0
        %1037 = vmatprep.subr.bf16.mxu0 0
        %1038 = vmatpush1.bf16.xpose.msra.mxu0 0
        %1039 = vmatprep.subr.bf16.mxu0 0
        %1040 = vmatpush1.bf16.xpose.msra.mxu0 0
        %1041 = vmatprep.subr.bf16.mxu0 0
        %1042 = vmatpush1.bf16.xpose.msra.mxu0 0
        %1043 = vmatprep.subr.bf16.mxu0 0
        %1044 = vmatpush1.bf16.xpose.msra.mxu0 0
        %1045 = vmatprep.subr.bf16.mxu0 0
        %1046 = vmatpush1.bf16.xpose.msra.mxu0 0
        %1047 = vmatprep.subr.bf16.mxu0 0
        %1048 = vmatpush1.bf16.xpose.msra.mxu0 0
        %1049 = vmatprep.subr.bf16.mxu0 0
        %1050 = vmatpush1.bf16.xpose.msra.mxu0 0
        %1051 = vmatprep.subr.bf16.mxu0 0
        %1052 = vmatpush1.bf16.xpose.msra.mxu0 0
        %1053 = vmatprep.subr.bf16.mxu0 0
        %1054 = vmatpush1.bf16.xpose.msra.mxu0 0
        %1055 = vmatprep.subr.bf16.mxu0 0
        %1056 = vmatpush1.bf16.xpose.msra.mxu0 0
        %1057 = vmatprep.subr.bf16.mxu0 0
        %1058 = vmatpush1.bf16.xpose.msra.mxu0 0
        %1059 = vmatprep.subr.bf16.mxu0 0
        %1060 = vmatpush1.bf16.xpose.msra.mxu0 0
        %1061 = vmatprep.subr.bf16.mxu0 0
        %1062 = vmatpush1.bf16.xpose.msra.mxu0 0
        %1063 = vmatprep.mubr.bf16.mxu0 0
        %1064 = vmatmul.mubr.bf16.gmra.mrb[0].mxu0 %v1026
        %v1065 = vpop.f32.mrb[0].mxu0
        %v1066 = vadd.f32 0.0, %v1065
        %v1067 = vpop.f32.mrb[0].mxu0
        %v1068 = vpop.f32.mrb[0].mxu0
        %v1069 = vpop.f32.mrb[0].mxu0
        %1070 = vdwg.mxu0
        %v1071 = vsel %vm629, %v1066, -inf
        %1072 = vmax.xlane.f32.xlu0 %v1071
        %v1073 = vpop.xlane.xlu0 %1072
        %v1074 = vsub.f32 %v1066, %v1073
        %v1075 = vmul.f32 %v1074, 1.442695
        %v1076 = vpow.pop %v1075
        %v1077 = vsel %vm629, %v1076, 0.0
        %1078 = vadd.xlane.f32.xlu0 %v1077
        %v1079 = vpop.xlane.xlu0 %1078
        %v1080 = vrcp.pop %v1079
        %v1081 = vmul.f32 %v1076, %v1080
        %v1082 = vpack.c.bf16 %v1081, %v1081
        %1083 = vrot.lane.b32.xlu0 %v578, 48
        %v1084 = vpop.permute.xlu0 %1083
        %v1086 = vsel %vm629, %v1082, 0
        %v1089 = vsel %vm647, %v1084, 0
        %1091 = vmatprep.subr.bf16.mxu0 0
        %1092 = vmatpush1.bf16.msra.mxu0 %v1089
        %1093 = vmatprep.subr.bf16.mxu0 0
        %1094 = vmatpush1.bf16.msra.mxu0 0
        %1095 = vmatprep.subr.bf16.mxu0 0
        %1096 = vmatpush1.bf16.msra.mxu0 0
        %1097 = vmatprep.subr.bf16.mxu0 0
        %1098 = vmatpush1.bf16.msra.mxu0 0
        %1099 = vmatprep.subr.bf16.mxu0 0
        %1100 = vmatpush1.bf16.msra.mxu0 0
        %1101 = vmatprep.subr.bf16.mxu0 0
        %1102 = vmatpush1.bf16.msra.mxu0 0
        %1103 = vmatprep.subr.bf16.mxu0 0
        %1104 = vmatpush1.bf16.msra.mxu0 0
        %1105 = vmatprep.subr.bf16.mxu0 0
        %1106 = vmatpush1.bf16.msra.mxu0 0
        %1107 = vmatprep.subr.bf16.mxu0 0
        %1108 = vmatpush1.bf16.msra.mxu0 0
        %1109 = vmatprep.subr.bf16.mxu0 0
        %1110 = vmatpush1.bf16.msra.mxu0 0
        %1111 = vmatprep.subr.bf16.mxu0 0
        %1112 = vmatpush1.bf16.msra.mxu0 0
        %1113 = vmatprep.subr.bf16.mxu0 0
        %1114 = vmatpush1.bf16.msra.mxu0 0
        %1115 = vmatprep.subr.bf16.mxu0 0
        %1116 = vmatpush1.bf16.msra.mxu0 0
        %1117 = vmatprep.subr.bf16.mxu0 0
        %1118 = vmatpush1.bf16.msra.mxu0 0
        %1119 = vmatprep.subr.bf16.mxu0 0
        %1120 = vmatpush1.bf16.msra.mxu0 0
        %1121 = vmatprep.subr.bf16.mxu0 0
        %1122 = vmatpush1.bf16.msra.mxu0 0
        %1123 = vmatprep.mubr.bf16.mxu0 0
        %1124 = vmatmul.mubr.bf16.gmra.mrb[0].mxu0 %v1086
        %v1125 = vpop.f32.mrb[0].mxu0
        %v1126 = vadd.f32 0.0, %v1125
        %v1127 = vpop.f32.mrb[0].mxu0
        %v1128 = vpop.f32.mrb[0].mxu0
        %v1129 = vpop.f32.mrb[0].mxu0
        %1130 = vdwg.mxu0
        %1131 = vrot.lane.b32.xlu0 %v578, 108
        %v1132 = vpop.permute.xlu0 %1131
        %1133 = vrot.lane.b32.xlu0 %v578, 76
        %v1134 = vpop.permute.xlu0 %1133
        %v1136 = vsel %vm582, %v1132, 0
        %v1139 = vsel %vm582, %v1134, 0
        %1141 = vmatprep.subr.bf16.mxu0 0
        %1142 = vmatpush1.bf16.xpose.msra.mxu0 %v1139
        %1143 = vmatprep.subr.bf16.mxu0 0
        %1144 = vmatpush1.bf16.xpose.msra.mxu0 0
        %1145 = vmatprep.subr.bf16.mxu0 0
        %1146 = vmatpush1.bf16.xpose.msra.mxu0 0
        %1147 = vmatprep.subr.bf16.mxu0 0
        %1148 = vmatpush1.bf16.xpose.msra.mxu0 0
        %1149 = vmatprep.subr.bf16.mxu0 0
        %1150 = vmatpush1.bf16.xpose.msra.mxu0 0
        %1151 = vmatprep.subr.bf16.mxu0 0
        %1152 = vmatpush1.bf16.xpose.msra.mxu0 0
        %1153 = vmatprep.subr.bf16.mxu0 0
        %1154 = vmatpush1.bf16.xpose.msra.mxu0 0
        %1155 = vmatprep.subr.bf16.mxu0 0
        %1156 = vmatpush1.bf16.xpose.msra.mxu0 0
        %1157 = vmatprep.subr.bf16.mxu0 0
        %1158 = vmatpush1.bf16.xpose.msra.mxu0 0
        %1159 = vmatprep.subr.bf16.mxu0 0
        %1160 = vmatpush1.bf16.xpose.msra.mxu0 0
        %1161 = vmatprep.subr.bf16.mxu0 0
        %1162 = vmatpush1.bf16.xpose.msra.mxu0 0
        %1163 = vmatprep.subr.bf16.mxu0 0
        %1164 = vmatpush1.bf16.xpose.msra.mxu0 0
        %1165 = vmatprep.subr.bf16.mxu0 0
        %1166 = vmatpush1.bf16.xpose.msra.mxu0 0
        %1167 = vmatprep.subr.bf16.mxu0 0
        %1168 = vmatpush1.bf16.xpose.msra.mxu0 0
        %1169 = vmatprep.subr.bf16.mxu0 0
        %1170 = vmatpush1.bf16.xpose.msra.mxu0 0
        %1171 = vmatprep.subr.bf16.mxu0 0
        %1172 = vmatpush1.bf16.xpose.msra.mxu0 0
        %1173 = vmatprep.mubr.bf16.mxu0 0
        %1174 = vmatmul.mubr.bf16.gmra.mrb[0].mxu0 %v1136
        %v1175 = vpop.f32.mrb[0].mxu0
        %v1176 = vadd.f32 0.0, %v1175
        %v1177 = vpop.f32.mrb[0].mxu0
        %v1178 = vpop.f32.mrb[0].mxu0
        %v1179 = vpop.f32.mrb[0].mxu0
        %1180 = vdwg.mxu0
        %v1181 = vsel %vm629, %v1176, -inf
        %1182 = vmax.xlane.f32.xlu0 %v1181
        %v1183 = vpop.xlane.xlu0 %1182
        %v1184 = vsub.f32 %v1176, %v1183
        %v1185 = vmul.f32 %v1184, 1.442695
        %v1186 = vpow.pop %v1185
        %v1187 = vsel %vm629, %v1186, 0.0
        %1188 = vadd.xlane.f32.xlu0 %v1187
        %v1189 = vpop.xlane.xlu0 %1188
        %v1190 = vrcp.pop %v1189
        %v1191 = vmul.f32 %v1186, %v1190
        %v1192 = vpack.c.bf16 %v1191, %v1191
        %1193 = vrot.lane.b32.xlu0 %v578, 44
        %v1194 = vpop.permute.xlu0 %1193
        %v1196 = vsel %vm629, %v1192, 0
        %v1199 = vsel %vm647, %v1194, 0
        %1201 = vmatprep.subr.bf16.mxu0 0
        %1202 = vmatpush1.bf16.msra.mxu0 %v1199
        %1203 = vmatprep.subr.bf16.mxu0 0
        %1204 = vmatpush1.bf16.msra.mxu0 0
        %1205 = vmatprep.subr.bf16.mxu0 0
        %1206 = vmatpush1.bf16.msra.mxu0 0
        %1207 = vmatprep.subr.bf16.mxu0 0
        %1208 = vmatpush1.bf16.msra.mxu0 0
        %1209 = vmatprep.subr.bf16.mxu0 0
        %1210 = vmatpush1.bf16.msra.mxu0 0
        %1211 = vmatprep.subr.bf16.mxu0 0
        %1212 = vmatpush1.bf16.msra.mxu0 0
        %1213 = vmatprep.subr.bf16.mxu0 0
        %1214 = vmatpush1.bf16.msra.mxu0 0
        %1215 = vmatprep.subr.bf16.mxu0 0
        %1216 = vmatpush1.bf16.msra.mxu0 0
        %1217 = vmatprep.subr.bf16.mxu0 0
        %1218 = vmatpush1.bf16.msra.mxu0 0
        %1219 = vmatprep.subr.bf16.mxu0 0
        %1220 = vmatpush1.bf16.msra.mxu0 0
        %1221 = vmatprep.subr.bf16.mxu0 0
        %1222 = vmatpush1.bf16.msra.mxu0 0
        %1223 = vmatprep.subr.bf16.mxu0 0
        %1224 = vmatpush1.bf16.msra.mxu0 0
        %1225 = vmatprep.subr.bf16.mxu0 0
        %1226 = vmatpush1.bf16.msra.mxu0 0
        %1227 = vmatprep.subr.bf16.mxu0 0
        %1228 = vmatpush1.bf16.msra.mxu0 0
        %1229 = vmatprep.subr.bf16.mxu0 0
        %1230 = vmatpush1.bf16.msra.mxu0 0
        %1231 = vmatprep.subr.bf16.mxu0 0
        %1232 = vmatpush1.bf16.msra.mxu0 0
        %1233 = vmatprep.mubr.bf16.mxu0 0
        %1234 = vmatmul.mubr.bf16.gmra.mrb[0].mxu0 %v1196
        %v1235 = vpop.f32.mrb[0].mxu0
        %v1236 = vadd.f32 0.0, %v1235
        %v1237 = vpop.f32.mrb[0].mxu0
        %v1238 = vpop.f32.mrb[0].mxu0
        %v1239 = vpop.f32.mrb[0].mxu0
        %1240 = vdwg.mxu0
        %1241 = vrot.lane.b32.xlu0 %v578, 104
        %v1242 = vpop.permute.xlu0 %1241
        %1243 = vrot.lane.b32.xlu0 %v578, 72
        %v1244 = vpop.permute.xlu0 %1243
        %v1246 = vsel %vm582, %v1242, 0
        %v1249 = vsel %vm582, %v1244, 0
        %1251 = vmatprep.subr.bf16.mxu0 0
        %1252 = vmatpush1.bf16.xpose.msra.mxu0 %v1249
        %1253 = vmatprep.subr.bf16.mxu0 0
        %1254 = vmatpush1.bf16.xpose.msra.mxu0 0
        %1255 = vmatprep.subr.bf16.mxu0 0
        %1256 = vmatpush1.bf16.xpose.msra.mxu0 0
        %1257 = vmatprep.subr.bf16.mxu0 0
        %1258 = vmatpush1.bf16.xpose.msra.mxu0 0
        %1259 = vmatprep.subr.bf16.mxu0 0
        %1260 = vmatpush1.bf16.xpose.msra.mxu0 0
        %1261 = vmatprep.subr.bf16.mxu0 0
        %1262 = vmatpush1.bf16.xpose.msra.mxu0 0
        %1263 = vmatprep.subr.bf16.mxu0 0
        %1264 = vmatpush1.bf16.xpose.msra.mxu0 0
        %1265 = vmatprep.subr.bf16.mxu0 0
        %1266 = vmatpush1.bf16.xpose.msra.mxu0 0
        %1267 = vmatprep.subr.bf16.mxu0 0
        %1268 = vmatpush1.bf16.xpose.msra.mxu0 0
        %1269 = vmatprep.subr.bf16.mxu0 0
        %1270 = vmatpush1.bf16.xpose.msra.mxu0 0
        %1271 = vmatprep.subr.bf16.mxu0 0
        %1272 = vmatpush1.bf16.xpose.msra.mxu0 0
        %1273 = vmatprep.subr.bf16.mxu0 0
        %1274 = vmatpush1.bf16.xpose.msra.mxu0 0
        %1275 = vmatprep.subr.bf16.mxu0 0
        %1276 = vmatpush1.bf16.xpose.msra.mxu0 0
        %1277 = vmatprep.subr.bf16.mxu0 0
        %1278 = vmatpush1.bf16.xpose.msra.mxu0 0
        %1279 = vmatprep.subr.bf16.mxu0 0
        %1280 = vmatpush1.bf16.xpose.msra.mxu0 0
        %1281 = vmatprep.subr.bf16.mxu0 0
        %1282 = vmatpush1.bf16.xpose.msra.mxu0 0
        %1283 = vmatprep.mubr.bf16.mxu0 0
        %1284 = vmatmul.mubr.bf16.gmra.mrb[0].mxu0 %v1246
        %v1285 = vpop.f32.mrb[0].mxu0
        %v1286 = vadd.f32 0.0, %v1285
        %v1287 = vpop.f32.mrb[0].mxu0
        %v1288 = vpop.f32.mrb[0].mxu0
        %v1289 = vpop.f32.mrb[0].mxu0
        %1290 = vdwg.mxu0
        %v1291 = vsel %vm629, %v1286, -inf
        %1292 = vmax.xlane.f32.xlu0 %v1291
        %v1293 = vpop.xlane.xlu0 %1292
        %v1294 = vsub.f32 %v1286, %v1293
        %v1295 = vmul.f32 %v1294, 1.442695
        %v1296 = vpow.pop %v1295
        %v1297 = vsel %vm629, %v1296, 0.0
        %1298 = vadd.xlane.f32.xlu0 %v1297
        %v1299 = vpop.xlane.xlu0 %1298
        %v1300 = vrcp.pop %v1299
        %v1301 = vmul.f32 %v1296, %v1300
        %v1302 = vpack.c.bf16 %v1301, %v1301
        %1303 = vrot.lane.b32.xlu0 %v578, 40
        %v1304 = vpop.permute.xlu0 %1303
        %v1306 = vsel %vm629, %v1302, 0
        %v1309 = vsel %vm647, %v1304, 0
        %1311 = vmatprep.subr.bf16.mxu0 0
        %1312 = vmatpush1.bf16.msra.mxu0 %v1309
        %1313 = vmatprep.subr.bf16.mxu0 0
        %1314 = vmatpush1.bf16.msra.mxu0 0
        %1315 = vmatprep.subr.bf16.mxu0 0
        %1316 = vmatpush1.bf16.msra.mxu0 0
        %1317 = vmatprep.subr.bf16.mxu0 0
        %1318 = vmatpush1.bf16.msra.mxu0 0
        %1319 = vmatprep.subr.bf16.mxu0 0
        %1320 = vmatpush1.bf16.msra.mxu0 0
        %1321 = vmatprep.subr.bf16.mxu0 0
        %1322 = vmatpush1.bf16.msra.mxu0 0
        %1323 = vmatprep.subr.bf16.mxu0 0
        %1324 = vmatpush1.bf16.msra.mxu0 0
        %1325 = vmatprep.subr.bf16.mxu0 0
        %1326 = vmatpush1.bf16.msra.mxu0 0
        %1327 = vmatprep.subr.bf16.mxu0 0
        %1328 = vmatpush1.bf16.msra.mxu0 0
        %1329 = vmatprep.subr.bf16.mxu0 0
        %1330 = vmatpush1.bf16.msra.mxu0 0
        %1331 = vmatprep.subr.bf16.mxu0 0
        %1332 = vmatpush1.bf16.msra.mxu0 0
        %1333 = vmatprep.subr.bf16.mxu0 0
        %1334 = vmatpush1.bf16.msra.mxu0 0
        %1335 = vmatprep.subr.bf16.mxu0 0
        %1336 = vmatpush1.bf16.msra.mxu0 0
        %1337 = vmatprep.subr.bf16.mxu0 0
        %1338 = vmatpush1.bf16.msra.mxu0 0
        %1339 = vmatprep.subr.bf16.mxu0 0
        %1340 = vmatpush1.bf16.msra.mxu0 0
        %1341 = vmatprep.subr.bf16.mxu0 0
        %1342 = vmatpush1.bf16.msra.mxu0 0
        %1343 = vmatprep.mubr.bf16.mxu0 0
        %1344 = vmatmul.mubr.bf16.gmra.mrb[0].mxu0 %v1306
        %v1345 = vpop.f32.mrb[0].mxu0
        %v1346 = vadd.f32 0.0, %v1345
        %v1347 = vpop.f32.mrb[0].mxu0
        %v1348 = vpop.f32.mrb[0].mxu0
        %v1349 = vpop.f32.mrb[0].mxu0
        %1350 = vdwg.mxu0
        %1351 = vrot.lane.b32.xlu0 %v578, 100
        %v1352 = vpop.permute.xlu0 %1351
        %1353 = vrot.lane.b32.xlu0 %v578, 68
        %v1354 = vpop.permute.xlu0 %1353
        %v1356 = vsel %vm582, %v1352, 0
        %v1359 = vsel %vm582, %v1354, 0
        %1361 = vmatprep.subr.bf16.mxu0 0
        %1362 = vmatpush1.bf16.xpose.msra.mxu0 %v1359
        %1363 = vmatprep.subr.bf16.mxu0 0
        %1364 = vmatpush1.bf16.xpose.msra.mxu0 0
        %1365 = vmatprep.subr.bf16.mxu0 0
        %1366 = vmatpush1.bf16.xpose.msra.mxu0 0
        %1367 = vmatprep.subr.bf16.mxu0 0
        %1368 = vmatpush1.bf16.xpose.msra.mxu0 0
        %1369 = vmatprep.subr.bf16.mxu0 0
        %1370 = vmatpush1.bf16.xpose.msra.mxu0 0
        %1371 = vmatprep.subr.bf16.mxu0 0
        %1372 = vmatpush1.bf16.xpose.msra.mxu0 0
        %1373 = vmatprep.subr.bf16.mxu0 0
        %1374 = vmatpush1.bf16.xpose.msra.mxu0 0
        %1375 = vmatprep.subr.bf16.mxu0 0
        %1376 = vmatpush1.bf16.xpose.msra.mxu0 0
        %1377 = vmatprep.subr.bf16.mxu0 0
        %1378 = vmatpush1.bf16.xpose.msra.mxu0 0
        %1379 = vmatprep.subr.bf16.mxu0 0
        %1380 = vmatpush1.bf16.xpose.msra.mxu0 0
        %1381 = vmatprep.subr.bf16.mxu0 0
        %1382 = vmatpush1.bf16.xpose.msra.mxu0 0
        %1383 = vmatprep.subr.bf16.mxu0 0
        %1384 = vmatpush1.bf16.xpose.msra.mxu0 0
        %1385 = vmatprep.subr.bf16.mxu0 0
        %1386 = vmatpush1.bf16.xpose.msra.mxu0 0
        %1387 = vmatprep.subr.bf16.mxu0 0
        %1388 = vmatpush1.bf16.xpose.msra.mxu0 0
        %1389 = vmatprep.subr.bf16.mxu0 0
        %1390 = vmatpush1.bf16.xpose.msra.mxu0 0
        %1391 = vmatprep.subr.bf16.mxu0 0
        %1392 = vmatpush1.bf16.xpose.msra.mxu0 0
        %1393 = vmatprep.mubr.bf16.mxu0 0
        %1394 = vmatmul.mubr.bf16.gmra.mrb[0].mxu0 %v1356
        %v1395 = vpop.f32.mrb[0].mxu0
        %v1396 = vadd.f32 0.0, %v1395
        %v1397 = vpop.f32.mrb[0].mxu0
        %v1398 = vpop.f32.mrb[0].mxu0
        %v1399 = vpop.f32.mrb[0].mxu0
        %1400 = vdwg.mxu0
        %v1401 = vsel %vm629, %v1396, -inf
        %1402 = vmax.xlane.f32.xlu0 %v1401
        %v1403 = vpop.xlane.xlu0 %1402
        %v1404 = vsub.f32 %v1396, %v1403
        %v1405 = vmul.f32 %v1404, 1.442695
        %v1406 = vpow.pop %v1405
        %v1407 = vsel %vm629, %v1406, 0.0
        %1408 = vadd.xlane.f32.xlu0 %v1407
        %v1409 = vpop.xlane.xlu0 %1408
        %v1410 = vrcp.pop %v1409
        %v1411 = vmul.f32 %v1406, %v1410
        %v1412 = vpack.c.bf16 %v1411, %v1411
        %1413 = vrot.lane.b32.xlu0 %v578, 36
        %v1414 = vpop.permute.xlu0 %1413
        %v1416 = vsel %vm629, %v1412, 0
        %v1419 = vsel %vm647, %v1414, 0
        %1421 = vmatprep.subr.bf16.mxu0 0
        %1422 = vmatpush1.bf16.msra.mxu0 %v1419
        %1423 = vmatprep.subr.bf16.mxu0 0
        %1424 = vmatpush1.bf16.msra.mxu0 0
        %1425 = vmatprep.subr.bf16.mxu0 0
        %1426 = vmatpush1.bf16.msra.mxu0 0
        %1427 = vmatprep.subr.bf16.mxu0 0
        %1428 = vmatpush1.bf16.msra.mxu0 0
        %1429 = vmatprep.subr.bf16.mxu0 0
        %1430 = vmatpush1.bf16.msra.mxu0 0
        %1431 = vmatprep.subr.bf16.mxu0 0
        %1432 = vmatpush1.bf16.msra.mxu0 0
        %1433 = vmatprep.subr.bf16.mxu0 0
        %1434 = vmatpush1.bf16.msra.mxu0 0
        %1435 = vmatprep.subr.bf16.mxu0 0
        %1436 = vmatpush1.bf16.msra.mxu0 0
        %1437 = vmatprep.subr.bf16.mxu0 0
        %1438 = vmatpush1.bf16.msra.mxu0 0
        %1439 = vmatprep.subr.bf16.mxu0 0
        %1440 = vmatpush1.bf16.msra.mxu0 0
        %1441 = vmatprep.subr.bf16.mxu0 0
        %1442 = vmatpush1.bf16.msra.mxu0 0
        %1443 = vmatprep.subr.bf16.mxu0 0
        %1444 = vmatpush1.bf16.msra.mxu0 0
        %1445 = vmatprep.subr.bf16.mxu0 0
        %1446 = vmatpush1.bf16.msra.mxu0 0
        %1447 = vmatprep.subr.bf16.mxu0 0
        %1448 = vmatpush1.bf16.msra.mxu0 0
        %1449 = vmatprep.subr.bf16.mxu0 0
        %1450 = vmatpush1.bf16.msra.mxu0 0
        %1451 = vmatprep.subr.bf16.mxu0 0
        %1452 = vmatpush1.bf16.msra.mxu0 0
        %1453 = vmatprep.mubr.bf16.mxu0 0
        %1454 = vmatmul.mubr.bf16.gmra.mrb[0].mxu0 %v1416
        %v1455 = vpop.f32.mrb[0].mxu0
        %v1456 = vadd.f32 0.0, %v1455
        %v1457 = vpop.f32.mrb[0].mxu0
        %v1458 = vpop.f32.mrb[0].mxu0
        %v1459 = vpop.f32.mrb[0].mxu0
        %1460 = vdwg.mxu0
        %1462 = vrot.lane.b32.xlu0 %v796, 4
        %v1463 = vpop.permute.xlu0 %1462
        %1466 = vrot.lane.b32.xlu0 %v906, 8
        %v1467 = vpop.permute.xlu0 %1466
        %1470 = vrot.lane.b32.xlu0 %v1016, 12
        %v1471 = vpop.permute.xlu0 %1470
        %1474 = vrot.lane.b32.xlu0 %v1126, 16
        %v1475 = vpop.permute.xlu0 %1474
        %1478 = vrot.lane.b32.xlu0 %v1236, 20
        %v1479 = vpop.permute.xlu0 %1478
        %1482 = vrot.lane.b32.xlu0 %v1346, 24
        %v1483 = vpop.permute.xlu0 %1482
        %1486 = vrot.lane.b32.xlu0 %v1456, 28
        %v1487 = vpop.permute.xlu0 %1486
        %v1489 = vsel %vm582, %v686, %v1463
        %v1490 = vsel %vm629, %v1489, %v1467
        %vm1491 = vcmask 97280
        %v1492 = vsel %vm1491, %v1490, %v1471
        %vm1493 = vcmask 130048
        %v1494 = vsel %vm1493, %v1492, %v1475
        %vm1495 = vcmask 162816
        %v1496 = vsel %vm1495, %v1494, %v1479
        %vm1497 = vcmask 195584
        %v1498 = vsel %vm1497, %v1496, %v1483
        %vm1499 = vcmask 228352
        %v1500 = vsel %vm1499, %v1498, %v1487
        %v1501 = vld [vmem:[%s4] sm:$0xff]
        %v1502 = vld [vmem:[%s4 + $0x8] sm:$0xff]
        %v1503 = vld [vmem:[%s4 + $0x10] sm:$0xff]
        %v1504 = vld [vmem:[%s4 + $0x18] sm:$0xff]
        %v1505 = vld [vmem:[%s5] sm:$0x1]
        %v1506 = vpack.c.bf16 %v1500, %v1500
        %v1507 = vpack.c.bf16 %v1502, %v1501
        %v1508 = vpack.c.bf16 %v1504, %v1503
        %v1510 = vlaneseq
        %v1511 = vshrl.u32 %v1510, 7
        %v1512 = vsub.s32 0, %v1511
        %v1513 = vrot.slane %v1505, %v1512
        %v1516 = vsel %vm534, %v1506, 0
        %1518 = vmatprep.subr.bf16.mxu0 0
        %1519 = vmatpush1.bf16.msra.mxu0 %v1507
        %1520 = vmatprep.subr.bf16.mxu0 0
        %1521 = vmatpush1.bf16.msra.mxu0 %v1508
        %1522 = vmatprep.subr.bf16.mxu0 0
        %1523 = vmatpush1.bf16.msra.mxu0 0
        %1524 = vmatprep.subr.bf16.mxu0 0
        %1525 = vmatpush1.bf16.msra.mxu0 0
        %1526 = vmatprep.subr.bf16.mxu0 0
        %1527 = vmatpush1.bf16.msra.mxu0 0
        %1528 = vmatprep.subr.bf16.mxu0 0
        %1529 = vmatpush1.bf16.msra.mxu0 0
        %1530 = vmatprep.subr.bf16.mxu0 0
        %1531 = vmatpush1.bf16.msra.mxu0 0
        %1532 = vmatprep.subr.bf16.mxu0 0
        %1533 = vmatpush1.bf16.msra.mxu0 0
        %1534 = vmatprep.subr.bf16.mxu0 0
        %1535 = vmatpush1.bf16.msra.mxu0 0
        %1536 = vmatprep.subr.bf16.mxu0 0
        %1537 = vmatpush1.bf16.msra.mxu0 0
        %1538 = vmatprep.subr.bf16.mxu0 0
        %1539 = vmatpush1.bf16.msra.mxu0 0
        %1540 = vmatprep.subr.bf16.mxu0 0
        %1541 = vmatpush1.bf16.msra.mxu0 0
        %1542 = vmatprep.subr.bf16.mxu0 0
        %1543 = vmatpush1.bf16.msra.mxu0 0
        %1544 = vmatprep.subr.bf16.mxu0 0
        %1545 = vmatpush1.bf16.msra.mxu0 0
        %1546 = vmatprep.subr.bf16.mxu0 0
        %1547 = vmatpush1.bf16.msra.mxu0 0
        %1548 = vmatprep.subr.bf16.mxu0 0
        %1549 = vmatpush1.bf16.msra.mxu0 0
        %1550 = vmatprep.mubr.bf16.mxu0 0
        %1551 = vmatmul.mubr.bf16.gmra.mrb[0].mxu0 %v1516
        %v1552 = vpop.f32.mrb[0].mxu0
        %v1553 = vadd.f32 %v1513, %v1552
        %v1554 = vpop.f32.mrb[0].mxu0
        %v1555 = vpop.f32.mrb[0].mxu0
        %v1556 = vpop.f32.mrb[0].mxu0
        %1557 = vdwg.mxu0
        %v1558 = vadd.f32 %v519, %v1553
        %v1559 = vld [vmem:[%s10] sm:$0x1]
        %v1560 = vld [vmem:[%s11] sm:$0x1]
        %v1561 = vsel %vm534, %v1558, 0.0
        %1562 = vadd.xlane.f32.xlu0 %v1561
        %v1563 = vpop.xlane.xlu0 %1562
        %v1564 = vrcp.pop 32.0
        %v1565 = vmul.f32 %v1563, %v1564
        %v1566 = vsub.f32 %v1558, %v1565
        %v1567 = vmul.f32 %v1566, %v1566
        %v1568 = vsel %vm534, %v1567, 0.0
        %1569 = vadd.xlane.f32.xlu0 %v1568
        %v1570 = vpop.xlane.xlu0 %1569
        %v1571 = vmul.f32 %v1570, %v1564
        %v1572 = vadd.f32 %v1571, 1e-05
        %v1573 = vrsqrt.pop %v1572
        %v1574 = vmul.f32 %v1566, %v1573
        %v1576 = vlaneseq
        %v1577 = vshrl.u32 %v1576, 7
        %v1578 = vsub.s32 0, %v1577
        %v1579 = vrot.slane %v1559, %v1578
        %v1581 = vmul.f32 %v1574, %v1579
        %v1583 = vlaneseq
        %v1584 = vshrl.u32 %v1583, 7
        %v1585 = vsub.s32 0, %v1584
        %v1586 = vrot.slane %v1560, %v1585
        %v1588 = vadd.f32 %v1581, %v1586
        %v1589 = vld [vmem:[%s6] sm:$0xff]
        %v1590 = vld [vmem:[%s6 + $0x8] sm:$0xff]
        %v1591 = vld [vmem:[%s6 + $0x10] sm:$0xff]
        %v1592 = vld [vmem:[%s6 + $0x18] sm:$0xff]
        %v1593 = vld [vmem:[%s7] sm:$0x1]
        %v1594 = vpack.c.bf16 %v1588, %v1588
        %v1595 = vpack.c.bf16 %v1590, %v1589
        %v1596 = vpack.c.bf16 %v1592, %v1591
        %v1598 = vlaneseq
        %v1599 = vshrl.u32 %v1598, 7
        %v1600 = vsub.s32 0, %v1599
        %v1601 = vrot.slane %v1593, %v1600
        %v1604 = vsel %vm534, %v1594, 0
        %1606 = vmatprep.subr.bf16.mxu0 0
        %1607 = vmatpush1.bf16.msra.mxu0 %v1595
        %1608 = vmatprep.subr.bf16.mxu0 0
        %1609 = vmatpush1.bf16.msra.mxu0 %v1596
        %1610 = vmatprep.subr.bf16.mxu0 0
        %1611 = vmatpush1.bf16.msra.mxu0 0
        %1612 = vmatprep.subr.bf16.mxu0 0
        %1613 = vmatpush1.bf16.msra.mxu0 0
        %1614 = vmatprep.subr.bf16.mxu0 0
        %1615 = vmatpush1.bf16.msra.mxu0 0
        %1616 = vmatprep.subr.bf16.mxu0 0
        %1617 = vmatpush1.bf16.msra.mxu0 0
        %1618 = vmatprep.subr.bf16.mxu0 0
        %1619 = vmatpush1.bf16.msra.mxu0 0
        %1620 = vmatprep.subr.bf16.mxu0 0
        %1621 = vmatpush1.bf16.msra.mxu0 0
        %1622 = vmatprep.subr.bf16.mxu0 0
        %1623 = vmatpush1.bf16.msra.mxu0 0
        %1624 = vmatprep.subr.bf16.mxu0 0
        %1625 = vmatpush1.bf16.msra.mxu0 0
        %1626 = vmatprep.subr.bf16.mxu0 0
        %1627 = vmatpush1.bf16.msra.mxu0 0
        %1628 = vmatprep.subr.bf16.mxu0 0
        %1629 = vmatpush1.bf16.msra.mxu0 0
        %1630 = vmatprep.subr.bf16.mxu0 0
        %1631 = vmatpush1.bf16.msra.mxu0 0
        %1632 = vmatprep.subr.bf16.mxu0 0
        %1633 = vmatpush1.bf16.msra.mxu0 0
        %1634 = vmatprep.subr.bf16.mxu0 0
        %1635 = vmatpush1.bf16.msra.mxu0 0
        %1636 = vmatprep.subr.bf16.mxu0 0
        %1637 = vmatpush1.bf16.msra.mxu0 0
        %1638 = vmatprep.mubr.bf16.mxu0 0
        %1639 = vmatmul.mubr.bf16.gmra.mrb[0].mxu0 %v1604
        %v1640 = vpop.f32.mrb[0].mxu0
        %v1641 = vadd.f32 %v1601, %v1640
        %v1642 = vpop.f32.mrb[0].mxu0
        %v1643 = vpop.f32.mrb[0].mxu0
        %v1644 = vpop.f32.mrb[0].mxu0
        %1645 = vdwg.mxu0
        %v1646 = vmax.f32 %v1641, 0.0
        %v1647 = vld [vmem:[%s8] sm:$0xff]
        %v1648 = vld [vmem:[%s8 + $0x8] sm:$0xff]
        %v1649 = vld [vmem:[%s8 + $0x10] sm:$0xff]
        %v1650 = vld [vmem:[%s8 + $0x18] sm:$0xff]
        %v1651 = vld [vmem:[%s8 + $0x20] sm:$0xff]
        %v1652 = vld [vmem:[%s8 + $0x28] sm:$0xff]
        %v1653 = vld [vmem:[%s8 + $0x30] sm:$0xff]
        %v1654 = vld [vmem:[%s8 + $0x38] sm:$0xff]
        %v1655 = vld [vmem:[%s8 + $0x40] sm:$0xff]
        %v1656 = vld [vmem:[%s8 + $0x48] sm:$0xff]
        %v1657 = vld [vmem:[%s8 + $0x50] sm:$0xff]
        %v1658 = vld [vmem:[%s8 + $0x58] sm:$0xff]
        %v1659 = vld [vmem:[%s8 + $0x60] sm:$0xff]
        %v1660 = vld [vmem:[%s8 + $0x68] sm:$0xff]
        %v1661 = vld [vmem:[%s8 + $0x70] sm:$0xff]
        %v1662 = vld [vmem:[%s8 + $0x78] sm:$0xff]
        %v1663 = vld [vmem:[%s9] sm:$0x1]
        %v1664 = vpack.c.bf16 %v1646, %v1646
        %v1665 = vpack.c.bf16 %v1648, %v1647
        %v1666 = vpack.c.bf16 %v1650, %v1649
        %v1667 = vpack.c.bf16 %v1652, %v1651
        %v1668 = vpack.c.bf16 %v1654, %v1653
        %v1669 = vpack.c.bf16 %v1656, %v1655
        %v1670 = vpack.c.bf16 %v1658, %v1657
        %v1671 = vpack.c.bf16 %v1660, %v1659
        %v1672 = vpack.c.bf16 %v1662, %v1661
        %v1674 = vlaneseq
        %v1675 = vshrl.u32 %v1674, 7
        %v1676 = vsub.s32 0, %v1675
        %v1677 = vrot.slane %v1663, %v1676
        %1679 = vmatprep.subr.bf16.mxu0 0
        %1680 = vmatpush1.bf16.msra.mxu0 %v1665
        %1681 = vmatprep.subr.bf16.mxu0 0
        %1682 = vmatpush1.bf16.msra.mxu0 %v1666
        %1683 = vmatprep.subr.bf16.mxu0 0
        %1684 = vmatpush1.bf16.msra.mxu0 %v1667
        %1685 = vmatprep.subr.bf16.mxu0 0
        %1686 = vmatpush1.bf16.msra.mxu0 %v1668
        %1687 = vmatprep.subr.bf16.mxu0 0
        %1688 = vmatpush1.bf16.msra.mxu0 %v1669
        %1689 = vmatprep.subr.bf16.mxu0 0
        %1690 = vmatpush1.bf16.msra.mxu0 %v1670
        %1691 = vmatprep.subr.bf16.mxu0 0
        %1692 = vmatpush1.bf16.msra.mxu0 %v1671
        %1693 = vmatprep.subr.bf16.mxu0 0
        %1694 = vmatpush1.bf16.msra.mxu0 %v1672
        %1695 = vmatprep.subr.bf16.mxu0 0
        %1696 = vmatpush1.bf16.msra.mxu0 0
        %1697 = vmatprep.subr.bf16.mxu0 0
        %1698 = vmatpush1.bf16.msra.mxu0 0
        %1699 = vmatprep.subr.bf16.mxu0 0
        %1700 = vmatpush1.bf16.msra.mxu0 0
        %1701 = vmatprep.subr.bf16.mxu0 0
        %1702 = vmatpush1.bf16.msra.mxu0 0
        %1703 = vmatprep.subr.bf16.mxu0 0
        %1704 = vmatpush1.bf16.msra.mxu0 0
        %1705 = vmatprep.subr.bf16.mxu0 0
        %1706 = vmatpush1.bf16.msra.mxu0 0
        %1707 = vmatprep.subr.bf16.mxu0 0
        %1708 = vmatpush1.bf16.msra.mxu0 0
        %1709 = vmatprep.subr.bf16.mxu0 0
        %1710 = vmatpush1.bf16.msra.mxu0 0
        %1711 = vmatprep.mubr.bf16.mxu0 0
        %1712 = vmatmul.mubr.bf16.gmra.mrb[0].mxu0 %v1664
        %v1713 = vpop.f32.mrb[0].mxu0
        %v1714 = vadd.f32 %v1677, %v1713
        %v1715 = vpop.f32.mrb[0].mxu0
        %v1716 = vpop.f32.mrb[0].mxu0
        %v1717 = vpop.f32.mrb[0].mxu0
        %1718 = vdwg.mxu0
        %v1719 = vadd.f32 %v1588, %v1714
        %v1720 = vld [vmem:[%s12] sm:$0x1]
        %v1721 = vld [vmem:[%s13] sm:$0x1]
        %v1722 = vsel %vm534, %v1719, 0.0
        %1723 = vadd.xlane.f32.xlu0 %v1722
        %v1724 = vpop.xlane.xlu0 %1723
        %v1725 = vmul.f32 %v1724, %v1564
        %v1726 = vsub.f32 %v1719, %v1725
        %v1727 = vmul.f32 %v1726, %v1726
        %v1728 = vsel %vm534, %v1727, 0.0
        %1729 = vadd.xlane.f32.xlu0 %v1728
        %v1730 = vpop.xlane.xlu0 %1729
        %v1731 = vmul.f32 %v1730, %v1564
        %v1732 = vadd.f32 %v1731, 1e-05
        %v1733 = vrsqrt.pop %v1732
        %v1734 = vmul.f32 %v1726, %v1733
        %v1736 = vlaneseq
        %v1737 = vshrl.u32 %v1736, 7
        %v1738 = vsub.s32 0, %v1737
        %v1739 = vrot.slane %v1720, %v1738
        %v1741 = vmul.f32 %v1734, %v1739
        %v1743 = vlaneseq
        %v1744 = vshrl.u32 %v1743, 7
        %v1745 = vsub.s32 0, %v1744
        %v1746 = vrot.slane %v1721, %v1745
        %v1748 = vadd.f32 %v1741, %v1746
        %s1749 = scalar_lea.vmem %s2, 32
        %v1750 = vld [vmem:[%s1749] sm:$0xff]
        %v1751 = vld [vmem:[%s1749 + $0x8] sm:$0xff]
        %v1752 = vld [vmem:[%s1749 + $0x10] sm:$0xff]
        %v1753 = vld [vmem:[%s1749 + $0x18] sm:$0xff]
        %s1754 = scalar_lea.vmem %s3, 1
        %v1755 = vld [vmem:[%s1754] sm:$0x1]
        %v1756 = vpack.c.bf16 %v1748, %v1748
        %v1757 = vpack.c.bf16 %v1751, %v1750
        %v1758 = vpack.c.bf16 %v1753, %v1752
        %v1760 = vlaneseq
        %v1761 = vshrl.u32 %v1760, 7
        %v1762 = vsub.s32 0, %v1761
        %v1763 = vrot.slane %v1755, %v1762
        %v1766 = vsel %vm534, %v1756, 0
        %1768 = vmatprep.subr.bf16.mxu0 0
        %1769 = vmatpush1.bf16.msra.mxu0 %v1757
        %1770 = vmatprep.subr.bf16.mxu0 0
        %1771 = vmatpush1.bf16.msra.mxu0 %v1758
        %1772 = vmatprep.subr.bf16.mxu0 0
        %1773 = vmatpush1.bf16.msra.mxu0 0
        %1774 = vmatprep.subr.bf16.mxu0 0
        %1775 = vmatpush1.bf16.msra.mxu0 0
        %1776 = vmatprep.subr.bf16.mxu0 0
        %1777 = vmatpush1.bf16.msra.mxu0 0
        %1778 = vmatprep.subr.bf16.mxu0 0
        %1779 = vmatpush1.bf16.msra.mxu0 0
        %1780 = vmatprep.subr.bf16.mxu0 0
        %1781 = vmatpush1.bf16.msra.mxu0 0
        %1782 = vmatprep.subr.bf16.mxu0 0
        %1783 = vmatpush1.bf16.msra.mxu0 0
        %1784 = vmatprep.subr.bf16.mxu0 0
        %1785 = vmatpush1.bf16.msra.mxu0 0
        %1786 = vmatprep.subr.bf16.mxu0 0
        %1787 = vmatpush1.bf16.msra.mxu0 0
        %1788 = vmatprep.subr.bf16.mxu0 0
        %1789 = vmatpush1.bf16.msra.mxu0 0
        %1790 = vmatprep.subr.bf16.mxu0 0
        %1791 = vmatpush1.bf16.msra.mxu0 0
        %1792 = vmatprep.subr.bf16.mxu0 0
        %1793 = vmatpush1.bf16.msra.mxu0 0
        %1794 = vmatprep.subr.bf16.mxu0 0
        %1795 = vmatpush1.bf16.msra.mxu0 0
        %1796 = vmatprep.subr.bf16.mxu0 0
        %1797 = vmatpush1.bf16.msra.mxu0 0
        %1798 = vmatprep.subr.bf16.mxu0 0
        %1799 = vmatpush1.bf16.msra.mxu0 0
        %1800 = vmatprep.mubr.bf16.mxu0 0
        %1801 = vmatmul.mubr.bf16.gmra.mrb[0].mxu0 %v1766
        %v1802 = vpop.f32.mrb[0].mxu0
        %v1803 = vadd.f32 %v1763, %v1802
        %v1804 = vpop.f32.mrb[0].mxu0
        %v1805 = vpop.f32.mrb[0].mxu0
        %v1806 = vpop.f32.mrb[0].mxu0
        %1807 = vdwg.mxu0
        %v1808 = vpack.c.bf16 %v1803, %v1803
        %1810 = vrot.lane.b32.xlu0 %v1808, 96
        %v1811 = vpop.permute.xlu0 %1810
        %v1813 = vsel %vm582, %v1808, 0
        %v1816 = vsel %vm582, %v1811, 0
        %1818 = vmatprep.subr.bf16.mxu0 0
        %1819 = vmatpush1.bf16.xpose.msra.mxu0 %v1816
        %1820 = vmatprep.subr.bf16.mxu0 0
        %1821 = vmatpush1.bf16.xpose.msra.mxu0 0
        %1822 = vmatprep.subr.bf16.mxu0 0
        %1823 = vmatpush1.bf16.xpose.msra.mxu0 0
        %1824 = vmatprep.subr.bf16.mxu0 0
        %1825 = vmatpush1.bf16.xpose.msra.mxu0 0
        %1826 = vmatprep.subr.bf16.mxu0 0
        %1827 = vmatpush1.bf16.xpose.msra.mxu0 0
        %1828 = vmatprep.subr.bf16.mxu0 0
        %1829 = vmatpush1.bf16.xpose.msra.mxu0 0
        %1830 = vmatprep.subr.bf16.mxu0 0
        %1831 = vmatpush1.bf16.xpose.msra.mxu0 0
        %1832 = vmatprep.subr.bf16.mxu0 0
        %1833 = vmatpush1.bf16.xpose.msra.mxu0 0
        %1834 = vmatprep.subr.bf16.mxu0 0
        %1835 = vmatpush1.bf16.xpose.msra.mxu0 0
        %1836 = vmatprep.subr.bf16.mxu0 0
        %1837 = vmatpush1.bf16.xpose.msra.mxu0 0
        %1838 = vmatprep.subr.bf16.mxu0 0
        %1839 = vmatpush1.bf16.xpose.msra.mxu0 0
        %1840 = vmatprep.subr.bf16.mxu0 0
        %1841 = vmatpush1.bf16.xpose.msra.mxu0 0
        %1842 = vmatprep.subr.bf16.mxu0 0
        %1843 = vmatpush1.bf16.xpose.msra.mxu0 0
        %1844 = vmatprep.subr.bf16.mxu0 0
        %1845 = vmatpush1.bf16.xpose.msra.mxu0 0
        %1846 = vmatprep.subr.bf16.mxu0 0
        %1847 = vmatpush1.bf16.xpose.msra.mxu0 0
        %1848 = vmatprep.subr.bf16.mxu0 0
        %1849 = vmatpush1.bf16.xpose.msra.mxu0 0
        %1850 = vmatprep.mubr.bf16.mxu0 0
        %1851 = vmatmul.mubr.bf16.gmra.mrb[0].mxu0 %v1813
        %v1852 = vpop.f32.mrb[0].mxu0
        %v1853 = vadd.f32 0.0, %v1852
        %v1854 = vpop.f32.mrb[0].mxu0
        %v1855 = vpop.f32.mrb[0].mxu0
        %v1856 = vpop.f32.mrb[0].mxu0
        %1857 = vdwg.mxu0
        %v1858 = vsel %vm629, %v1853, -inf
        %1859 = vmax.xlane.f32.xlu0 %v1858
        %v1860 = vpop.xlane.xlu0 %1859
        %v1861 = vsub.f32 %v1853, %v1860
        %v1862 = vmul.f32 %v1861, 1.442695
        %v1863 = vpow.pop %v1862
        %v1864 = vsel %vm629, %v1863, 0.0
        %1865 = vadd.xlane.f32.xlu0 %v1864
        %v1866 = vpop.xlane.xlu0 %1865
        %v1867 = vrcp.pop %v1866
        %v1868 = vmul.f32 %v1863, %v1867
        %v1869 = vpack.c.bf16 %v1868, %v1868
        %1870 = vrot.lane.b32.xlu0 %v1808, 64
        %v1871 = vpop.permute.xlu0 %1870
        %v1873 = vsel %vm629, %v1869, 0
        %v1876 = vsel %vm647, %v1871, 0
        %1878 = vmatprep.subr.bf16.mxu0 0
        %1879 = vmatpush1.bf16.msra.mxu0 %v1876
        %1880 = vmatprep.subr.bf16.mxu0 0
        %1881 = vmatpush1.bf16.msra.mxu0 0
        %1882 = vmatprep.subr.bf16.mxu0 0
        %1883 = vmatpush1.bf16.msra.mxu0 0
        %1884 = vmatprep.subr.bf16.mxu0 0
        %1885 = vmatpush1.bf16.msra.mxu0 0
        %1886 = vmatprep.subr.bf16.mxu0 0
        %1887 = vmatpush1.bf16.msra.mxu0 0
        %1888 = vmatprep.subr.bf16.mxu0 0
        %1889 = vmatpush1.bf16.msra.mxu0 0
        %1890 = vmatprep.subr.bf16.mxu0 0
        %1891 = vmatpush1.bf16.msra.mxu0 0
        %1892 = vmatprep.subr.bf16.mxu0 0
        %1893 = vmatpush1.bf16.msra.mxu0 0
        %1894 = vmatprep.subr.bf16.mxu0 0
        %1895 = vmatpush1.bf16.msra.mxu0 0
        %1896 = vmatprep.subr.bf16.mxu0 0
        %1897 = vmatpush1.bf16.msra.mxu0 0
        %1898 = vmatprep.subr.bf16.mxu0 0
        %1899 = vmatpush1.bf16.msra.mxu0 0
        %1900 = vmatprep.subr.bf16.mxu0 0
        %1901 = vmatpush1.bf16.msra.mxu0 0
        %1902 = vmatprep.subr.bf16.mxu0 0
        %1903 = vmatpush1.bf16.msra.mxu0 0
        %1904 = vmatprep.subr.bf16.mxu0 0
        %1905 = vmatpush1.bf16.msra.mxu0 0
        %1906 = vmatprep.subr.bf16.mxu0 0
        %1907 = vmatpush1.bf16.msra.mxu0 0
        %1908 = vmatprep.subr.bf16.mxu0 0
        %1909 = vmatpush1.bf16.msra.mxu0 0
        %1910 = vmatprep.mubr.bf16.mxu0 0
        %1911 = vmatmul.mubr.bf16.gmra.mrb[0].mxu0 %v1873
        %v1912 = vpop.f32.mrb[0].mxu0
        %v1913 = vadd.f32 0.0, %v1912
        %v1914 = vpop.f32.mrb[0].mxu0
        %v1915 = vpop.f32.mrb[0].mxu0
        %v1916 = vpop.f32.mrb[0].mxu0
        %1917 = vdwg.mxu0
        %1918 = vrot.lane.b32.xlu0 %v1808, 124
        %v1919 = vpop.permute.xlu0 %1918
        %1920 = vrot.lane.b32.xlu0 %v1808, 92
        %v1921 = vpop.permute.xlu0 %1920
        %v1923 = vsel %vm582, %v1919, 0
        %v1926 = vsel %vm582, %v1921, 0
        %1928 = vmatprep.subr.bf16.mxu0 0
        %1929 = vmatpush1.bf16.xpose.msra.mxu0 %v1926
        %1930 = vmatprep.subr.bf16.mxu0 0
        %1931 = vmatpush1.bf16.xpose.msra.mxu0 0
        %1932 = vmatprep.subr.bf16.mxu0 0
        %1933 = vmatpush1.bf16.xpose.msra.mxu0 0
        %1934 = vmatprep.subr.bf16.mxu0 0
        %1935 = vmatpush1.bf16.xpose.msra.mxu0 0
        %1936 = vmatprep.subr.bf16.mxu0 0
        %1937 = vmatpush1.bf16.xpose.msra.mxu0 0
        %1938 = vmatprep.subr.bf16.mxu0 0
        %1939 = vmatpush1.bf16.xpose.msra.mxu0 0
        %1940 = vmatprep.subr.bf16.mxu0 0
        %1941 = vmatpush1.bf16.xpose.msra.mxu0 0
        %1942 = vmatprep.subr.bf16.mxu0 0
        %1943 = vmatpush1.bf16.xpose.msra.mxu0 0
        %1944 = vmatprep.subr.bf16.mxu0 0
        %1945 = vmatpush1.bf16.xpose.msra.mxu0 0
        %1946 = vmatprep.subr.bf16.mxu0 0
        %1947 = vmatpush1.bf16.xpose.msra.mxu0 0
        %1948 = vmatprep.subr.bf16.mxu0 0
        %1949 = vmatpush1.bf16.xpose.msra.mxu0 0
        %1950 = vmatprep.subr.bf16.mxu0 0
        %1951 = vmatpush1.bf16.xpose.msra.mxu0 0
        %1952 = vmatprep.subr.bf16.mxu0 0
        %1953 = vmatpush1.bf16.xpose.msra.mxu0 0
        %1954 = vmatprep.subr.bf16.mxu0 0
        %1955 = vmatpush1.bf16.xpose.msra.mxu0 0
        %1956 = vmatprep.subr.bf16.mxu0 0
        %1957 = vmatpush1.bf16.xpose.msra.mxu0 0
        %1958 = vmatprep.subr.bf16.mxu0 0
        %1959 = vmatpush1.bf16.xpose.msra.mxu0 0
        %1960 = vmatprep.mubr.bf16.mxu0 0
        %1961 = vmatmul.mubr.bf16.gmra.mrb[0].mxu0 %v1923
        %v1962 = vpop.f32.mrb[0].mxu0
        %v1963 = vadd.f32 0.0, %v1962
        %v1964 = vpop.f32.mrb[0].mxu0
        %v1965 = vpop.f32.mrb[0].mxu0
        %v1966 = vpop.f32.mrb[0].mxu0
        %1967 = vdwg.mxu0
        %v1968 = vsel %vm629, %v1963, -inf
        %1969 = vmax.xlane.f32.xlu0 %v1968
        %v1970 = vpop.xlane.xlu0 %1969
        %v1971 = vsub.f32 %v1963, %v1970
        %v1972 = vmul.f32 %v1971, 1.442695
        %v1973 = vpow.pop %v1972
        %v1974 = vsel %vm629, %v1973, 0.0
        %1975 = vadd.xlane.f32.xlu0 %v1974
        %v1976 = vpop.xlane.xlu0 %1975
        %v1977 = vrcp.pop %v1976
        %v1978 = vmul.f32 %v1973, %v1977
        %v1979 = vpack.c.bf16 %v1978, %v1978
        %1980 = vrot.lane.b32.xlu0 %v1808, 60
        %v1981 = vpop.permute.xlu0 %1980
        %v1983 = vsel %vm629, %v1979, 0
        %v1986 = vsel %vm647, %v1981, 0
        %1988 = vmatprep.subr.bf16.mxu0 0
        %1989 = vmatpush1.bf16.msra.mxu0 %v1986
        %1990 = vmatprep.subr.bf16.mxu0 0
        %1991 = vmatpush1.bf16.msra.mxu0 0
        %1992 = vmatprep.subr.bf16.mxu0 0
        %1993 = vmatpush1.bf16.msra.mxu0 0
        %1994 = vmatprep.subr.bf16.mxu0 0
        %1995 = vmatpush1.bf16.msra.mxu0 0
        %1996 = vmatprep.subr.bf16.mxu0 0
        %1997 = vmatpush1.bf16.msra.mxu0 0
        %1998 = vmatprep.subr.bf16.mxu0 0
        %1999 = vmatpush1.bf16.msra.mxu0 0
        %2000 = vmatprep.subr.bf16.mxu0 0
        %2001 = vmatpush1.bf16.msra.mxu0 0
        %2002 = vmatprep.subr.bf16.mxu0 0
        %2003 = vmatpush1.bf16.msra.mxu0 0
        %2004 = vmatprep.subr.bf16.mxu0 0
        %2005 = vmatpush1.bf16.msra.mxu0 0
        %2006 = vmatprep.subr.bf16.mxu0 0
        %2007 = vmatpush1.bf16.msra.mxu0 0
        %2008 = vmatprep.subr.bf16.mxu0 0
        %2009 = vmatpush1.bf16.msra.mxu0 0
        %2010 = vmatprep.subr.bf16.mxu0 0
        %2011 = vmatpush1.bf16.msra.mxu0 0
        %2012 = vmatprep.subr.bf16.mxu0 0
        %2013 = vmatpush1.bf16.msra.mxu0 0
        %2014 = vmatprep.subr.bf16.mxu0 0
        %2015 = vmatpush1.bf16.msra.mxu0 0
        %2016 = vmatprep.subr.bf16.mxu0 0
        %2017 = vmatpush1.bf16.msra.mxu0 0
        %2018 = vmatprep.subr.bf16.mxu0 0
        %2019 = vmatpush1.bf16.msra.mxu0 0
        %2020 = vmatprep.mubr.bf16.mxu0 0
        %2021 = vmatmul.mubr.bf16.gmra.mrb[0].mxu0 %v1983
        %v2022 = vpop.f32.mrb[0].mxu0
        %v2023 = vadd.f32 0.0, %v2022
        %v2024 = vpop.f32.mrb[0].mxu0
        %v2025 = vpop.f32.mrb[0].mxu0
        %v2026 = vpop.f32.mrb[0].mxu0
        %2027 = vdwg.mxu0
        %2028 = vrot.lane.b32.xlu0 %v1808, 120
        %v2029 = vpop.permute.xlu0 %2028
        %2030 = vrot.lane.b32.xlu0 %v1808, 88
        %v2031 = vpop.permute.xlu0 %2030
        %v2033 = vsel %vm582, %v2029, 0
        %v2036 = vsel %vm582, %v2031, 0
        %2038 = vmatprep.subr.bf16.mxu0 0
        %2039 = vmatpush1.bf16.xpose.msra.mxu0 %v2036
        %2040 = vmatprep.subr.bf16.mxu0 0
        %2041 = vmatpush1.bf16.xpose.msra.mxu0 0
        %2042 = vmatprep.subr.bf16.mxu0 0
        %2043 = vmatpush1.bf16.xpose.msra.mxu0 0
        %2044 = vmatprep.subr.bf16.mxu0 0
        %2045 = vmatpush1.bf16.xpose.msra.mxu0 0
        %2046 = vmatprep.subr.bf16.mxu0 0
        %2047 = vmatpush1.bf16.xpose.msra.mxu0 0
        %2048 = vmatprep.subr.bf16.mxu0 0
        %2049 = vmatpush1.bf16.xpose.msra.mxu0 0
        %2050 = vmatprep.subr.bf16.mxu0 0
        %2051 = vmatpush1.bf16.xpose.msra.mxu0 0
        %2052 = vmatprep.subr.bf16.mxu0 0
        %2053 = vmatpush1.bf16.xpose.msra.mxu0 0
        %2054 = vmatprep.subr.bf16.mxu0 0
        %2055 = vmatpush1.bf16.xpose.msra.mxu0 0
        %2056 = vmatprep.subr.bf16.mxu0 0
        %2057 = vmatpush1.bf16.xpose.msra.mxu0 0
        %2058 = vmatprep.subr.bf16.mxu0 0
        %2059 = vmatpush1.bf16.xpose.msra.mxu0 0
        %2060 = vmatprep.subr.bf16.mxu0 0
        %2061 = vmatpush1.bf16.xpose.msra.mxu0 0
        %2062 = vmatprep.subr.bf16.mxu0 0
        %2063 = vmatpush1.bf16.xpose.msra.mxu0 0
        %2064 = vmatprep.subr.bf16.mxu0 0
        %2065 = vmatpush1.bf16.xpose.msra.mxu0 0
        %2066 = vmatprep.subr.bf16.mxu0 0
        %2067 = vmatpush1.bf16.xpose.msra.mxu0 0
        %2068 = vmatprep.subr.bf16.mxu0 0
        %2069 = vmatpush1.bf16.xpose.msra.mxu0 0
        %2070 = vmatprep.mubr.bf16.mxu0 0
        %2071 = vmatmul.mubr.bf16.gmra.mrb[0].mxu0 %v2033
        %v2072 = vpop.f32.mrb[0].mxu0
        %v2073 = vadd.f32 0.0, %v2072
        %v2074 = vpop.f32.mrb[0].mxu0
        %v2075 = vpop.f32.mrb[0].mxu0
        %v2076 = vpop.f32.mrb[0].mxu0
        %2077 = vdwg.mxu0
        %v2078 = vsel %vm629, %v2073, -inf
        %2079 = vmax.xlane.f32.xlu0 %v2078
        %v2080 = vpop.xlane.xlu0 %2079
        %v2081 = vsub.f32 %v2073, %v2080
        %v2082 = vmul.f32 %v2081, 1.442695
        %v2083 = vpow.pop %v2082
        %v2084 = vsel %vm629, %v2083, 0.0
        %2085 = vadd.xlane.f32.xlu0 %v2084
        %v2086 = vpop.xlane.xlu0 %2085
        %v2087 = vrcp.pop %v2086
        %v2088 = vmul.f32 %v2083, %v2087
        %v2089 = vpack.c.bf16 %v2088, %v2088
        %2090 = vrot.lane.b32.xlu0 %v1808, 56
        %v2091 = vpop.permute.xlu0 %2090
        %v2093 = vsel %vm629, %v2089, 0
        %v2096 = vsel %vm647, %v2091, 0
        %2098 = vmatprep.subr.bf16.mxu0 0
        %2099 = vmatpush1.bf16.msra.mxu0 %v2096
        %2100 = vmatprep.subr.bf16.mxu0 0
        %2101 = vmatpush1.bf16.msra.mxu0 0
        %2102 = vmatprep.subr.bf16.mxu0 0
        %2103 = vmatpush1.bf16.msra.mxu0 0
        %2104 = vmatprep.subr.bf16.mxu0 0
        %2105 = vmatpush1.bf16.msra.mxu0 0
        %2106 = vmatprep.subr.bf16.mxu0 0
        %2107 = vmatpush1.bf16.msra.mxu0 0
        %2108 = vmatprep.subr.bf16.mxu0 0
        %2109 = vmatpush1.bf16.msra.mxu0 0
        %2110 = vmatprep.subr.bf16.mxu0 0
        %2111 = vmatpush1.bf16.msra.mxu0 0
        %2112 = vmatprep.subr.bf16.mxu0 0
        %2113 = vmatpush1.bf16.msra.mxu0 0
        %2114 = vmatprep.subr.bf16.mxu0 0
        %2115 = vmatpush1.bf16.msra.mxu0 0
        %2116 = vmatprep.subr.bf16.mxu0 0
        %2117 = vmatpush1.bf16.msra.mxu0 0
        %2118 = vmatprep.subr.bf16.mxu0 0
        %2119 = vmatpush1.bf16.msra.mxu0 0
        %2120 = vmatprep.subr.bf16.mxu0 0
        %2121 = vmatpush1.bf16.msra.mxu0 0
        %2122 = vmatprep.subr.bf16.mxu0 0
        %2123 = vmatpush1.bf16.msra.mxu0 0
        %2124 = vmatprep.subr.bf16.mxu0 0
        %2125 = vmatpush1.bf16.msra.mxu0 0
        %2126 = vmatprep.subr.bf16.mxu0 0
        %2127 = vmatpush1.bf16.msra.mxu0 0
        %2128 = vmatprep.subr.bf16.mxu0 0
        %2129 = vmatpush1.bf16.msra.mxu0 0
        %2130 = vmatprep.mubr.bf16.mxu0 0
        %2131 = vmatmul.mubr.bf16.gmra.mrb[0].mxu0 %v2093
        %v2132 = vpop.f32.mrb[0].mxu0
        %v2133 = vadd.f32 0.0, %v2132
        %v2134 = vpop.f32.mrb[0].mxu0
        %v2135 = vpop.f32.mrb[0].mxu0
        %v2136 = vpop.f32.mrb[0].mxu0
        %2137 = vdwg.mxu0
        %2138 = vrot.lane.b32.xlu0 %v1808, 116
        %v2139 = vpop.permute.xlu0 %2138
        %2140 = vrot.lane.b32.xlu0 %v1808, 84
        %v2141 = vpop.permute.xlu0 %2140
        %v2143 = vsel %vm582, %v2139, 0
        %v2146 = vsel %vm582, %v2141, 0
        %2148 = vmatprep.subr.bf16.mxu0 0
        %2149 = vmatpush1.bf16.xpose.msra.mxu0 %v2146
        %2150 = vmatprep.subr.bf16.mxu0 0
        %2151 = vmatpush1.bf16.xpose.msra.mxu0 0
        %2152 = vmatprep.subr.bf16.mxu0 0
        %2153 = vmatpush1.bf16.xpose.msra.mxu0 0
        %2154 = vmatprep.subr.bf16.mxu0 0
        %2155 = vmatpush1.bf16.xpose.msra.mxu0 0
        %2156 = vmatprep.subr.bf16.mxu0 0
        %2157 = vmatpush1.bf16.xpose.msra.mxu0 0
        %2158 = vmatprep.subr.bf16.mxu0 0
        %2159 = vmatpush1.bf16.xpose.msra.mxu0 0
        %2160 = vmatprep.subr.bf16.mxu0 0
        %2161 = vmatpush1.bf16.xpose.msra.mxu0 0
        %2162 = vmatprep.subr.bf16.mxu0 0
        %2163 = vmatpush1.bf16.xpose.msra.mxu0 0
        %2164 = vmatprep.subr.bf16.mxu0 0
        %2165 = vmatpush1.bf16.xpose.msra.mxu0 0
        %2166 = vmatprep.subr.bf16.mxu0 0
        %2167 = vmatpush1.bf16.xpose.msra.mxu0 0
        %2168 = vmatprep.subr.bf16.mxu0 0
        %2169 = vmatpush1.bf16.xpose.msra.mxu0 0
        %2170 = vmatprep.subr.bf16.mxu0 0
        %2171 = vmatpush1.bf16.xpose.msra.mxu0 0
        %2172 = vmatprep.subr.bf16.mxu0 0
        %2173 = vmatpush1.bf16.xpose.msra.mxu0 0
        %2174 = vmatprep.subr.bf16.mxu0 0
        %2175 = vmatpush1.bf16.xpose.msra.mxu0 0
        %2176 = vmatprep.subr.bf16.mxu0 0
        %2177 = vmatpush1.bf16.xpose.msra.mxu0 0
        %2178 = vmatprep.subr.bf16.mxu0 0
        %2179 = vmatpush1.bf16.xpose.msra.mxu0 0
        %2180 = vmatprep.mubr.bf16.mxu0 0
        %2181 = vmatmul.mubr.bf16.gmra.mrb[0].mxu0 %v2143
        %v2182 = vpop.f32.mrb[0].mxu0
        %v2183 = vadd.f32 0.0, %v2182
        %v2184 = vpop.f32.mrb[0].mxu0
        %v2185 = vpop.f32.mrb[0].mxu0
        %v2186 = vpop.f32.mrb[0].mxu0
        %2187 = vdwg.mxu0
        %v2188 = vsel %vm629, %v2183, -inf
        %2189 = vmax.xlane.f32.xlu0 %v2188
        %v2190 = vpop.xlane.xlu0 %2189
        %v2191 = vsub.f32 %v2183, %v2190
        %v2192 = vmul.f32 %v2191, 1.442695
        %v2193 = vpow.pop %v2192
        %v2194 = vsel %vm629, %v2193, 0.0
        %2195 = vadd.xlane.f32.xlu0 %v2194
        %v2196 = vpop.xlane.xlu0 %2195
        %v2197 = vrcp.pop %v2196
        %v2198 = vmul.f32 %v2193, %v2197
        %v2199 = vpack.c.bf16 %v2198, %v2198
        %2200 = vrot.lane.b32.xlu0 %v1808, 52
        %v2201 = vpop.permute.xlu0 %2200
        %v2203 = vsel %vm629, %v2199, 0
        %v2206 = vsel %vm647, %v2201, 0
        %2208 = vmatprep.subr.bf16.mxu0 0
        %2209 = vmatpush1.bf16.msra.mxu0 %v2206
        %2210 = vmatprep.subr.bf16.mxu0 0
        %2211 = vmatpush1.bf16.msra.mxu0 0
        %2212 = vmatprep.subr.bf16.mxu0 0
        %2213 = vmatpush1.bf16.msra.mxu0 0
        %2214 = vmatprep.subr.bf16.mxu0 0
        %2215 = vmatpush1.bf16.msra.mxu0 0
        %2216 = vmatprep.subr.bf16.mxu0 0
        %2217 = vmatpush1.bf16.msra.mxu0 0
        %2218 = vmatprep.subr.bf16.mxu0 0
        %2219 = vmatpush1.bf16.msra.mxu0 0
        %2220 = vmatprep.subr.bf16.mxu0 0
        %2221 = vmatpush1.bf16.msra.mxu0 0
        %2222 = vmatprep.subr.bf16.mxu0 0
        %2223 = vmatpush1.bf16.msra.mxu0 0
        %2224 = vmatprep.subr.bf16.mxu0 0
        %2225 = vmatpush1.bf16.msra.mxu0 0
        %2226 = vmatprep.subr.bf16.mxu0 0
        %2227 = vmatpush1.bf16.msra.mxu0 0
        %2228 = vmatprep.subr.bf16.mxu0 0
        %2229 = vmatpush1.bf16.msra.mxu0 0
        %2230 = vmatprep.subr.bf16.mxu0 0
        %2231 = vmatpush1.bf16.msra.mxu0 0
        %2232 = vmatprep.subr.bf16.mxu0 0
        %2233 = vmatpush1.bf16.msra.mxu0 0
        %2234 = vmatprep.subr.bf16.mxu0 0
        %2235 = vmatpush1.bf16.msra.mxu0 0
        %2236 = vmatprep.subr.bf16.mxu0 0
        %2237 = vmatpush1.bf16.msra.mxu0 0
        %2238 = vmatprep.subr.bf16.mxu0 0
        %2239 = vmatpush1.bf16.msra.mxu0 0
        %2240 = vmatprep.mubr.bf16.mxu0 0
        %2241 = vmatmul.mubr.bf16.gmra.mrb[0].mxu0 %v2203
        %v2242 = vpop.f32.mrb[0].mxu0
        %v2243 = vadd.f32 0.0, %v2242
        %v2244 = vpop.f32.mrb[0].mxu0
        %v2245 = vpop.f32.mrb[0].mxu0
        %v2246 = vpop.f32.mrb[0].mxu0
        %2247 = vdwg.mxu0
        %2248 = vrot.lane.b32.xlu0 %v1808, 112
        %v2249 = vpop.permute.xlu0 %2248
        %2250 = vrot.lane.b32.xlu0 %v1808, 80
        %v2251 = vpop.permute.xlu0 %2250
        %v2253 = vsel %vm582, %v2249, 0
        %v2256 = vsel %vm582, %v2251, 0
        %2258 = vmatprep.subr.bf16.mxu0 0
        %2259 = vmatpush1.bf16.xpose.msra.mxu0 %v2256
        %2260 = vmatprep.subr.bf16.mxu0 0
        %2261 = vmatpush1.bf16.xpose.msra.mxu0 0
        %2262 = vmatprep.subr.bf16.mxu0 0
        %2263 = vmatpush1.bf16.xpose.msra.mxu0 0
        %2264 = vmatprep.subr.bf16.mxu0 0
        %2265 = vmatpush1.bf16.xpose.msra.mxu0 0
        %2266 = vmatprep.subr.bf16.mxu0 0
        %2267 = vmatpush1.bf16.xpose.msra.mxu0 0
        %2268 = vmatprep.subr.bf16.mxu0 0
        %2269 = vmatpush1.bf16.xpose.msra.mxu0 0
        %2270 = vmatprep.subr.bf16.mxu0 0
        %2271 = vmatpush1.bf16.xpose.msra.mxu0 0
        %2272 = vmatprep.subr.bf16.mxu0 0
        %2273 = vmatpush1.bf16.xpose.msra.mxu0 0
        %2274 = vmatprep.subr.bf16.mxu0 0
        %2275 = vmatpush1.bf16.xpose.msra.mxu0 0
        %2276 = vmatprep.subr.bf16.mxu0 0
        %2277 = vmatpush1.bf16.xpose.msra.mxu0 0
        %2278 = vmatprep.subr.bf16.mxu0 0
        %2279 = vmatpush1.bf16.xpose.msra.mxu0 0
        %2280 = vmatprep.subr.bf16.mxu0 0
        %2281 = vmatpush1.bf16.xpose.msra.mxu0 0
        %2282 = vmatprep.subr.bf16.mxu0 0
        %2283 = vmatpush1.bf16.xpose.msra.mxu0 0
        %2284 = vmatprep.subr.bf16.mxu0 0
        %2285 = vmatpush1.bf16.xpose.msra.mxu0 0
        %2286 = vmatprep.subr.bf16.mxu0 0
        %2287 = vmatpush1.bf16.xpose.msra.mxu0 0
        %2288 = vmatprep.subr.bf16.mxu0 0
        %2289 = vmatpush1.bf16.xpose.msra.mxu0 0
        %2290 = vmatprep.mubr.bf16.mxu0 0
        %2291 = vmatmul.mubr.bf16.gmra.mrb[0].mxu0 %v2253
        %v2292 = vpop.f32.mrb[0].mxu0
        %v2293 = vadd.f32 0.0, %v2292
        %v2294 = vpop.f32.mrb[0].mxu0
        %v2295 = vpop.f32.mrb[0].mxu0
        %v2296 = vpop.f32.mrb[0].mxu0
        %2297 = vdwg.mxu0
        %v2298 = vsel %vm629, %v2293, -inf
        %2299 = vmax.xlane.f32.xlu0 %v2298
        %v2300 = vpop.xlane.xlu0 %2299
        %v2301 = vsub.f32 %v2293, %v2300
        %v2302 = vmul.f32 %v2301, 1.442695
        %v2303 = vpow.pop %v2302
        %v2304 = vsel %vm629, %v2303, 0.0
        %2305 = vadd.xlane.f32.xlu0 %v2304
        %v2306 = vpop.xlane.xlu0 %2305
        %v2307 = vrcp.pop %v2306
        %v2308 = vmul.f32 %v2303, %v2307
        %v2309 = vpack.c.bf16 %v2308, %v2308
        %2310 = vrot.lane.b32.xlu0 %v1808, 48
        %v2311 = vpop.permute.xlu0 %2310
        %v2313 = vsel %vm629, %v2309, 0
        %v2316 = vsel %vm647, %v2311, 0
        %2318 = vmatprep.subr.bf16.mxu0 0
        %2319 = vmatpush1.bf16.msra.mxu0 %v2316
        %2320 = vmatprep.subr.bf16.mxu0 0
        %2321 = vmatpush1.bf16.msra.mxu0 0
        %2322 = vmatprep.subr.bf16.mxu0 0
        %2323 = vmatpush1.bf16.msra.mxu0 0
        %2324 = vmatprep.subr.bf16.mxu0 0
        %2325 = vmatpush1.bf16.msra.mxu0 0
        %2326 = vmatprep.subr.bf16.mxu0 0
        %2327 = vmatpush1.bf16.msra.mxu0 0
        %2328 = vmatprep.subr.bf16.mxu0 0
        %2329 = vmatpush1.bf16.msra.mxu0 0
        %2330 = vmatprep.subr.bf16.mxu0 0
        %2331 = vmatpush1.bf16.msra.mxu0 0
        %2332 = vmatprep.subr.bf16.mxu0 0
        %2333 = vmatpush1.bf16.msra.mxu0 0
        %2334 = vmatprep.subr.bf16.mxu0 0
        %2335 = vmatpush1.bf16.msra.mxu0 0
        %2336 = vmatprep.subr.bf16.mxu0 0
        %2337 = vmatpush1.bf16.msra.mxu0 0
        %2338 = vmatprep.subr.bf16.mxu0 0
        %2339 = vmatpush1.bf16.msra.mxu0 0
        %2340 = vmatprep.subr.bf16.mxu0 0
        %2341 = vmatpush1.bf16.msra.mxu0 0
        %2342 = vmatprep.subr.bf16.mxu0 0
        %2343 = vmatpush1.bf16.msra.mxu0 0
        %2344 = vmatprep.subr.bf16.mxu0 0
        %2345 = vmatpush1.bf16.msra.mxu0 0
        %2346 = vmatprep.subr.bf16.mxu0 0
        %2347 = vmatpush1.bf16.msra.mxu0 0
        %2348 = vmatprep.subr.bf16.mxu0 0
        %2349 = vmatpush1.bf16.msra.mxu0 0
        %2350 = vmatprep.mubr.bf16.mxu0 0
        %2351 = vmatmul.mubr.bf16.gmra.mrb[0].mxu0 %v2313
        %v2352 = vpop.f32.mrb[0].mxu0
        %v2353 = vadd.f32 0.0, %v2352
        %v2354 = vpop.f32.mrb[0].mxu0
        %v2355 = vpop.f32.mrb[0].mxu0
        %v2356 = vpop.f32.mrb[0].mxu0
        %2357 = vdwg.mxu0
        %2358 = vrot.lane.b32.xlu0 %v1808, 108
        %v2359 = vpop.permute.xlu0 %2358
        %2360 = vrot.lane.b32.xlu0 %v1808, 76
        %v2361 = vpop.permute.xlu0 %2360
        %v2363 = vsel %vm582, %v2359, 0
        %v2366 = vsel %vm582, %v2361, 0
        %2368 = vmatprep.subr.bf16.mxu0 0
        %2369 = vmatpush1.bf16.xpose.msra.mxu0 %v2366
        %2370 = vmatprep.subr.bf16.mxu0 0
        %2371 = vmatpush1.bf16.xpose.msra.mxu0 0
        %2372 = vmatprep.subr.bf16.mxu0 0
        %2373 = vmatpush1.bf16.xpose.msra.mxu0 0
        %2374 = vmatprep.subr.bf16.mxu0 0
        %2375 = vmatpush1.bf16.xpose.msra.mxu0 0
        %2376 = vmatprep.subr.bf16.mxu0 0
        %2377 = vmatpush1.bf16.xpose.msra.mxu0 0
        %2378 = vmatprep.subr.bf16.mxu0 0
        %2379 = vmatpush1.bf16.xpose.msra.mxu0 0
        %2380 = vmatprep.subr.bf16.mxu0 0
        %2381 = vmatpush1.bf16.xpose.msra.mxu0 0
        %2382 = vmatprep.subr.bf16.mxu0 0
        %2383 = vmatpush1.bf16.xpose.msra.mxu0 0
        %2384 = vmatprep.subr.bf16.mxu0 0
        %2385 = vmatpush1.bf16.xpose.msra.mxu0 0
        %2386 = vmatprep.subr.bf16.mxu0 0
        %2387 = vmatpush1.bf16.xpose.msra.mxu0 0
        %2388 = vmatprep.subr.bf16.mxu0 0
        %2389 = vmatpush1.bf16.xpose.msra.mxu0 0
        %2390 = vmatprep.subr.bf16.mxu0 0
        %2391 = vmatpush1.bf16.xpose.msra.mxu0 0
        %2392 = vmatprep.subr.bf16.mxu0 0
        %2393 = vmatpush1.bf16.xpose.msra.mxu0 0
        %2394 = vmatprep.subr.bf16.mxu0 0
        %2395 = vmatpush1.bf16.xpose.msra.mxu0 0
        %2396 = vmatprep.subr.bf16.mxu0 0
        %2397 = vmatpush1.bf16.xpose.msra.mxu0 0
        %2398 = vmatprep.subr.bf16.mxu0 0
        %2399 = vmatpush1.bf16.xpose.msra.mxu0 0
        %2400 = vmatprep.mubr.bf16.mxu0 0
        %2401 = vmatmul.mubr.bf16.gmra.mrb[0].mxu0 %v2363
        %v2402 = vpop.f32.mrb[0].mxu0
        %v2403 = vadd.f32 0.0, %v2402
        %v2404 = vpop.f32.mrb[0].mxu0
        %v2405 = vpop.f32.mrb[0].mxu0
        %v2406 = vpop.f32.mrb[0].mxu0
        %2407 = vdwg.mxu0
        %v2408 = vsel %vm629, %v2403, -inf
        %2409 = vmax.xlane.f32.xlu0 %v2408
        %v2410 = vpop.xlane.xlu0 %2409
        %v2411 = vsub.f32 %v2403, %v2410
        %v2412 = vmul.f32 %v2411, 1.442695
        %v2413 = vpow.pop %v2412
        %v2414 = vsel %vm629, %v2413, 0.0
        %2415 = vadd.xlane.f32.xlu0 %v2414
        %v2416 = vpop.xlane.xlu0 %2415
        %v2417 = vrcp.pop %v2416
        %v2418 = vmul.f32 %v2413, %v2417
        %v2419 = vpack.c.bf16 %v2418, %v2418
        %2420 = vrot.lane.b32.xlu0 %v1808, 44
        %v2421 = vpop.permute.xlu0 %2420
        %v2423 = vsel %vm629, %v2419, 0
        %v2426 = vsel %vm647, %v2421, 0
        %2428 = vmatprep.subr.bf16.mxu0 0
        %2429 = vmatpush1.bf16.msra.mxu0 %v2426
        %2430 = vmatprep.subr.bf16.mxu0 0
        %2431 = vmatpush1.bf16.msra.mxu0 0
        %2432 = vmatprep.subr.bf16.mxu0 0
        %2433 = vmatpush1.bf16.msra.mxu0 0
        %2434 = vmatprep.subr.bf16.mxu0 0
        %2435 = vmatpush1.bf16.msra.mxu0 0
        %2436 = vmatprep.subr.bf16.mxu0 0
        %2437 = vmatpush1.bf16.msra.mxu0 0
        %2438 = vmatprep.subr.bf16.mxu0 0
        %2439 = vmatpush1.bf16.msra.mxu0 0
        %2440 = vmatprep.subr.bf16.mxu0 0
        %2441 = vmatpush1.bf16.msra.mxu0 0
        %2442 = vmatprep.subr.bf16.mxu0 0
        %2443 = vmatpush1.bf16.msra.mxu0 0
        %2444 = vmatprep.subr.bf16.mxu0 0
        %2445 = vmatpush1.bf16.msra.mxu0 0
        %2446 = vmatprep.subr.bf16.mxu0 0
        %2447 = vmatpush1.bf16.msra.mxu0 0
        %2448 = vmatprep.subr.bf16.mxu0 0
        %2449 = vmatpush1.bf16.msra.mxu0 0
        %2450 = vmatprep.subr.bf16.mxu0 0
        %2451 = vmatpush1.bf16.msra.mxu0 0
        %2452 = vmatprep.subr.bf16.mxu0 0
        %2453 = vmatpush1.bf16.msra.mxu0 0
        %2454 = vmatprep.subr.bf16.mxu0 0
        %2455 = vmatpush1.bf16.msra.mxu0 0
        %2456 = vmatprep.subr.bf16.mxu0 0
        %2457 = vmatpush1.bf16.msra.mxu0 0
        %2458 = vmatprep.subr.bf16.mxu0 0
        %2459 = vmatpush1.bf16.msra.mxu0 0
        %2460 = vmatprep.mubr.bf16.mxu0 0
        %2461 = vmatmul.mubr.bf16.gmra.mrb[0].mxu0 %v2423
        %v2462 = vpop.f32.mrb[0].mxu0
        %v2463 = vadd.f32 0.0, %v2462
        %v2464 = vpop.f32.mrb[0].mxu0
        %v2465 = vpop.f32.mrb[0].mxu0
        %v2466 = vpop.f32.mrb[0].mxu0
        %2467 = vdwg.mxu0
        %2468 = vrot.lane.b32.xlu0 %v1808, 104
        %v2469 = vpop.permute.xlu0 %2468
        %2470 = vrot.lane.b32.xlu0 %v1808, 72
        %v2471 = vpop.permute.xlu0 %2470
        %v2473 = vsel %vm582, %v2469, 0
        %v2476 = vsel %vm582, %v2471, 0
        %2478 = vmatprep.subr.bf16.mxu0 0
        %2479 = vmatpush1.bf16.xpose.msra.mxu0 %v2476
        %2480 = vmatprep.subr.bf16.mxu0 0
        %2481 = vmatpush1.bf16.xpose.msra.mxu0 0
        %2482 = vmatprep.subr.bf16.mxu0 0
        %2483 = vmatpush1.bf16.xpose.msra.mxu0 0
        %2484 = vmatprep.subr.bf16.mxu0 0
        %2485 = vmatpush1.bf16.xpose.msra.mxu0 0
        %2486 = vmatprep.subr.bf16.mxu0 0
        %2487 = vmatpush1.bf16.xpose.msra.mxu0 0
        %2488 = vmatprep.subr.bf16.mxu0 0
        %2489 = vmatpush1.bf16.xpose.msra.mxu0 0
        %2490 = vmatprep.subr.bf16.mxu0 0
        %2491 = vmatpush1.bf16.xpose.msra.mxu0 0
        %2492 = vmatprep.subr.bf16.mxu0 0
        %2493 = vmatpush1.bf16.xpose.msra.mxu0 0
        %2494 = vmatprep.subr.bf16.mxu0 0
        %2495 = vmatpush1.bf16.xpose.msra.mxu0 0
        %2496 = vmatprep.subr.bf16.mxu0 0
        %2497 = vmatpush1.bf16.xpose.msra.mxu0 0
        %2498 = vmatprep.subr.bf16.mxu0 0
        %2499 = vmatpush1.bf16.xpose.msra.mxu0 0
        %2500 = vmatprep.subr.bf16.mxu0 0
        %2501 = vmatpush1.bf16.xpose.msra.mxu0 0
        %2502 = vmatprep.subr.bf16.mxu0 0
        %2503 = vmatpush1.bf16.xpose.msra.mxu0 0
        %2504 = vmatprep.subr.bf16.mxu0 0
        %2505 = vmatpush1.bf16.xpose.msra.mxu0 0
        %2506 = vmatprep.subr.bf16.mxu0 0
        %2507 = vmatpush1.bf16.xpose.msra.mxu0 0
        %2508 = vmatprep.subr.bf16.mxu0 0
        %2509 = vmatpush1.bf16.xpose.msra.mxu0 0
        %2510 = vmatprep.mubr.bf16.mxu0 0
        %2511 = vmatmul.mubr.bf16.gmra.mrb[0].mxu0 %v2473
        %v2512 = vpop.f32.mrb[0].mxu0
        %v2513 = vadd.f32 0.0, %v2512
        %v2514 = vpop.f32.mrb[0].mxu0
        %v2515 = vpop.f32.mrb[0].mxu0
        %v2516 = vpop.f32.mrb[0].mxu0
        %2517 = vdwg.mxu0
        %v2518 = vsel %vm629, %v2513, -inf
        %2519 = vmax.xlane.f32.xlu0 %v2518
        %v2520 = vpop.xlane.xlu0 %2519
        %v2521 = vsub.f32 %v2513, %v2520
        %v2522 = vmul.f32 %v2521, 1.442695
        %v2523 = vpow.pop %v2522
        %v2524 = vsel %vm629, %v2523, 0.0
        %2525 = vadd.xlane.f32.xlu0 %v2524
        %v2526 = vpop.xlane.xlu0 %2525
        %v2527 = vrcp.pop %v2526
        %v2528 = vmul.f32 %v2523, %v2527
        %v2529 = vpack.c.bf16 %v2528, %v2528
        %2530 = vrot.lane.b32.xlu0 %v1808, 40
        %v2531 = vpop.permute.xlu0 %2530
        %v2533 = vsel %vm629, %v2529, 0
        %v2536 = vsel %vm647, %v2531, 0
        %2538 = vmatprep.subr.bf16.mxu0 0
        %2539 = vmatpush1.bf16.msra.mxu0 %v2536
        %2540 = vmatprep.subr.bf16.mxu0 0
        %2541 = vmatpush1.bf16.msra.mxu0 0
        %2542 = vmatprep.subr.bf16.mxu0 0
        %2543 = vmatpush1.bf16.msra.mxu0 0
        %2544 = vmatprep.subr.bf16.mxu0 0
        %2545 = vmatpush1.bf16.msra.mxu0 0
        %2546 = vmatprep.subr.bf16.mxu0 0
        %2547 = vmatpush1.bf16.msra.mxu0 0
        %2548 = vmatprep.subr.bf16.mxu0 0
        %2549 = vmatpush1.bf16.msra.mxu0 0
        %2550 = vmatprep.subr.bf16.mxu0 0
        %2551 = vmatpush1.bf16.msra.mxu0 0
        %2552 = vmatprep.subr.bf16.mxu0 0
        %2553 = vmatpush1.bf16.msra.mxu0 0
        %2554 = vmatprep.subr.bf16.mxu0 0
        %2555 = vmatpush1.bf16.msra.mxu0 0
        %2556 = vmatprep.subr.bf16.mxu0 0
        %2557 = vmatpush1.bf16.msra.mxu0 0
        %2558 = vmatprep.subr.bf16.mxu0 0
        %2559 = vmatpush1.bf16.msra.mxu0 0
        %2560 = vmatprep.subr.bf16.mxu0 0
        %2561 = vmatpush1.bf16.msra.mxu0 0
        %2562 = vmatprep.subr.bf16.mxu0 0
        %2563 = vmatpush1.bf16.msra.mxu0 0
        %2564 = vmatprep.subr.bf16.mxu0 0
        %2565 = vmatpush1.bf16.msra.mxu0 0
        %2566 = vmatprep.subr.bf16.mxu0 0
        %2567 = vmatpush1.bf16.msra.mxu0 0
        %2568 = vmatprep.subr.bf16.mxu0 0
        %2569 = vmatpush1.bf16.msra.mxu0 0
        %2570 = vmatprep.mubr.bf16.mxu0 0
        %2571 = vmatmul.mubr.bf16.gmra.mrb[0].mxu0 %v2533
        %v2572 = vpop.f32.mrb[0].mxu0
        %v2573 = vadd.f32 0.0, %v2572
        %v2574 = vpop.f32.mrb[0].mxu0
        %v2575 = vpop.f32.mrb[0].mxu0
        %v2576 = vpop.f32.mrb[0].mxu0
        %2577 = vdwg.mxu0
        %2578 = vrot.lane.b32.xlu0 %v1808, 100
        %v2579 = vpop.permute.xlu0 %2578
        %2580 = vrot.lane.b32.xlu0 %v1808, 68
        %v2581 = vpop.permute.xlu0 %2580
        %v2583 = vsel %vm582, %v2579, 0
        %v2586 = vsel %vm582, %v2581, 0
        %2588 = vmatprep.subr.bf16.mxu0 0
        %2589 = vmatpush1.bf16.xpose.msra.mxu0 %v2586
        %2590 = vmatprep.subr.bf16.mxu0 0
        %2591 = vmatpush1.bf16.xpose.msra.mxu0 0
        %2592 = vmatprep.subr.bf16.mxu0 0
        %2593 = vmatpush1.bf16.xpose.msra.mxu0 0
        %2594 = vmatprep.subr.bf16.mxu0 0
        %2595 = vmatpush1.bf16.xpose.msra.mxu0 0
        %2596 = vmatprep.subr.bf16.mxu0 0
        %2597 = vmatpush1.bf16.xpose.msra.mxu0 0
        %2598 = vmatprep.subr.bf16.mxu0 0
        %2599 = vmatpush1.bf16.xpose.msra.mxu0 0
        %2600 = vmatprep.subr.bf16.mxu0 0
        %2601 = vmatpush1.bf16.xpose.msra.mxu0 0
        %2602 = vmatprep.subr.bf16.mxu0 0
        %2603 = vmatpush1.bf16.xpose.msra.mxu0 0
        %2604 = vmatprep.subr.bf16.mxu0 0
        %2605 = vmatpush1.bf16.xpose.msra.mxu0 0
        %2606 = vmatprep.subr.bf16.mxu0 0
        %2607 = vmatpush1.bf16.xpose.msra.mxu0 0
        %2608 = vmatprep.subr.bf16.mxu0 0
        %2609 = vmatpush1.bf16.xpose.msra.mxu0 0
        %2610 = vmatprep.subr.bf16.mxu0 0
        %2611 = vmatpush1.bf16.xpose.msra.mxu0 0
        %2612 = vmatprep.subr.bf16.mxu0 0
        %2613 = vmatpush1.bf16.xpose.msra.mxu0 0
        %2614 = vmatprep.subr.bf16.mxu0 0
        %2615 = vmatpush1.bf16.xpose.msra.mxu0 0
        %2616 = vmatprep.subr.bf16.mxu0 0
        %2617 = vmatpush1.bf16.xpose.msra.mxu0 0
        %2618 = vmatprep.subr.bf16.mxu0 0
        %2619 = vmatpush1.bf16.xpose.msra.mxu0 0
        %2620 = vmatprep.mubr.bf16.mxu0 0
        %2621 = vmatmul.mubr.bf16.gmra.mrb[0].mxu0 %v2583
        %v2622 = vpop.f32.mrb[0].mxu0
        %v2623 = vadd.f32 0.0, %v2622
        %v2624 = vpop.f32.mrb[0].mxu0
        %v2625 = vpop.f32.mrb[0].mxu0
        %v2626 = vpop.f32.mrb[0].mxu0
        %2627 = vdwg.mxu0
        %v2628 = vsel %vm629, %v2623, -inf
        %2629 = vmax.xlane.f32.xlu0 %v2628
        %v2630 = vpop.xlane.xlu0 %2629
        %v2631 = vsub.f32 %v2623, %v2630
        %v2632 = vmul.f32 %v2631, 1.442695
        %v2633 = vpow.pop %v2632
        %v2634 = vsel %vm629, %v2633, 0.0
        %2635 = vadd.xlane.f32.xlu0 %v2634
        %v2636 = vpop.xlane.xlu0 %2635
        %v2637 = vrcp.pop %v2636
        %v2638 = vmul.f32 %v2633, %v2637
        %v2639 = vpack.c.bf16 %v2638, %v2638
        %2640 = vrot.lane.b32.xlu0 %v1808, 36
        %v2641 = vpop.permute.xlu0 %2640
        %v2643 = vsel %vm629, %v2639, 0
        %v2646 = vsel %vm647, %v2641, 0
        %2648 = vmatprep.subr.bf16.mxu0 0
        %2649 = vmatpush1.bf16.msra.mxu0 %v2646
        %2650 = vmatprep.subr.bf16.mxu0 0
        %2651 = vmatpush1.bf16.msra.mxu0 0
        %2652 = vmatprep.subr.bf16.mxu0 0
        %2653 = vmatpush1.bf16.msra.mxu0 0
        %2654 = vmatprep.subr.bf16.mxu0 0
        %2655 = vmatpush1.bf16.msra.mxu0 0
        %2656 = vmatprep.subr.bf16.mxu0 0
        %2657 = vmatpush1.bf16.msra.mxu0 0
        %2658 = vmatprep.subr.bf16.mxu0 0
        %2659 = vmatpush1.bf16.msra.mxu0 0
        %2660 = vmatprep.subr.bf16.mxu0 0
        %2661 = vmatpush1.bf16.msra.mxu0 0
        %2662 = vmatprep.subr.bf16.mxu0 0
        %2663 = vmatpush1.bf16.msra.mxu0 0
        %2664 = vmatprep.subr.bf16.mxu0 0
        %2665 = vmatpush1.bf16.msra.mxu0 0
        %2666 = vmatprep.subr.bf16.mxu0 0
        %2667 = vmatpush1.bf16.msra.mxu0 0
        %2668 = vmatprep.subr.bf16.mxu0 0
        %2669 = vmatpush1.bf16.msra.mxu0 0
        %2670 = vmatprep.subr.bf16.mxu0 0
        %2671 = vmatpush1.bf16.msra.mxu0 0
        %2672 = vmatprep.subr.bf16.mxu0 0
        %2673 = vmatpush1.bf16.msra.mxu0 0
        %2674 = vmatprep.subr.bf16.mxu0 0
        %2675 = vmatpush1.bf16.msra.mxu0 0
        %2676 = vmatprep.subr.bf16.mxu0 0
        %2677 = vmatpush1.bf16.msra.mxu0 0
        %2678 = vmatprep.subr.bf16.mxu0 0
        %2679 = vmatpush1.bf16.msra.mxu0 0
        %2680 = vmatprep.mubr.bf16.mxu0 0
        %2681 = vmatmul.mubr.bf16.gmra.mrb[0].mxu0 %v2643
        %v2682 = vpop.f32.mrb[0].mxu0
        %v2683 = vadd.f32 0.0, %v2682
        %v2684 = vpop.f32.mrb[0].mxu0
        %v2685 = vpop.f32.mrb[0].mxu0
        %v2686 = vpop.f32.mrb[0].mxu0
        %2687 = vdwg.mxu0
        %2689 = vrot.lane.b32.xlu0 %v2023, 4
        %v2690 = vpop.permute.xlu0 %2689
        %2693 = vrot.lane.b32.xlu0 %v2133, 8
        %v2694 = vpop.permute.xlu0 %2693
        %2697 = vrot.lane.b32.xlu0 %v2243, 12
        %v2698 = vpop.permute.xlu0 %2697
        %2701 = vrot.lane.b32.xlu0 %v2353, 16
        %v2702 = vpop.permute.xlu0 %2701
        %2705 = vrot.lane.b32.xlu0 %v2463, 20
        %v2706 = vpop.permute.xlu0 %2705
        %2709 = vrot.lane.b32.xlu0 %v2573, 24
        %v2710 = vpop.permute.xlu0 %2709
        %2713 = vrot.lane.b32.xlu0 %v2683, 28
        %v2714 = vpop.permute.xlu0 %2713
        %v2716 = vsel %vm582, %v1913, %v2690
        %v2717 = vsel %vm629, %v2716, %v2694
        %v2718 = vsel %vm1491, %v2717, %v2698
        %v2719 = vsel %vm1493, %v2718, %v2702
        %v2720 = vsel %vm1495, %v2719, %v2706
        %v2721 = vsel %vm1497, %v2720, %v2710
        %v2722 = vsel %vm1499, %v2721, %v2714
        %s2723 = scalar_lea.vmem %s4, 32
        %v2724 = vld [vmem:[%s2723] sm:$0xff]
        %v2725 = vld [vmem:[%s2723 + $0x8] sm:$0xff]
        %v2726 = vld [vmem:[%s2723 + $0x10] sm:$0xff]
        %v2727 = vld [vmem:[%s2723 + $0x18] sm:$0xff]
        %s2728 = scalar_lea.vmem %s5, 1
        %v2729 = vld [vmem:[%s2728] sm:$0x1]
        %v2730 = vpack.c.bf16 %v2722, %v2722
        %v2731 = vpack.c.bf16 %v2725, %v2724
        %v2732 = vpack.c.bf16 %v2727, %v2726
        %v2734 = vlaneseq
        %v2735 = vshrl.u32 %v2734, 7
        %v2736 = vsub.s32 0, %v2735
        %v2737 = vrot.slane %v2729, %v2736
        %v2740 = vsel %vm534, %v2730, 0
        %2742 = vmatprep.subr.bf16.mxu0 0
        %2743 = vmatpush1.bf16.msra.mxu0 %v2731
        %2744 = vmatprep.subr.bf16.mxu0 0
        %2745 = vmatpush1.bf16.msra.mxu0 %v2732
        %2746 = vmatprep.subr.bf16.mxu0 0
        %2747 = vmatpush1.bf16.msra.mxu0 0
        %2748 = vmatprep.subr.bf16.mxu0 0
        %2749 = vmatpush1.bf16.msra.mxu0 0
        %2750 = vmatprep.subr.bf16.mxu0 0
        %2751 = vmatpush1.bf16.msra.mxu0 0
        %2752 = vmatprep.subr.bf16.mxu0 0
        %2753 = vmatpush1.bf16.msra.mxu0 0
        %2754 = vmatprep.subr.bf16.mxu0 0
        %2755 = vmatpush1.bf16.msra.mxu0 0
        %2756 = vmatprep.subr.bf16.mxu0 0
        %2757 = vmatpush1.bf16.msra.mxu0 0
        %2758 = vmatprep.subr.bf16.mxu0 0
        %2759 = vmatpush1.bf16.msra.mxu0 0
        %2760 = vmatprep.subr.bf16.mxu0 0
        %2761 = vmatpush1.bf16.msra.mxu0 0
        %2762 = vmatprep.subr.bf16.mxu0 0
        %2763 = vmatpush1.bf16.msra.mxu0 0
        %2764 = vmatprep.subr.bf16.mxu0 0
        %2765 = vmatpush1.bf16.msra.mxu0 0
        %2766 = vmatprep.subr.bf16.mxu0 0
        %2767 = vmatpush1.bf16.msra.mxu0 0
        %2768 = vmatprep.subr.bf16.mxu0 0
        %2769 = vmatpush1.bf16.msra.mxu0 0
        %2770 = vmatprep.subr.bf16.mxu0 0
        %2771 = vmatpush1.bf16.msra.mxu0 0
        %2772 = vmatprep.subr.bf16.mxu0 0
        %2773 = vmatpush1.bf16.msra.mxu0 0
        %2774 = vmatprep.mubr.bf16.mxu0 0
        %2775 = vmatmul.mubr.bf16.gmra.mrb[0].mxu0 %v2740
        %v2776 = vpop.f32.mrb[0].mxu0
        %v2777 = vadd.f32 %v2737, %v2776
        %v2778 = vpop.f32.mrb[0].mxu0
        %v2779 = vpop.f32.mrb[0].mxu0
        %v2780 = vpop.f32.mrb[0].mxu0
        %2781 = vdwg.mxu0
        %v2782 = vadd.f32 %v1748, %v2777
        %s2783 = scalar_lea.vmem %s10, 1
        %v2784 = vld [vmem:[%s2783] sm:$0x1]
        %s2785 = scalar_lea.vmem %s11, 1
        %v2786 = vld [vmem:[%s2785] sm:$0x1]
        %v2787 = vsel %vm534, %v2782, 0.0
        %2788 = vadd.xlane.f32.xlu0 %v2787
        %v2789 = vpop.xlane.xlu0 %2788
        %v2790 = vmul.f32 %v2789, %v1564
        %v2791 = vsub.f32 %v2782, %v2790
        %v2792 = vmul.f32 %v2791, %v2791
        %v2793 = vsel %vm534, %v2792, 0.0
        %2794 = vadd.xlane.f32.xlu0 %v2793
        %v2795 = vpop.xlane.xlu0 %2794
        %v2796 = vmul.f32 %v2795, %v1564
        %v2797 = vadd.f32 %v2796, 1e-05
        %v2798 = vrsqrt.pop %v2797
        %v2799 = vmul.f32 %v2791, %v2798
        %v2801 = vlaneseq
        %v2802 = vshrl.u32 %v2801, 7
        %v2803 = vsub.s32 0, %v2802
        %v2804 = vrot.slane %v2784, %v2803
        %v2806 = vmul.f32 %v2799, %v2804
        %v2808 = vlaneseq
        %v2809 = vshrl.u32 %v2808, 7
        %v2810 = vsub.s32 0, %v2809
        %v2811 = vrot.slane %v2786, %v2810
        %v2813 = vadd.f32 %v2806, %v2811
        %s2814 = scalar_lea.vmem %s6, 32
        %v2815 = vld [vmem:[%s2814] sm:$0xff]
        %v2816 = vld [vmem:[%s2814 + $0x8] sm:$0xff]
        %v2817 = vld [vmem:[%s2814 + $0x10] sm:$0xff]
        %v2818 = vld [vmem:[%s2814 + $0x18] sm:$0xff]
        %s2819 = scalar_lea.vmem %s7, 1
        %v2820 = vld [vmem:[%s2819] sm:$0x1]
        %v2821 = vpack.c.bf16 %v2813, %v2813
        %v2822 = vpack.c.bf16 %v2816, %v2815
        %v2823 = vpack.c.bf16 %v2818, %v2817
        %v2825 = vlaneseq
        %v2826 = vshrl.u32 %v2825, 7
        %v2827 = vsub.s32 0, %v2826
        %v2828 = vrot.slane %v2820, %v2827
        %v2831 = vsel %vm534, %v2821, 0
        %2833 = vmatprep.subr.bf16.mxu0 0
        %2834 = vmatpush1.bf16.msra.mxu0 %v2822
        %2835 = vmatprep.subr.bf16.mxu0 0
        %2836 = vmatpush1.bf16.msra.mxu0 %v2823
        %2837 = vmatprep.subr.bf16.mxu0 0
        %2838 = vmatpush1.bf16.msra.mxu0 0
        %2839 = vmatprep.subr.bf16.mxu0 0
        %2840 = vmatpush1.bf16.msra.mxu0 0
        %2841 = vmatprep.subr.bf16.mxu0 0
        %2842 = vmatpush1.bf16.msra.mxu0 0
        %2843 = vmatprep.subr.bf16.mxu0 0
        %2844 = vmatpush1.bf16.msra.mxu0 0
        %2845 = vmatprep.subr.bf16.mxu0 0
        %2846 = vmatpush1.bf16.msra.mxu0 0
        %2847 = vmatprep.subr.bf16.mxu0 0
        %2848 = vmatpush1.bf16.msra.mxu0 0
        %2849 = vmatprep.subr.bf16.mxu0 0
        %2850 = vmatpush1.bf16.msra.mxu0 0
        %2851 = vmatprep.subr.bf16.mxu0 0
        %2852 = vmatpush1.bf16.msra.mxu0 0
        %2853 = vmatprep.subr.bf16.mxu0 0
        %2854 = vmatpush1.bf16.msra.mxu0 0
        %2855 = vmatprep.subr.bf16.mxu0 0
        %2856 = vmatpush1.bf16.msra.mxu0 0
        %2857 = vmatprep.subr.bf16.mxu0 0
        %2858 = vmatpush1.bf16.msra.mxu0 0
        %2859 = vmatprep.subr.bf16.mxu0 0
        %2860 = vmatpush1.bf16.msra.mxu0 0
        %2861 = vmatprep.subr.bf16.mxu0 0
        %2862 = vmatpush1.bf16.msra.mxu0 0
        %2863 = vmatprep.subr.bf16.mxu0 0
        %2864 = vmatpush1.bf16.msra.mxu0 0
        %2865 = vmatprep.mubr.bf16.mxu0 0
        %2866 = vmatmul.mubr.bf16.gmra.mrb[0].mxu0 %v2831
        %v2867 = vpop.f32.mrb[0].mxu0
        %v2868 = vadd.f32 %v2828, %v2867
        %v2869 = vpop.f32.mrb[0].mxu0
        %v2870 = vpop.f32.mrb[0].mxu0
        %v2871 = vpop.f32.mrb[0].mxu0
        %2872 = vdwg.mxu0
        %v2873 = vmax.f32 %v2868, 0.0
        %s2874 = scalar_lea.vmem %s8, 128
        %v2875 = vld [vmem:[%s2874] sm:$0xff]
        %v2876 = vld [vmem:[%s2874 + $0x8] sm:$0xff]
        %v2877 = vld [vmem:[%s2874 + $0x10] sm:$0xff]
        %v2878 = vld [vmem:[%s2874 + $0x18] sm:$0xff]
        %v2879 = vld [vmem:[%s2874 + $0x20] sm:$0xff]
        %v2880 = vld [vmem:[%s2874 + $0x28] sm:$0xff]
        %v2881 = vld [vmem:[%s2874 + $0x30] sm:$0xff]
        %v2882 = vld [vmem:[%s2874 + $0x38] sm:$0xff]
        %v2883 = vld [vmem:[%s2874 + $0x40] sm:$0xff]
        %v2884 = vld [vmem:[%s2874 + $0x48] sm:$0xff]
        %v2885 = vld [vmem:[%s2874 + $0x50] sm:$0xff]
        %v2886 = vld [vmem:[%s2874 + $0x58] sm:$0xff]
        %v2887 = vld [vmem:[%s2874 + $0x60] sm:$0xff]
        %v2888 = vld [vmem:[%s2874 + $0x68] sm:$0xff]
        %v2889 = vld [vmem:[%s2874 + $0x70] sm:$0xff]
        %v2890 = vld [vmem:[%s2874 + $0x78] sm:$0xff]
        %s2891 = scalar_lea.vmem %s9, 1
        %v2892 = vld [vmem:[%s2891] sm:$0x1]
        %v2893 = vpack.c.bf16 %v2873, %v2873
        %v2894 = vpack.c.bf16 %v2876, %v2875
        %v2895 = vpack.c.bf16 %v2878, %v2877
        %v2896 = vpack.c.bf16 %v2880, %v2879
        %v2897 = vpack.c.bf16 %v2882, %v2881
        %v2898 = vpack.c.bf16 %v2884, %v2883
        %v2899 = vpack.c.bf16 %v2886, %v2885
        %v2900 = vpack.c.bf16 %v2888, %v2887
        %v2901 = vpack.c.bf16 %v2890, %v2889
        %v2903 = vlaneseq
        %v2904 = vshrl.u32 %v2903, 7
        %v2905 = vsub.s32 0, %v2904
        %v2906 = vrot.slane %v2892, %v2905
        %2908 = vmatprep.subr.bf16.mxu0 0
        %2909 = vmatpush1.bf16.msra.mxu0 %v2894
        %2910 = vmatprep.subr.bf16.mxu0 0
        %2911 = vmatpush1.bf16.msra.mxu0 %v2895
        %2912 = vmatprep.subr.bf16.mxu0 0
        %2913 = vmatpush1.bf16.msra.mxu0 %v2896
        %2914 = vmatprep.subr.bf16.mxu0 0
        %2915 = vmatpush1.bf16.msra.mxu0 %v2897
        %2916 = vmatprep.subr.bf16.mxu0 0
        %2917 = vmatpush1.bf16.msra.mxu0 %v2898
        %2918 = vmatprep.subr.bf16.mxu0 0
        %2919 = vmatpush1.bf16.msra.mxu0 %v2899
        %2920 = vmatprep.subr.bf16.mxu0 0
        %2921 = vmatpush1.bf16.msra.mxu0 %v2900
        %2922 = vmatprep.subr.bf16.mxu0 0
        %2923 = vmatpush1.bf16.msra.mxu0 %v2901
        %2924 = vmatprep.subr.bf16.mxu0 0
        %2925 = vmatpush1.bf16.msra.mxu0 0
        %2926 = vmatprep.subr.bf16.mxu0 0
        %2927 = vmatpush1.bf16.msra.mxu0 0
        %2928 = vmatprep.subr.bf16.mxu0 0
        %2929 = vmatpush1.bf16.msra.mxu0 0
        %2930 = vmatprep.subr.bf16.mxu0 0
        %2931 = vmatpush1.bf16.msra.mxu0 0
        %2932 = vmatprep.subr.bf16.mxu0 0
        %2933 = vmatpush1.bf16.msra.mxu0 0
        %2934 = vmatprep.subr.bf16.mxu0 0
        %2935 = vmatpush1.bf16.msra.mxu0 0
        %2936 = vmatprep.subr.bf16.mxu0 0
        %2937 = vmatpush1.bf16.msra.mxu0 0
        %2938 = vmatprep.subr.bf16.mxu0 0
        %2939 = vmatpush1.bf16.msra.mxu0 0
        %2940 = vmatprep.mubr.bf16.mxu0 0
        %2941 = vmatmul.mubr.bf16.gmra.mrb[0].mxu0 %v2893
        %v2942 = vpop.f32.mrb[0].mxu0
        %v2943 = vadd.f32 %v2906, %v2942
        %v2944 = vpop.f32.mrb[0].mxu0
        %v2945 = vpop.f32.mrb[0].mxu0
        %v2946 = vpop.f32.mrb[0].mxu0
        %2947 = vdwg.mxu0
        %v2948 = vadd.f32 %v2813, %v2943
        %s2949 = scalar_lea.vmem %s12, 1
        %v2950 = vld [vmem:[%s2949] sm:$0x1]
        %s2951 = scalar_lea.vmem %s13, 1
        %v2952 = vld [vmem:[%s2951] sm:$0x1]
        %v2953 = vsel %vm534, %v2948, 0.0
        %2954 = vadd.xlane.f32.xlu0 %v2953
        %v2955 = vpop.xlane.xlu0 %2954
        %v2956 = vmul.f32 %v2955, %v1564
        %v2957 = vsub.f32 %v2948, %v2956
        %v2958 = vmul.f32 %v2957, %v2957
        %v2959 = vsel %vm534, %v2958, 0.0
        %2960 = vadd.xlane.f32.xlu0 %v2959
        %v2961 = vpop.xlane.xlu0 %2960
        %v2962 = vmul.f32 %v2961, %v1564
        %v2963 = vadd.f32 %v2962, 1e-05
        %v2964 = vrsqrt.pop %v2963
        %v2965 = vmul.f32 %v2957, %v2964
        %v2967 = vlaneseq
        %v2968 = vshrl.u32 %v2967, 7
        %v2969 = vsub.s32 0, %v2968
        %v2970 = vrot.slane %v2950, %v2969
        %v2972 = vmul.f32 %v2965, %v2970
        %v2974 = vlaneseq
        %v2975 = vshrl.u32 %v2974, 7
        %v2976 = vsub.s32 0, %v2975
        %v2977 = vrot.slane %v2952, %v2976
        %v2979 = vadd.f32 %v2972, %v2977
        %v2980 = vld [vmem:[%s14] sm:$0xff]
        %v2981 = vld [vmem:[%s14 + $0x8] sm:$0xff]
        %v2982 = vld [vmem:[%s14 + $0x10] sm:$0xff]
        %v2983 = vld [vmem:[%s14 + $0x18] sm:$0xff]
        %v2984 = vld [vmem:[%s15] sm:$0x1]
        %v2985 = vpack.c.bf16 %v2979, %v2979
        %v2986 = vpack.c.bf16 %v2981, %v2980
        %v2987 = vpack.c.bf16 %v2983, %v2982
        %v2989 = vshrl.u32 %v2985, 16
        %v2991 = vrot.slane %v2989, 3
        %v2993 = vsel %vm534, %v2991, 0
        %2995 = vmatprep.subr.bf16.mxu0 0
        %2996 = vmatpush1.bf16.msra.mxu0 %v2986
        %2997 = vmatprep.subr.bf16.mxu0 0
        %2998 = vmatpush1.bf16.msra.mxu0 %v2987
        %2999 = vmatprep.subr.bf16.mxu0 0
        %3000 = vmatpush1.bf16.msra.mxu0 0
        %3001 = vmatprep.subr.bf16.mxu0 0
        %3002 = vmatpush1.bf16.msra.mxu0 0
        %3003 = vmatprep.subr.bf16.mxu0 0
        %3004 = vmatpush1.bf16.msra.mxu0 0
        %3005 = vmatprep.subr.bf16.mxu0 0
        %3006 = vmatpush1.bf16.msra.mxu0 0
        %3007 = vmatprep.subr.bf16.mxu0 0
        %3008 = vmatpush1.bf16.msra.mxu0 0
        %3009 = vmatprep.subr.bf16.mxu0 0
        %3010 = vmatpush1.bf16.msra.mxu0 0
        %3011 = vmatprep.subr.bf16.mxu0 0
        %3012 = vmatpush1.bf16.msra.mxu0 0
        %3013 = vmatprep.subr.bf16.mxu0 0
        %3014 = vmatpush1.bf16.msra.mxu0 0
        %3015 = vmatprep.subr.bf16.mxu0 0
        %3016 = vmatpush1.bf16.msra.mxu0 0
        %3017 = vmatprep.subr.bf16.mxu0 0
        %3018 = vmatpush1.bf16.msra.mxu0 0
        %3019 = vmatprep.subr.bf16.mxu0 0
        %3020 = vmatpush1.bf16.msra.mxu0 0
        %3021 = vmatprep.subr.bf16.mxu0 0
        %3022 = vmatpush1.bf16.msra.mxu0 0
        %3023 = vmatprep.subr.bf16.mxu0 0
        %3024 = vmatpush1.bf16.msra.mxu0 0
        %3025 = vmatprep.subr.bf16.mxu0 0
        %3026 = vmatpush1.bf16.msra.mxu0 0
        %3027 = vmatprep.mubr.bf16.mxu0 0
        %3028 = vmatmul.mubr.bf16.gmra.mrb[0].mxu0 %v2993
        %v3029 = vpop.f32.mrb[0].mxu0
        %v3030 = vadd.f32 %v2984, %v3029
        %v3031 = vpop.f32.mrb[0].mxu0
        %v3032 = vpop.f32.mrb[0].mxu0
        %v3033 = vpop.f32.mrb[0].mxu0
        %3034 = vdwg.mxu0
        %vm3035 = vcmask 24576
        %3036 = vst.msk [vmem:[%s511] sm:$0x1] %vm3035, %v3030
        %s3037 = sand.u32 %s379, 1
        %s3038 = scalar_lea.sflag [#allocation3], %s3037
        %s3039 = sand.u32 %s379, 1
        %s3040 = scalar_lea.vmem [#allocation2], %s3039
        // Predicated region
        $region85: #{transformer_classifier_forward.1} parent=83 // pred_check
          %p3041 = pneg %p389
        $region86: #{transformer_classifier_forward.1} parent=83 // pred_check_branch
          %3043 = sbr.rel (%p3041) target = $region88
        $region87: #{transformer_classifier_forward.1} parent=83 // pred_region
          %s3045 = ssub.s32 16, 16
          %3046 = vsyncadd %s3038, %s3045
          %s3047 = smul.addr %s30, 16
          %s3048 = scalar_lea.hbm %s16, %s3047
          %s3050 = sshll.u32 %s3040, 4
          %s3051 = int_to_ptr.vmem [resolvable:$true] %s3050
          %3053 = dma.vmem_to_hbm [thread:$0]  %s3051, 16, %s3048, %s3038
        $region88: #{transformer_classifier_forward.1} parent=83 // pred_fallthru
          _
      $region84: #{transformer_classifier_forward.1} parent=5 // pred_fallthru
        _
      %p3054 = scmp.le.s32.totalorder 2, %s25
      // Predicated region
      $region89: #{transformer_classifier_forward.1} parent=5 // pred_check
        %p3055 = pneg %p3054
      $region90: #{transformer_classifier_forward.1} parent=5 // pred_check_branch
        %3057 = sbr.rel (%p3055) target = $region92
      $region91: #{transformer_classifier_forward.1} parent=5 // pred_region
        %s3058 = ssub.s32 %s25, 2
        // Predicated region
        $region93: #{transformer_classifier_forward.1} parent=91 // pred_check
          %p3059 = pneg %p395
        $region94: #{transformer_classifier_forward.1} parent=91 // pred_check_branch
          %3061 = sbr.rel (%p3059) target = $region96
        $region95: #{transformer_classifier_forward.1} parent=91 // pred_region
          %s3062 = sand.u32 %s380, 1
          %s3063 = scalar_lea.sflag [#allocation3], %s3062
          %s3064 = sand.u32 %s380, 1
          %s3065 = scalar_lea.vmem [#allocation2], %s3064
          %3066 = dma.done %s3063, 16
        $region96: #{transformer_classifier_forward.1} parent=91 // pred_fallthru
          _
      $region92: #{transformer_classifier_forward.1} parent=5 // pred_fallthru
        _
    $region6: #{transformer_classifier_forward.1} parent=1 // loop_footer
      %s29 = sadd.s32 1, %s25
    $region7: #{transformer_classifier_forward.1} parent=1 // loop_footer_branch
      %24 = sbr.rel target = $region3
    $region8: #{transformer_classifier_forward.1} parent=1 // loop_exit
      _
    %3067 = vsyncpa [#allocation3], 1
    %s3068 = scalar_lea.sflag [#allocation3], 1
    %3069 = vsyncpa %s3068, 1

</llo_original>
